<compile_context>
chip_gen: v7x
topology: tpu7x:2x2x1
jax: 0.10.0
libtpu: 0.0.40
codegen_flags: <defaults>
</compile_context>

<pallas_src>
import functools

import jax
import jax.numpy as jnp
import numpy as np
from jax.experimental import pallas as pl
from jax.experimental.pallas import tpu as pltpu

EPS = 1e-5
CP = 128                       # lane-dense padded output-channel dim
VMEM_LIMIT = 32 * 1024 * 1024  # fits v5e/v6e scoped VMEM and v7x's 64 MiB physical


# ----------------------------- Pallas kernel ------------------------------- #

def _fused_stage_kernel(patches_ref, w_ref, b_ref, gamma_ref, beta_ref,
                        out_ref, h_ref, sum_ref, sumsq_ref, *, nt, m_real, cout):
    """One fused stage: im2col-conv matmul (+bias), batch-stat BN, ReLU.

    Grid axis i runs over M tiles ("arbitrary" -> sequential).  Each step:
      * bf16 MXU matmul with f32 accumulation,
      * raw accumulator stored into the VMEM-resident h scratch (never touches HBM),
      * per-channel (sum, sumsq) accumulated into VMEM scratch.
    Last step: compute BN scale/shift from the global stats, apply affine + ReLU to the
    resident h slab, transpose via XLU and store only the real `cout` channel rows as a
    lane-dense (cout, M) block.
    """
    i = pl.program_id(0)

    acc = jnp.dot(patches_ref[...], w_ref[...],
                  preferred_element_type=jnp.float32) + b_ref[...]   # (tm, CP) f32
    h_ref[i] = acc                                                   # VMEM-resident slab

    @pl.when(i == 0)
    def _init():
        sum_ref[...] = jnp.zeros_like(sum_ref)
        sumsq_ref[...] = jnp.zeros_like(sumsq_ref)

    sum_ref[...] += jnp.sum(acc, axis=0, keepdims=True)              # (1, CP)
    sumsq_ref[...] += jnp.sum(acc * acc, axis=0, keepdims=True)      # (1, CP)

    @pl.when(i == nt - 1)
    def _finalize():
        inv_m = jnp.float32(1.0 / m_real)
        mean = sum_ref[...] * inv_m
        # E[x^2]-E[x]^2 in f32: fine for these O(1) activations.
        # TODO(synk): Welford-style combine if reused with large-scale activations.
        var = jnp.maximum(sumsq_ref[...] * inv_m - mean * mean, 0.0)  # biased variance
        inv_std = jax.lax.rsqrt(var + EPS)
        scale = gamma_ref[...] * inv_std                              # (1, CP)
        shift = beta_ref[...] - mean * scale                          # (1, CP)
        tm = h_ref.shape[1]
        for t in range(nt):                                           # static unroll
            y = jnp.maximum(h_ref[t] * scale + shift, 0.0)            # (tm, CP) f32
            out_ref[:, t * tm:(t + 1) * tm] = (
                jnp.transpose(y)[:cout, :].astype(out_ref.dtype))     # (cout, tm)


# ------------------------------- JAX glue ---------------------------------- #

def _round_up(x, m):
    return (x + m - 1) // m * m


def _pick_tile(m):
    # Largest tile that still leaves >= 2 grid steps (per-step overhead dominates here).
    for tm in (512, 256, 128, 64, 32, 16, 8):
        if m % tm == 0 and m // tm >= 2:
            return tm
    return m


def _pad_to(a, shape):
    return jnp.pad(a, [(0, t - s) for s, t in zip(a.shape, shape)])


def _im2col_3d(x_ndhwc, k, pad):
    """x: (N, D, H, W, C) -> (N*D*H*W, k^3*C); feature order (kd, kh, kw, c)."""
    N, D, H, W, C = x_ndhwc.shape
    xp = jnp.pad(x_ndhwc, ((0, 0), (pad, pad), (pad, pad), (pad, pad), (0, 0)))
    cols = [xp[:, kd:kd + D, kh:kh + H, kw:kw + W, :]
            for kd in range(k) for kh in range(k) for kw in range(k)]
    patches = jnp.concatenate(cols, axis=-1)                    # (N, D, H, W, k^3*C)
    return patches.reshape(N * D * H * W, k * k * k * C)


def _weight_matrix(w_oidhw):
    """PyTorch Conv3d weight (Cout, Cin, kd, kh, kw) -> (k^3*Cin, Cout)."""
    co, ci, kd, kh, kw = w_oidhw.shape
    return jnp.transpose(w_oidhw, (2, 3, 4, 1, 0)).reshape(kd * kh * kw * ci, co)


def _fused_stage(patches, w, bias, gamma, beta, out_dtype, tm, cout):
    """Single pallas_call: (patches @ w + bias) -> batch-stat BN -> ReLU -> (cout, M)."""
    M, Kp = patches.shape
    nt = M // tm
    kernel = functools.partial(_fused_stage_kernel, nt=nt, m_real=float(M), cout=cout)
    cost = pl.CostEstimate(
        flops=2 * M * Kp * CP + 8 * M * CP,
        transcendentals=0,
        bytes_accessed=(patches.size * patches.dtype.itemsize
                        + w.size * w.dtype.itemsize
                        + (bias.size + gamma.size + beta.size) * 4
                        + cout * M * jnp.dtype(out_dtype).itemsize))
    return pl.pallas_call(
        kernel,
        out_shape=jax.ShapeDtypeStruct((cout, M), out_dtype),
        grid=(nt,),
        in_specs=[pl.BlockSpec((tm, Kp), lambda i: (i, 0)),      # patches tile (pipelined)
                  pl.BlockSpec((Kp, CP), lambda i: (0, 0)),      # weights stay resident
                  pl.BlockSpec((1, CP), lambda i: (0, 0)),       # bias
                  pl.BlockSpec((1, CP), lambda i: (0, 0)),       # gamma
                  pl.BlockSpec((1, CP), lambda i: (0, 0))],      # beta
        out_specs=pl.BlockSpec((cout, M), lambda i: (0, 0)),     # VMEM-resident output
        scratch_shapes=[pltpu.VMEM((nt, tm, CP), jnp.float32),   # resident h slab
                        pltpu.VMEM((1, CP), jnp.float32),        # sum
                        pltpu.VMEM((1, CP), jnp.float32)],       # sumsq
        compiler_params=pltpu.CompilerParams(
            # TODO(synk): per-core partial stats + cross-core combine to keep "parallel"
            # on v7x (2 TensorCores); stats accumulation forces "arbitrary" here.
            dimension_semantics=("arbitrary",),
            vmem_limit_bytes=VMEM_LIMIT),
        cost_estimate=cost,
    )(patches, w, bias, gamma, beta)


@jax.jit
def residual_block_forward(x_ncdhw, params):
    N, Cin, D, H, W = x_ncdhw.shape
    Cout = params["w1"].shape[0]
    K = params["w1"].shape[2]
    pad = (K - 1) // 2
    M = N * D * H * W
    tm = _pick_tile(M)

    kp1 = _round_up(K * K * K * Cin, 128)            # padded conv1 contraction dim
    kp2 = _round_up(K * K * K * Cout + Cin, 128)     # conv2 + folded identity contraction

    # Channels-last, cast to bf16 BEFORE the im2col gather (halves the 27x intermediate).
    x = jnp.transpose(x_ncdhw, (0, 2, 3, 4, 1)).astype(jnp.bfloat16)   # (N,D,H,W,Cin)
    x_flat = x.reshape(M, Cin)

    # Padded per-channel BN parameters (zeros beyond the real Cout channels).
    g1p = _pad_to(params["gamma1"], (CP,)).reshape(1, CP)
    b1p = _pad_to(params["beta1"], (CP,)).reshape(1, CP)
    g2p = _pad_to(params["gamma2"], (CP,)).reshape(1, CP)
    b2p = _pad_to(params["beta2"], (CP,)).reshape(1, CP)

    # ---- stage 1: conv1 (no bias) + BN1 (batch stats) + ReLU, fully fused ----
    p1 = _pad_to(_im2col_3d(x, K, pad), (M, kp1))                  # (M, kp1) bf16
    w1p = _pad_to(_weight_matrix(params["w1"]), (kp1, CP)).astype(jnp.bfloat16)
    zero_bias = jnp.zeros((1, CP), jnp.float32)
    y1 = _fused_stage(p1, w1p, zero_bias, g1p, b1p, jnp.float32, tm, Cout)  # (Cout, M)

    # ---- stage 2: conv2 (+bias) with the 1x1x1 identity conv folded in, + BN2 + ReLU ----
    y1_ndhwc = jnp.transpose(y1).astype(jnp.bfloat16).reshape(N, D, H, W, Cout)
    p2 = jnp.concatenate([_im2col_3d(y1_ndhwc, K, pad), x_flat], axis=-1)   # (M, 27*Cout+Cin)
    p2 = _pad_to(p2, (M, kp2))                                      # bf16
    w2ext = jnp.concatenate([_weight_matrix(params["w2"]),
                             params["wd"].reshape(Cout, Cin).T], axis=0)
    w2p = _pad_to(w2ext, (kp2, CP)).astype(jnp.bfloat16)
    bias2 = _pad_to(params["b2"], (CP,)).reshape(1, CP)
    y2 = _fused_stage(p2, w2p, bias2, g2p, b2p, jnp.float32, tm, Cout)      # (Cout, M)

    # Channel-minor (Cout, N*D*H*W) -> NCDHW; near-free 32 KiB reshuffle.
    return jnp.transpose(y2.reshape(Cout, N, D, H, W), (1, 0, 2, 3, 4))


# --------------------------- pure-JAX reference ----------------------------- #

def reference_forward(x, params):
    def conv(inp, w, pad):
        dn = jax.lax.conv_dimension_numbers(inp.shape, w.shape,
                                            ("NCDHW", "OIDHW", "NCDHW"))
        return jax.lax.conv_general_dilated(
            inp, w, (1, 1, 1), [(pad, pad)] * 3, dimension_numbers=dn,
            precision=jax.lax.Precision.HIGHEST)

    def bn(inp, gamma, beta):
        mean = inp.mean(axis=(0, 2, 3, 4), keepdims=True)
        var = ((inp - mean) ** 2).mean(axis=(0, 2, 3, 4), keepdims=True)
        return ((inp - mean) * jax.lax.rsqrt(var + EPS)
                * gamma.reshape(1, -1, 1, 1, 1) + beta.reshape(1, -1, 1, 1, 1))

    h = jax.nn.relu(bn(conv(x, params["w1"], 1), params["gamma1"], params["beta1"]))
    h = conv(h, params["w2"], 1) + params["b2"].reshape(1, -1, 1, 1, 1)
    idn = conv(x, params["wd"], 0)
    return jax.nn.relu(bn(h + idn, params["gamma2"], params["beta2"]))


# ---------------------------------- main ------------------------------------ #

if __name__ == "__main__":
    N, Cin, Cout, D, H, W, K = 2, 4, 8, 8, 8, 8, 3

    key = jax.random.PRNGKey(0)
    ks = jax.random.split(key, 5)
    x = jax.random.normal(ks[0], (N, Cin, D, H, W), jnp.float32)

    params = dict(
        w1=jax.random.normal(ks[1], (Cout, Cin, K, K, K), jnp.float32) * 0.1,
        w2=jax.random.normal(ks[2], (Cout, Cout, K, K, K), jnp.float32) * 0.1,
        b2=jax.random.normal(ks[3], (Cout,), jnp.float32) * 0.1,
        wd=jax.random.normal(ks[4], (Cout, Cin, 1, 1, 1), jnp.float32) * 0.1,
        gamma1=jnp.ones((Cout,), jnp.float32),
        beta1=jnp.zeros((Cout,), jnp.float32),
        gamma2=jnp.ones((Cout,), jnp.float32),
        beta2=jnp.zeros((Cout,), jnp.float32),
    )

    out = jax.block_until_ready(residual_block_forward(x, params))
    ref = jax.block_until_ready(reference_forward(x, params))

    assert out.shape == (N, Cout, D, H, W)
    # bf16 MXU matmuls (f32 accumulation) vs an f32 HIGHEST-precision reference.
    np.testing.assert_allclose(np.asarray(out), np.asarray(ref), rtol=2e-2, atol=2e-2)
    print("KERNEL_OK")
</pallas_src>

<mosaic_0001>
module attributes {stable_mosaic.version = 11 : i64} {
  func.func @_fused_stage_kernel(%arg0: i32, %arg1: memref<512x128xbf16, #tpu.memory_space<vmem>>, %arg2: memref<128x128xbf16, #tpu.memory_space<vmem>>, %arg3: memref<1x128xf32, #tpu.memory_space<vmem>>, %arg4: memref<1x128xf32, #tpu.memory_space<vmem>>, %arg5: memref<1x128xf32, #tpu.memory_space<vmem>>, %arg6: memref<8x1024xf32, #tpu.memory_space<vmem>>, %arg7: memref<2x512x128xf32, #tpu.memory_space<vmem>>, %arg8: memref<1x128xf32, #tpu.memory_space<vmem>>, %arg9: memref<1x128xf32, #tpu.memory_space<vmem>>) attributes {dimension_semantics = [#tpu.dimension_semantics<arbitrary>], iteration_bounds = array<i64: 2>, scalar_prefetch = 0 : i64, scratch_operands = 3 : i64, tpu.core_type = #tpu.core_type<tc>, window_params = [{transform_indices = @transform_0, window_bounds = array<i64: 512, 128>}, {pipeline_mode = #tpu.pipeline_mode<synchronous>, transform_indices = @transform_1, window_bounds = array<i64: 128, 128>}, {pipeline_mode = #tpu.pipeline_mode<synchronous>, transform_indices = @transform_2, window_bounds = array<i64: 1, 128>}, {pipeline_mode = #tpu.pipeline_mode<synchronous>, transform_indices = @transform_3, window_bounds = array<i64: 1, 128>}, {pipeline_mode = #tpu.pipeline_mode<synchronous>, transform_indices = @transform_4, window_bounds = array<i64: 1, 128>}, {pipeline_mode = #tpu.pipeline_mode<synchronous>, transform_indices = @transform_5, window_bounds = array<i64: 8, 1024>}]} {
    %c0 = arith.constant 0 : index
    %c0_0 = arith.constant 0 : index
    %0 = vector.load %arg1[%c0, %c0_0] : memref<512x128xbf16, #tpu.memory_space<vmem>>, vector<512x128xbf16>
    %c0_1 = arith.constant 0 : index
    %c0_2 = arith.constant 0 : index
    %1 = vector.load %arg2[%c0_1, %c0_2] : memref<128x128xbf16, #tpu.memory_space<vmem>>, vector<128x128xbf16>
    %cst = arith.constant dense<0.000000e+00> : vector<512x128xf32>
    %2 = tpu.matmul %0, %1, %cst {dimension_numbers = #tpu.dot_dimension_numbers<[1], [0], [0], [1], [0, 0, 1, 1], [], []>} : vector<512x128xbf16>, vector<128x128xbf16>, vector<512x128xf32> -> vector<512x128xf32>
    %c0_3 = arith.constant 0 : index
    %c0_4 = arith.constant 0 : index
    %3 = vector.load %arg3[%c0_3, %c0_4] : memref<1x128xf32, #tpu.memory_space<vmem>>, vector<1x128xf32>
    %4 = vector.broadcast %3 : vector<1x128xf32> to vector<512x128xf32>
    %5 = arith.addf %2, %4 : vector<512x128xf32>
    %6 = arith.index_cast %arg0 : i32 to index
    %c0_5 = arith.constant 0 : index
    %c0_6 = arith.constant 0 : index
    %7 = vector.load %arg7[%6, %c0_5, %c0_6] : memref<2x512x128xf32, #tpu.memory_space<vmem>>, vector<1x512x128xf32>
    %8 = vector.shape_cast %7 : vector<1x512x128xf32> to vector<512x128xf32>
    %9 = vector.shape_cast %5 : vector<512x128xf32> to vector<1x512x128xf32>
    tpu.vector_store %arg7[%6, %c0_5, %c0_6], %9 {strides = array<i32>} : memref<2x512x128xf32, #tpu.memory_space<vmem>>, vector<1x512x128xf32>,
    %c0_i32 = arith.constant 0 : i32
    %10 = arith.cmpi eq, %arg0, %c0_i32 : i32
    %11 = arith.extui %10 : i1 to i32
    %c0_i32_7 = arith.constant 0 : i32
    %12 = arith.cmpi ne, %11, %c0_i32_7 : i32
    scf.if %12 {
      %cst_19 = arith.constant 0.000000e+00 : f32
      %27 = vector.broadcast %cst_19 : f32 to vector<1x128xf32>
      %c0_20 = arith.constant 0 : index
      %c0_21 = arith.constant 0 : index
      %28 = vector.load %arg8[%c0_20, %c0_21] : memref<1x128xf32, #tpu.memory_space<vmem>>, vector<1x128xf32>
      tpu.vector_store %arg8[%c0_20, %c0_21], %27 {strides = array<i32>} : memref<1x128xf32, #tpu.memory_space<vmem>>, vector<1x128xf32>,
      %cst_22 = arith.constant 0.000000e+00 : f32
      %29 = vector.broadcast %cst_22 : f32 to vector<1x128xf32>
      %c0_23 = arith.constant 0 : index
      %c0_24 = arith.constant 0 : index
      %30 = vector.load %arg9[%c0_23, %c0_24] : memref<1x128xf32, #tpu.memory_space<vmem>>, vector<1x128xf32>
      tpu.vector_store %arg9[%c0_23, %c0_24], %29 {strides = array<i32>} : memref<1x128xf32, #tpu.memory_space<vmem>>, vector<1x128xf32>,
    } else {
    }
    %c0_8 = arith.constant 0 : index
    %c0_9 = arith.constant 0 : index
    %13 = vector.load %arg8[%c0_8, %c0_9] : memref<1x128xf32, #tpu.memory_space<vmem>>, vector<1x128xf32>
    %cst_10 = arith.constant dense<0.000000e+00> : vector<128xf32>
    %14 = vector.multi_reduction <add>, %5, %cst_10 [0] : vector<512x128xf32> to vector<128xf32>
    %15 = vector.shape_cast %14 : vector<128xf32> to vector<1x128xf32>
    %16 = arith.addf %13, %15 : vector<1x128xf32>
    %c0_11 = arith.constant 0 : index
    %c0_12 = arith.constant 0 : index
    %17 = vector.load %arg8[%c0_11, %c0_12] : memref<1x128xf32, #tpu.memory_space<vmem>>, vector<1x128xf32>
    tpu.vector_store %arg8[%c0_11, %c0_12], %16 {strides = array<i32>} : memref<1x128xf32, #tpu.memory_space<vmem>>, vector<1x128xf32>,
    %c0_13 = arith.constant 0 : index
    %c0_14 = arith.constant 0 : index
    %18 = vector.load %arg9[%c0_13, %c0_14] : memref<1x128xf32, #tpu.memory_space<vmem>>, vector<1x128xf32>
    %19 = arith.mulf %5, %5 : vector<512x128xf32>
    %cst_15 = arith.constant dense<0.000000e+00> : vector<128xf32>
    %20 = vector.multi_reduction <add>, %19, %cst_15 [0] : vector<512x128xf32> to vector<128xf32>
    %21 = vector.shape_cast %20 : vector<128xf32> to vector<1x128xf32>
    %22 = arith.addf %18, %21 : vector<1x128xf32>
    %c0_16 = arith.constant 0 : index
    %c0_17 = arith.constant 0 : index
    %23 = vector.load %arg9[%c0_16, %c0_17] : memref<1x128xf32, #tpu.memory_space<vmem>>, vector<1x128xf32>
    tpu.vector_store %arg9[%c0_16, %c0_17], %22 {strides = array<i32>} : memref<1x128xf32, #tpu.memory_space<vmem>>, vector<1x128xf32>,
    %c1_i32 = arith.constant 1 : i32
    %24 = arith.cmpi eq, %arg0, %c1_i32 : i32
    %25 = arith.extui %24 : i1 to i32
    %c0_i32_18 = arith.constant 0 : i32
    %26 = arith.cmpi ne, %25, %c0_i32_18 : i32
    scf.if %26 {
      %c0_19 = arith.constant 0 : index
      %c0_20 = arith.constant 0 : index
      %27 = vector.load %arg8[%c0_19, %c0_20] : memref<1x128xf32, #tpu.memory_space<vmem>>, vector<1x128xf32>
      %cst_21 = arith.constant 9.765625E-4 : f32
      %28 = vector.broadcast %cst_21 : f32 to vector<1x128xf32>
      %29 = arith.mulf %27, %28 : vector<1x128xf32>
      %c0_22 = arith.constant 0 : index
      %c0_23 = arith.constant 0 : index
      %30 = vector.load %arg9[%c0_22, %c0_23] : memref<1x128xf32, #tpu.memory_space<vmem>>, vector<1x128xf32>
      %cst_24 = arith.constant 9.765625E-4 : f32
      %31 = vector.broadcast %cst_24 : f32 to vector<1x128xf32>
      %32 = arith.mulf %30, %31 : vector<1x128xf32>
      %33 = arith.mulf %29, %29 : vector<1x128xf32>
      %34 = arith.subf %32, %33 : vector<1x128xf32>
      %cst_25 = arith.constant 0.000000e+00 : f32
      %35 = vector.broadcast %cst_25 : f32 to vector<1x128xf32>
      %36 = arith.maximumf %34, %35 : vector<1x128xf32>
      %cst_26 = arith.constant 9.99999974E-6 : f32
      %37 = vector.broadcast %cst_26 : f32 to vector<1x128xf32>
      %38 = arith.addf %36, %37 : vector<1x128xf32>
      %39 = math.rsqrt %38 : vector<1x128xf32>
      %c0_27 = arith.constant 0 : index
      %c0_28 = arith.constant 0 : index
      %40 = vector.load %arg4[%c0_27, %c0_28] : memref<1x128xf32, #tpu.memory_space<vmem>>, vector<1x128xf32>
      %41 = arith.mulf %40, %39 : vector<1x128xf32>
      %c0_29 = arith.constant 0 : index
      %c0_30 = arith.constant 0 : index
      %42 = vector.load %arg5[%c0_29, %c0_30] : memref<1x128xf32, #tpu.memory_space<vmem>>, vector<1x128xf32>
      %43 = arith.mulf %29, %41 : vector<1x128xf32>
      %44 = arith.subf %42, %43 : vector<1x128xf32>
      %c0_31 = arith.constant 0 : index
      %c0_32 = arith.constant 0 : index
      %c0_33 = arith.constant 0 : index
      %45 = vector.load %arg7[%c0_31, %c0_32, %c0_33] : memref<2x512x128xf32, #tpu.memory_space<vmem>>, vector<1x512x128xf32>
      %46 = vector.shape_cast %45 : vector<1x512x128xf32> to vector<512x128xf32>
      %47 = vector.broadcast %41 : vector<1x128xf32> to vector<512x128xf32>
      %48 = arith.mulf %46, %47 : vector<512x128xf32>
      %49 = vector.broadcast %44 : vector<1x128xf32> to vector<512x128xf32>
      %50 = arith.addf %48, %49 : vector<512x128xf32>
      %cst_34 = arith.constant 0.000000e+00 : f32
      %51 = vector.broadcast %cst_34 : f32 to vector<512x128xf32>
      %52 = arith.maximumf %50, %51 : vector<512x128xf32>
      %53 = tpu.transpose %52, [1, 0] : vector<512x128xf32> -> vector<128x512xf32>
      %54 = vector.extract_strided_slice %53 {offsets = [0, 0], sizes = [8, 512], strides = [1, 1]} : vector<128x512xf32> to vector<8x512xf32>
      %c0_35 = arith.constant 0 : index
      %c0_36 = arith.constant 0 : index
      %55 = vector.load %arg6[%c0_35, %c0_36] : memref<8x1024xf32, #tpu.memory_space<vmem>>, vector<8x512xf32>
      tpu.vector_store %arg6[%c0_35, %c0_36], %54 {strides = array<i32>} : memref<8x1024xf32, #tpu.memory_space<vmem>>, vector<8x512xf32>,
      %c1 = arith.constant 1 : index
      %c0_37 = arith.constant 0 : index
      %c0_38 = arith.constant 0 : index
      %56 = vector.load %arg7[%c1, %c0_37, %c0_38] : memref<2x512x128xf32, #tpu.memory_space<vmem>>, vector<1x512x128xf32>
      %57 = vector.shape_cast %56 : vector<1x512x128xf32> to vector<512x128xf32>
      %58 = vector.broadcast %41 : vector<1x128xf32> to vector<512x128xf32>
      %59 = arith.mulf %57, %58 : vector<512x128xf32>
      %60 = vector.broadcast %44 : vector<1x128xf32> to vector<512x128xf32>
      %61 = arith.addf %59, %60 : vector<512x128xf32>
      %cst_39 = arith.constant 0.000000e+00 : f32
      %62 = vector.broadcast %cst_39 : f32 to vector<512x128xf32>
      %63 = arith.maximumf %61, %62 : vector<512x128xf32>
      %64 = tpu.transpose %63, [1, 0] : vector<512x128xf32> -> vector<128x512xf32>
      %65 = vector.extract_strided_slice %64 {offsets = [0, 0], sizes = [8, 512], strides = [1, 1]} : vector<128x512xf32> to vector<8x512xf32>
      %c0_40 = arith.constant 0 : index
      %c512 = arith.constant 512 : index
      %66 = vector.load %arg6[%c0_40, %c512] : memref<8x1024xf32, #tpu.memory_space<vmem>>, vector<8x512xf32>
      tpu.vector_store %arg6[%c0_40, %c512], %65 {strides = array<i32>} : memref<8x1024xf32, #tpu.memory_space<vmem>>, vector<8x512xf32>,
    } else {
    }
    return
  }
  func.func @transform_0(%arg0: i32) -> (i32, i32) {
    %c0_i32 = arith.constant 0 : i32
    %c0_i32_0 = arith.constant 0 : i32
    return %arg0, %c0_i32 : i32, i32
  }
  func.func @transform_1(%arg0: i32) -> (i32, i32) {
    %c0_i32 = arith.constant 0 : i32
    %c0_i32_0 = arith.constant 0 : i32
    %c0_i32_1 = arith.constant 0 : i32
    return %c0_i32, %c0_i32_0 : i32, i32
  }
  func.func @transform_2(%arg0: i32) -> (i32, i32) {
    %c0_i32 = arith.constant 0 : i32
    %c0_i32_0 = arith.constant 0 : i32
    %c0_i32_1 = arith.constant 0 : i32
    return %c0_i32, %c0_i32_0 : i32, i32
  }
  func.func @transform_3(%arg0: i32) -> (i32, i32) {
    %c0_i32 = arith.constant 0 : i32
    %c0_i32_0 = arith.constant 0 : i32
    %c0_i32_1 = arith.constant 0 : i32
    return %c0_i32, %c0_i32_0 : i32, i32
  }
  func.func @transform_4(%arg0: i32) -> (i32, i32) {
    %c0_i32 = arith.constant 0 : i32
    %c0_i32_0 = arith.constant 0 : i32
    %c0_i32_1 = arith.constant 0 : i32
    return %c0_i32, %c0_i32_0 : i32, i32
  }
  func.func @transform_5(%arg0: i32) -> (i32, i32) {
    %c0_i32 = arith.constant 0 : i32
    %c0_i32_0 = arith.constant 0 : i32
    %c0_i32_1 = arith.constant 0 : i32
    return %c0_i32, %c0_i32_0 : i32, i32
  }
}

module attributes {stable_mosaic.version = 11 : i64} {
  func.func @_fused_stage_kernel(%arg0: i32, %arg1: memref<512x256xbf16, #tpu.memory_space<vmem>>, %arg2: memref<256x128xbf16, #tpu.memory_space<vmem>>, %arg3: memref<1x128xf32, #tpu.memory_space<vmem>>, %arg4: memref<1x128xf32, #tpu.memory_space<vmem>>, %arg5: memref<1x128xf32, #tpu.memory_space<vmem>>, %arg6: memref<8x1024xf32, #tpu.memory_space<vmem>>, %arg7: memref<2x512x128xf32, #tpu.memory_space<vmem>>, %arg8: memref<1x128xf32, #tpu.memory_space<vmem>>, %arg9: memref<1x128xf32, #tpu.memory_space<vmem>>) attributes {dimension_semantics = [#tpu.dimension_semantics<arbitrary>], iteration_bounds = array<i64: 2>, scalar_prefetch = 0 : i64, scratch_operands = 3 : i64, tpu.core_type = #tpu.core_type<tc>, window_params = [{transform_indices = @transform_0, window_bounds = array<i64: 512, 256>}, {pipeline_mode = #tpu.pipeline_mode<synchronous>, transform_indices = @transform_1, window_bounds = array<i64: 256, 128>}, {pipeline_mode = #tpu.pipeline_mode<synchronous>, transform_indices = @transform_2, window_bounds = array<i64: 1, 128>}, {pipeline_mode = #tpu.pipeline_mode<synchronous>, transform_indices = @transform_3, window_bounds = array<i64: 1, 128>}, {pipeline_mode = #tpu.pipeline_mode<synchronous>, transform_indices = @transform_4, window_bounds = array<i64: 1, 128>}, {pipeline_mode = #tpu.pipeline_mode<synchronous>, transform_indices = @transform_5, window_bounds = array<i64: 8, 1024>}]} {
    %c0 = arith.constant 0 : index
    %c0_0 = arith.constant 0 : index
    %0 = vector.load %arg1[%c0, %c0_0] : memref<512x256xbf16, #tpu.memory_space<vmem>>, vector<512x256xbf16>
    %c0_1 = arith.constant 0 : index
    %c0_2 = arith.constant 0 : index
    %1 = vector.load %arg2[%c0_1, %c0_2] : memref<256x128xbf16, #tpu.memory_space<vmem>>, vector<256x128xbf16>
    %cst = arith.constant dense<0.000000e+00> : vector<512x128xf32>
    %2 = tpu.matmul %0, %1, %cst {dimension_numbers = #tpu.dot_dimension_numbers<[1], [0], [0], [1], [0, 0, 1, 1], [], []>} : vector<512x256xbf16>, vector<256x128xbf16>, vector<512x128xf32> -> vector<512x128xf32>
    %c0_3 = arith.constant 0 : index
    %c0_4 = arith.constant 0 : index
    %3 = vector.load %arg3[%c0_3, %c0_4] : memref<1x128xf32, #tpu.memory_space<vmem>>, vector<1x128xf32>
    %4 = vector.broadcast %3 : vector<1x128xf32> to vector<512x128xf32>
    %5 = arith.addf %2, %4 : vector<512x128xf32>
    %6 = arith.index_cast %arg0 : i32 to index
    %c0_5 = arith.constant 0 : index
    %c0_6 = arith.constant 0 : index
    %7 = vector.load %arg7[%6, %c0_5, %c0_6] : memref<2x512x128xf32, #tpu.memory_space<vmem>>, vector<1x512x128xf32>
    %8 = vector.shape_cast %7 : vector<1x512x128xf32> to vector<512x128xf32>
    %9 = vector.shape_cast %5 : vector<512x128xf32> to vector<1x512x128xf32>
    tpu.vector_store %arg7[%6, %c0_5, %c0_6], %9 {strides = array<i32>} : memref<2x512x128xf32, #tpu.memory_space<vmem>>, vector<1x512x128xf32>,
    %c0_i32 = arith.constant 0 : i32
    %10 = arith.cmpi eq, %arg0, %c0_i32 : i32
    %11 = arith.extui %10 : i1 to i32
    %c0_i32_7 = arith.constant 0 : i32
    %12 = arith.cmpi ne, %11, %c0_i32_7 : i32
    scf.if %12 {
      %cst_19 = arith.constant 0.000000e+00 : f32
      %27 = vector.broadcast %cst_19 : f32 to vector<1x128xf32>
      %c0_20 = arith.constant 0 : index
      %c0_21 = arith.constant 0 : index
      %28 = vector.load %arg8[%c0_20, %c0_21] : memref<1x128xf32, #tpu.memory_space<vmem>>, vector<1x128xf32>
      tpu.vector_store %arg8[%c0_20, %c0_21], %27 {strides = array<i32>} : memref<1x128xf32, #tpu.memory_space<vmem>>, vector<1x128xf32>,
      %cst_22 = arith.constant 0.000000e+00 : f32
      %29 = vector.broadcast %cst_22 : f32 to vector<1x128xf32>
      %c0_23 = arith.constant 0 : index
      %c0_24 = arith.constant 0 : index
      %30 = vector.load %arg9[%c0_23, %c0_24] : memref<1x128xf32, #tpu.memory_space<vmem>>, vector<1x128xf32>
      tpu.vector_store %arg9[%c0_23, %c0_24], %29 {strides = array<i32>} : memref<1x128xf32, #tpu.memory_space<vmem>>, vector<1x128xf32>,
    } else {
    }
    %c0_8 = arith.constant 0 : index
    %c0_9 = arith.constant 0 : index
    %13 = vector.load %arg8[%c0_8, %c0_9] : memref<1x128xf32, #tpu.memory_space<vmem>>, vector<1x128xf32>
    %cst_10 = arith.constant dense<0.000000e+00> : vector<128xf32>
    %14 = vector.multi_reduction <add>, %5, %cst_10 [0] : vector<512x128xf32> to vector<128xf32>
    %15 = vector.shape_cast %14 : vector<128xf32> to vector<1x128xf32>
    %16 = arith.addf %13, %15 : vector<1x128xf32>
    %c0_11 = arith.constant 0 : index
    %c0_12 = arith.constant 0 : index
    %17 = vector.load %arg8[%c0_11, %c0_12] : memref<1x128xf32, #tpu.memory_space<vmem>>, vector<1x128xf32>
    tpu.vector_store %arg8[%c0_11, %c0_12], %16 {strides = array<i32>} : memref<1x128xf32, #tpu.memory_space<vmem>>, vector<1x128xf32>,
    %c0_13 = arith.constant 0 : index
    %c0_14 = arith.constant 0 : index
    %18 = vector.load %arg9[%c0_13, %c0_14] : memref<1x128xf32, #tpu.memory_space<vmem>>, vector<1x128xf32>
    %19 = arith.mulf %5, %5 : vector<512x128xf32>
    %cst_15 = arith.constant dense<0.000000e+00> : vector<128xf32>
    %20 = vector.multi_reduction <add>, %19, %cst_15 [0] : vector<512x128xf32> to vector<128xf32>
    %21 = vector.shape_cast %20 : vector<128xf32> to vector<1x128xf32>
    %22 = arith.addf %18, %21 : vector<1x128xf32>
    %c0_16 = arith.constant 0 : index
    %c0_17 = arith.constant 0 : index
    %23 = vector.load %arg9[%c0_16, %c0_17] : memref<1x128xf32, #tpu.memory_space<vmem>>, vector<1x128xf32>
    tpu.vector_store %arg9[%c0_16, %c0_17], %22 {strides = array<i32>} : memref<1x128xf32, #tpu.memory_space<vmem>>, vector<1x128xf32>,
    %c1_i32 = arith.constant 1 : i32
    %24 = arith.cmpi eq, %arg0, %c1_i32 : i32
    %25 = arith.extui %24 : i1 to i32
    %c0_i32_18 = arith.constant 0 : i32
    %26 = arith.cmpi ne, %25, %c0_i32_18 : i32
    scf.if %26 {
      %c0_19 = arith.constant 0 : index
      %c0_20 = arith.constant 0 : index
      %27 = vector.load %arg8[%c0_19, %c0_20] : memref<1x128xf32, #tpu.memory_space<vmem>>, vector<1x128xf32>
      %cst_21 = arith.constant 9.765625E-4 : f32
      %28 = vector.broadcast %cst_21 : f32 to vector<1x128xf32>
      %29 = arith.mulf %27, %28 : vector<1x128xf32>
      %c0_22 = arith.constant 0 : index
      %c0_23 = arith.constant 0 : index
      %30 = vector.load %arg9[%c0_22, %c0_23] : memref<1x128xf32, #tpu.memory_space<vmem>>, vector<1x128xf32>
      %cst_24 = arith.constant 9.765625E-4 : f32
      %31 = vector.broadcast %cst_24 : f32 to vector<1x128xf32>
      %32 = arith.mulf %30, %31 : vector<1x128xf32>
      %33 = arith.mulf %29, %29 : vector<1x128xf32>
      %34 = arith.subf %32, %33 : vector<1x128xf32>
      %cst_25 = arith.constant 0.000000e+00 : f32
      %35 = vector.broadcast %cst_25 : f32 to vector<1x128xf32>
      %36 = arith.maximumf %34, %35 : vector<1x128xf32>
      %cst_26 = arith.constant 9.99999974E-6 : f32
      %37 = vector.broadcast %cst_26 : f32 to vector<1x128xf32>
      %38 = arith.addf %36, %37 : vector<1x128xf32>
      %39 = math.rsqrt %38 : vector<1x128xf32>
      %c0_27 = arith.constant 0 : index
      %c0_28 = arith.constant 0 : index
      %40 = vector.load %arg4[%c0_27, %c0_28] : memref<1x128xf32, #tpu.memory_space<vmem>>, vector<1x128xf32>
      %41 = arith.mulf %40, %39 : vector<1x128xf32>
      %c0_29 = arith.constant 0 : index
      %c0_30 = arith.constant 0 : index
      %42 = vector.load %arg5[%c0_29, %c0_30] : memref<1x128xf32, #tpu.memory_space<vmem>>, vector<1x128xf32>
      %43 = arith.mulf %29, %41 : vector<1x128xf32>
      %44 = arith.subf %42, %43 : vector<1x128xf32>
      %c0_31 = arith.constant 0 : index
      %c0_32 = arith.constant 0 : index
      %c0_33 = arith.constant 0 : index
      %45 = vector.load %arg7[%c0_31, %c0_32, %c0_33] : memref<2x512x128xf32, #tpu.memory_space<vmem>>, vector<1x512x128xf32>
      %46 = vector.shape_cast %45 : vector<1x512x128xf32> to vector<512x128xf32>
      %47 = vector.broadcast %41 : vector<1x128xf32> to vector<512x128xf32>
      %48 = arith.mulf %46, %47 : vector<512x128xf32>
      %49 = vector.broadcast %44 : vector<1x128xf32> to vector<512x128xf32>
      %50 = arith.addf %48, %49 : vector<512x128xf32>
      %cst_34 = arith.constant 0.000000e+00 : f32
      %51 = vector.broadcast %cst_34 : f32 to vector<512x128xf32>
      %52 = arith.maximumf %50, %51 : vector<512x128xf32>
      %53 = tpu.transpose %52, [1, 0] : vector<512x128xf32> -> vector<128x512xf32>
      %54 = vector.extract_strided_slice %53 {offsets = [0, 0], sizes = [8, 512], strides = [1, 1]} : vector<128x512xf32> to vector<8x512xf32>
      %c0_35 = arith.constant 0 : index
      %c0_36 = arith.constant 0 : index
      %55 = vector.load %arg6[%c0_35, %c0_36] : memref<8x1024xf32, #tpu.memory_space<vmem>>, vector<8x512xf32>
      tpu.vector_store %arg6[%c0_35, %c0_36], %54 {strides = array<i32>} : memref<8x1024xf32, #tpu.memory_space<vmem>>, vector<8x512xf32>,
      %c1 = arith.constant 1 : index
      %c0_37 = arith.constant 0 : index
      %c0_38 = arith.constant 0 : index
      %56 = vector.load %arg7[%c1, %c0_37, %c0_38] : memref<2x512x128xf32, #tpu.memory_space<vmem>>, vector<1x512x128xf32>
      %57 = vector.shape_cast %56 : vector<1x512x128xf32> to vector<512x128xf32>
      %58 = vector.broadcast %41 : vector<1x128xf32> to vector<512x128xf32>
      %59 = arith.mulf %57, %58 : vector<512x128xf32>
      %60 = vector.broadcast %44 : vector<1x128xf32> to vector<512x128xf32>
      %61 = arith.addf %59, %60 : vector<512x128xf32>
      %cst_39 = arith.constant 0.000000e+00 : f32
      %62 = vector.broadcast %cst_39 : f32 to vector<512x128xf32>
      %63 = arith.maximumf %61, %62 : vector<512x128xf32>
      %64 = tpu.transpose %63, [1, 0] : vector<512x128xf32> -> vector<128x512xf32>
      %65 = vector.extract_strided_slice %64 {offsets = [0, 0], sizes = [8, 512], strides = [1, 1]} : vector<128x512xf32> to vector<8x512xf32>
      %c0_40 = arith.constant 0 : index
      %c512 = arith.constant 512 : index
      %66 = vector.load %arg6[%c0_40, %c512] : memref<8x1024xf32, #tpu.memory_space<vmem>>, vector<8x512xf32>
      tpu.vector_store %arg6[%c0_40, %c512], %65 {strides = array<i32>} : memref<8x1024xf32, #tpu.memory_space<vmem>>, vector<8x512xf32>,
    } else {
    }
    return
  }
  func.func @transform_0(%arg0: i32) -> (i32, i32) {
    %c0_i32 = arith.constant 0 : i32
    %c0_i32_0 = arith.constant 0 : i32
    return %arg0, %c0_i32 : i32, i32
  }
  func.func @transform_1(%arg0: i32) -> (i32, i32) {
    %c0_i32 = arith.constant 0 : i32
    %c0_i32_0 = arith.constant 0 : i32
    %c0_i32_1 = arith.constant 0 : i32
    return %c0_i32, %c0_i32_0 : i32, i32
  }
  func.func @transform_2(%arg0: i32) -> (i32, i32) {
    %c0_i32 = arith.constant 0 : i32
    %c0_i32_0 = arith.constant 0 : i32
    %c0_i32_1 = arith.constant 0 : i32
    return %c0_i32, %c0_i32_0 : i32, i32
  }
  func.func @transform_3(%arg0: i32) -> (i32, i32) {
    %c0_i32 = arith.constant 0 : i32
    %c0_i32_0 = arith.constant 0 : i32
    %c0_i32_1 = arith.constant 0 : i32
    return %c0_i32, %c0_i32_0 : i32, i32
  }
  func.func @transform_4(%arg0: i32) -> (i32, i32) {
    %c0_i32 = arith.constant 0 : i32
    %c0_i32_0 = arith.constant 0 : i32
    %c0_i32_1 = arith.constant 0 : i32
    return %c0_i32, %c0_i32_0 : i32, i32
  }
  func.func @transform_5(%arg0: i32) -> (i32, i32) {
    %c0_i32 = arith.constant 0 : i32
    %c0_i32_0 = arith.constant 0 : i32
    %c0_i32_1 = arith.constant 0 : i32
    return %c0_i32, %c0_i32_0 : i32, i32
  }
}

</mosaic_0001>

<llo_original>
// kernel: residual_block_forward.2
$region0: #{residual_block_forward.2}
  #allocation0 [shape = 'u32[]', space=smem, size = 0x4, offset = 0x4, fixed_abs, tag = 'smem constant byte address 0x4 - core index']
  #allocation1 [shape = 'u32[144,128]{1,0:T(1,128)}', space=vmem, size = 0x12000, scoped, tag = 'internal scratch']
  #allocation2 [shape = 'f32[2,512,128]{2,1,0:T(8,128)}', space=vmem, size = 0x80000, scoped, tag = 'scratch operand']
  #allocation3 [shape = 'f32[1,128]{1,0:T(1,128)}', space=vmem, size = 0x200, scoped, tag = 'scratch operand']
  #allocation4 [shape = 'f32[1,128]{1,0:T(1,128)}', space=vmem, size = 0x200, scoped, tag = 'scratch operand']
  %s0 = inlined_call_operand.vmem [shape: bf16[1024,128], index: 0, kind: input, shape index: {}]
  %s1 = inlined_call_operand.vmem [shape: bf16[128,128], index: 1, kind: input, shape index: {}]
  %s2 = inlined_call_operand.vmem [shape: f32[1,128], index: 2, kind: input, shape index: {}]
  %s3 = inlined_call_operand.vmem [shape: f32[1,128], index: 3, kind: input, shape index: {}]
  %s4 = inlined_call_operand.vmem [shape: f32[1,128], index: 4, kind: input, shape index: {}]
  %s5 = inlined_call_operand.vmem [shape: f32[8,1024], index: 5, kind: output, shape index: {}]
  %s6 = sld [smem:[#allocation0]]
  $region61: #{residual_block_forward.2} parent=0
    _
  %s8 = ssub.s32 1, %s6
  %s9 = scalar_select 0, %s8, %s6
  loop: start=0, step=1, limit=4
  $region2: #{residual_block_forward.2} parent=0 // loop_pre_header
    _
  $region3: #{residual_block_forward.2} parent=0 // loop_header
    %s11 = sphi 0, %s15
    %p12 = scmp.ge.s32.totalorder %s11, 4
    %s21 = sphi 0, %s23
    %s24 = sphi 0, %s21
    %s25 = sphi 0, %s24
    %s41 = sphi 0, %s25
    %s45 = sphi 0, %s45
    %s47 = sphi 0, %s45
    %s48 = sphi 0, %s47
    %s62 = sphi 0, %s48
    %s66 = sphi 0, %s66
    %s68 = sphi 0, %s66
    %s69 = sphi 0, %s68
    %s83 = sphi 0, %s69
    %s87 = sphi 0, %s87
    %s89 = sphi 0, %s87
    %s90 = sphi 0, %s89
    %s104 = sphi 0, %s90
    %s108 = sphi 0, %s108
    %s110 = sphi 0, %s108
    %s111 = sphi 0, %s110
    %s125 = sphi 0, %s111
    %s129 = sphi 0, %s129
    %s131 = sphi 0, %s129
    %s132 = sphi 0, %s131
    %s146 = sphi 0, %s132
  $region4: #{residual_block_forward.2} parent=0 // loop_header_branch
    %14 = sbr.rel (%p12) target = $region8
  $region5: #{residual_block_forward.2} parent=0 // loop_body
    %s16 = ssub.s32 %s11, 1
    %s17 = ssub.s32 %s11, 2
    %s18 = sadd.s32 %s11, 1
    %s19 = ssub.s32 %s11, %s18
    %p20 = scmp.eq.s32.totalorder %s19, 0
    %s22 = sadd.s32 %s21, 1
    %s23 = scalar_select %p20, %s21, %s22
    %p26 = pneg %p20
    %p27 = scmp.eq.s32.totalorder %s11, 1
    %p28 = por %p26, %p27
    %p29 = scmp.ne.s32.totalorder %s21, %s24
    %p30 = scmp.eq.s32.totalorder %s11, 0
    %p31 = por %p29, %p30
    %p32 = scmp.ne.s32.totalorder %s21, %s24
    %p33 = scmp.eq.s32.totalorder %s16, 1
    %p34 = por %p32, %p33
    %p35 = scmp.ne.s32.totalorder %s24, %s25
    %p36 = scmp.eq.s32.totalorder %s16, 0
    %p37 = por %p35, %p36
    %p38 = scmp.ne.s32.totalorder %s24, %s25
    %p39 = scmp.eq.s32.totalorder %s17, 1
    %p40 = por %p38, %p39
    %p42 = scmp.ne.s32.totalorder %s25, %s41
    %p43 = scmp.eq.s32.totalorder %s17, 0
    %p44 = por %p42, %p43
    %s46 = sadd.s32 %s45, 1
    %p49 = scmp.eq.s32.totalorder %s11, 1
    %p50 = scmp.ne.s32.totalorder %s45, %s47
    %p51 = scmp.eq.s32.totalorder %s11, 0
    %p52 = por %p50, %p51
    %p53 = scmp.ne.s32.totalorder %s45, %s47
    %p54 = scmp.eq.s32.totalorder %s16, 1
    %p55 = por %p53, %p54
    %p56 = scmp.ne.s32.totalorder %s47, %s48
    %p57 = scmp.eq.s32.totalorder %s16, 0
    %p58 = por %p56, %p57
    %p59 = scmp.ne.s32.totalorder %s47, %s48
    %p60 = scmp.eq.s32.totalorder %s17, 1
    %p61 = por %p59, %p60
    %p63 = scmp.ne.s32.totalorder %s48, %s62
    %p64 = scmp.eq.s32.totalorder %s17, 0
    %p65 = por %p63, %p64
    %s67 = sadd.s32 %s66, 1
    %p70 = scmp.eq.s32.totalorder %s11, 1
    %p71 = scmp.ne.s32.totalorder %s66, %s68
    %p72 = scmp.eq.s32.totalorder %s11, 0
    %p73 = por %p71, %p72
    %p74 = scmp.ne.s32.totalorder %s66, %s68
    %p75 = scmp.eq.s32.totalorder %s16, 1
    %p76 = por %p74, %p75
    %p77 = scmp.ne.s32.totalorder %s68, %s69
    %p78 = scmp.eq.s32.totalorder %s16, 0
    %p79 = por %p77, %p78
    %p80 = scmp.ne.s32.totalorder %s68, %s69
    %p81 = scmp.eq.s32.totalorder %s17, 1
    %p82 = por %p80, %p81
    %p84 = scmp.ne.s32.totalorder %s69, %s83
    %p85 = scmp.eq.s32.totalorder %s17, 0
    %p86 = por %p84, %p85
    %s88 = sadd.s32 %s87, 1
    %p91 = scmp.eq.s32.totalorder %s11, 1
    %p92 = scmp.ne.s32.totalorder %s87, %s89
    %p93 = scmp.eq.s32.totalorder %s11, 0
    %p94 = por %p92, %p93
    %p95 = scmp.ne.s32.totalorder %s87, %s89
    %p96 = scmp.eq.s32.totalorder %s16, 1
    %p97 = por %p95, %p96
    %p98 = scmp.ne.s32.totalorder %s89, %s90
    %p99 = scmp.eq.s32.totalorder %s16, 0
    %p100 = por %p98, %p99
    %p101 = scmp.ne.s32.totalorder %s89, %s90
    %p102 = scmp.eq.s32.totalorder %s17, 1
    %p103 = por %p101, %p102
    %p105 = scmp.ne.s32.totalorder %s90, %s104
    %p106 = scmp.eq.s32.totalorder %s17, 0
    %p107 = por %p105, %p106
    %s109 = sadd.s32 %s108, 1
    %p112 = scmp.eq.s32.totalorder %s11, 1
    %p113 = scmp.ne.s32.totalorder %s108, %s110
    %p114 = scmp.eq.s32.totalorder %s11, 0
    %p115 = por %p113, %p114
    %p116 = scmp.ne.s32.totalorder %s108, %s110
    %p117 = scmp.eq.s32.totalorder %s16, 1
    %p118 = por %p116, %p117
    %p119 = scmp.ne.s32.totalorder %s110, %s111
    %p120 = scmp.eq.s32.totalorder %s16, 0
    %p121 = por %p119, %p120
    %p122 = scmp.ne.s32.totalorder %s110, %s111
    %p123 = scmp.eq.s32.totalorder %s17, 1
    %p124 = por %p122, %p123
    %p126 = scmp.ne.s32.totalorder %s111, %s125
    %p127 = scmp.eq.s32.totalorder %s17, 0
    %p128 = por %p126, %p127
    %s130 = sadd.s32 %s129, 1
    %p133 = scmp.eq.s32.totalorder %s11, 1
    %p134 = scmp.ne.s32.totalorder %s129, %s131
    %p135 = scmp.eq.s32.totalorder %s11, 0
    %p136 = por %p134, %p135
    %p137 = scmp.ne.s32.totalorder %s129, %s131
    %p138 = scmp.eq.s32.totalorder %s16, 1
    %p139 = por %p137, %p138
    %p140 = scmp.ne.s32.totalorder %s131, %s132
    %p141 = scmp.eq.s32.totalorder %s16, 0
    %p142 = por %p140, %p141
    %p143 = scmp.ne.s32.totalorder %s131, %s132
    %p144 = scmp.eq.s32.totalorder %s17, 1
    %p145 = por %p143, %p144
    %p147 = scmp.ne.s32.totalorder %s132, %s146
    %p148 = scmp.eq.s32.totalorder %s17, 0
    %p149 = por %p147, %p148
    %p150 = scmp.le.s32.totalorder 1, %s11
    %p151 = scmp.lt.s32.totalorder %s11, 3
    %p152 = pnand %p150, %p151
    %p153 = pneg %p152
    // Predicated region
    $region9: #{residual_block_forward.2} parent=5 // pred_check
      _
    $region10: #{residual_block_forward.2} parent=5 // pred_check_branch
      %155 = sbr.rel (%p152) target = $region12
    $region11: #{residual_block_forward.2} parent=5 // pred_region
      %s156 = ssub.s32 %s11, 1
      // Predicated region
      $region13: #{residual_block_forward.2} parent=11 // pred_check
        %p157 = pneg %p58
      $region14: #{residual_block_forward.2} parent=11 // pred_check_branch
        %159 = sbr.rel (%p157) target = $region16
      $region15: #{residual_block_forward.2} parent=11 // pred_region
        _
      $region16: #{residual_block_forward.2} parent=11 // pred_fallthru
        _
      // Predicated region
      $region17: #{residual_block_forward.2} parent=11 // pred_check
        %p160 = pneg %p79
      $region18: #{residual_block_forward.2} parent=11 // pred_check_branch
        %162 = sbr.rel (%p160) target = $region20
      $region19: #{residual_block_forward.2} parent=11 // pred_region
        _
      $region20: #{residual_block_forward.2} parent=11 // pred_fallthru
        _
      // Predicated region
      $region21: #{residual_block_forward.2} parent=11 // pred_check
        %p163 = pneg %p100
      $region22: #{residual_block_forward.2} parent=11 // pred_check_branch
        %165 = sbr.rel (%p163) target = $region24
      $region23: #{residual_block_forward.2} parent=11 // pred_region
        _
      $region24: #{residual_block_forward.2} parent=11 // pred_fallthru
        _
      // Predicated region
      $region25: #{residual_block_forward.2} parent=11 // pred_check
        %p166 = pneg %p121
      $region26: #{residual_block_forward.2} parent=11 // pred_check_branch
        %168 = sbr.rel (%p166) target = $region28
      $region27: #{residual_block_forward.2} parent=11 // pred_region
        _
      $region28: #{residual_block_forward.2} parent=11 // pred_fallthru
        _
    $region12: #{residual_block_forward.2} parent=5 // pred_fallthru
      _
    %p169 = scmp.lt.s32.totalorder %s11, 2
    // Predicated region
    $region29: #{residual_block_forward.2} parent=5 // pred_check
      %p170 = pneg %p169
    $region30: #{residual_block_forward.2} parent=5 // pred_check_branch
      %172 = sbr.rel (%p170) target = $region32
    $region31: #{residual_block_forward.2} parent=5 // pred_region
      // Predicated region
      $region33: #{residual_block_forward.2} parent=31 // pred_check
        %p173 = pneg %p31
      $region34: #{residual_block_forward.2} parent=31 // pred_check_branch
        %175 = sbr.rel (%p173) target = $region36
      $region35: #{residual_block_forward.2} parent=31 // pred_region
        %s176 = smul.u32 64, %s11
        %p177 = scmp.lt.s32.totalorder %s176, 127
        %s178 = scalar_select %p177, %s176, 127
        %s179 = smul.addr %s178, 4
        %s180 = scalar_lea.vmem %s0, %s179
        %s181 = smul.u32 64, %s11
      $region36: #{residual_block_forward.2} parent=31 // pred_fallthru
        _
    $region32: #{residual_block_forward.2} parent=5 // pred_fallthru
      _
    %p182 = scmp.le.s32.totalorder 1, %s11
    %p183 = scmp.lt.s32.totalorder %s11, 3
    %p184 = pnand %p182, %p183
    %p185 = pneg %p184
    // Predicated region
    $region37: #{residual_block_forward.2} parent=5 // pred_check
      _
    $region38: #{residual_block_forward.2} parent=5 // pred_check_branch
      %187 = sbr.rel (%p184) target = $region40
    $region39: #{residual_block_forward.2} parent=5 // pred_region
      %s188 = ssub.s32 %s11, 1
      %s189 = smul.u32 64, %s16
      %p190 = scmp.lt.s32.totalorder %s189, 127
      %s191 = scalar_select %p190, %s189, 127
      %s192 = smul.addr %s191, 4
      %s193 = scalar_lea.vmem %s0, %s192
      %p194 = pneg %p37
      %p195 = pneg %p34
      %p196 = pneg %p58
      %p197 = pneg %p55
      %p198 = pneg %p79
      %p199 = pneg %p76
      %p200 = pneg %p100
      %p201 = pneg %p97
      %p202 = pneg %p121
      %p203 = pneg %p118
      %p204 = pneg %p142
      %p205 = pneg %p139
      %s206 = smul.u32 64, %s16
      %p207 = scmp.lt.s32.totalorder %s206, 127
      %s208 = scalar_select %p207, %s206, 127
      %s209 = smul.addr %s208, 4
      %s210 = scalar_lea.vmem %s0, %s209
      %s211 = smul.u32 64, %s16
      %v213 = vld [vmem:[%s210] sm:$0xf]
      %v214 = vld [vmem:[%s210 + $0x4] sm:$0xf]
      %v215 = vld [vmem:[%s210 + $0x8] sm:$0xf]
      %v216 = vld [vmem:[%s210 + $0xc] sm:$0xf]
      %v217 = vld [vmem:[%s210 + $0x10] sm:$0xf]
      %v218 = vld [vmem:[%s210 + $0x14] sm:$0xf]
      %v219 = vld [vmem:[%s210 + $0x18] sm:$0xf]
      %v220 = vld [vmem:[%s210 + $0x1c] sm:$0xf]
      %v221 = vld [vmem:[%s210 + $0x20] sm:$0xf]
      %v222 = vld [vmem:[%s210 + $0x24] sm:$0xf]
      %v223 = vld [vmem:[%s210 + $0x28] sm:$0xf]
      %v224 = vld [vmem:[%s210 + $0x2c] sm:$0xf]
      %v225 = vld [vmem:[%s210 + $0x30] sm:$0xf]
      %v226 = vld [vmem:[%s210 + $0x34] sm:$0xf]
      %v227 = vld [vmem:[%s210 + $0x38] sm:$0xf]
      %v228 = vld [vmem:[%s210 + $0x3c] sm:$0xf]
      %v229 = vld [vmem:[%s210 + $0x40] sm:$0xf]
      %v230 = vld [vmem:[%s210 + $0x44] sm:$0xf]
      %v231 = vld [vmem:[%s210 + $0x48] sm:$0xf]
      %v232 = vld [vmem:[%s210 + $0x4c] sm:$0xf]
      %v233 = vld [vmem:[%s210 + $0x50] sm:$0xf]
      %v234 = vld [vmem:[%s210 + $0x54] sm:$0xf]
      %v235 = vld [vmem:[%s210 + $0x58] sm:$0xf]
      %v236 = vld [vmem:[%s210 + $0x5c] sm:$0xf]
      %v237 = vld [vmem:[%s210 + $0x60] sm:$0xf]
      %v238 = vld [vmem:[%s210 + $0x64] sm:$0xf]
      %v239 = vld [vmem:[%s210 + $0x68] sm:$0xf]
      %v240 = vld [vmem:[%s210 + $0x6c] sm:$0xf]
      %v241 = vld [vmem:[%s210 + $0x70] sm:$0xf]
      %v242 = vld [vmem:[%s210 + $0x74] sm:$0xf]
      %v243 = vld [vmem:[%s210 + $0x78] sm:$0xf]
      %v244 = vld [vmem:[%s210 + $0x7c] sm:$0xf]
      %v245 = vld [vmem:[%s210 + $0x80] sm:$0xf]
      %v246 = vld [vmem:[%s210 + $0x84] sm:$0xf]
      %v247 = vld [vmem:[%s210 + $0x88] sm:$0xf]
      %v248 = vld [vmem:[%s210 + $0x8c] sm:$0xf]
      %v249 = vld [vmem:[%s210 + $0x90] sm:$0xf]
      %v250 = vld [vmem:[%s210 + $0x94] sm:$0xf]
      %v251 = vld [vmem:[%s210 + $0x98] sm:$0xf]
      %v252 = vld [vmem:[%s210 + $0x9c] sm:$0xf]
      %v253 = vld [vmem:[%s210 + $0xa0] sm:$0xf]
      %v254 = vld [vmem:[%s210 + $0xa4] sm:$0xf]
      %v255 = vld [vmem:[%s210 + $0xa8] sm:$0xf]
      %v256 = vld [vmem:[%s210 + $0xac] sm:$0xf]
      %v257 = vld [vmem:[%s210 + $0xb0] sm:$0xf]
      %v258 = vld [vmem:[%s210 + $0xb4] sm:$0xf]
      %v259 = vld [vmem:[%s210 + $0xb8] sm:$0xf]
      %v260 = vld [vmem:[%s210 + $0xbc] sm:$0xf]
      %v261 = vld [vmem:[%s210 + $0xc0] sm:$0xf]
      %v262 = vld [vmem:[%s210 + $0xc4] sm:$0xf]
      %v263 = vld [vmem:[%s210 + $0xc8] sm:$0xf]
      %v264 = vld [vmem:[%s210 + $0xcc] sm:$0xf]
      %v265 = vld [vmem:[%s210 + $0xd0] sm:$0xf]
      %v266 = vld [vmem:[%s210 + $0xd4] sm:$0xf]
      %v267 = vld [vmem:[%s210 + $0xd8] sm:$0xf]
      %v268 = vld [vmem:[%s210 + $0xdc] sm:$0xf]
      %v269 = vld [vmem:[%s210 + $0xe0] sm:$0xf]
      %v270 = vld [vmem:[%s210 + $0xe4] sm:$0xf]
      %v271 = vld [vmem:[%s210 + $0xe8] sm:$0xf]
      %v272 = vld [vmem:[%s210 + $0xec] sm:$0xf]
      %v273 = vld [vmem:[%s210 + $0xf0] sm:$0xf]
      %v274 = vld [vmem:[%s210 + $0xf4] sm:$0xf]
      %v275 = vld [vmem:[%s210 + $0xf8] sm:$0xf]
      %v276 = vld [vmem:[%s210 + $0xfc] sm:$0xf]
      %v277 = vld [vmem:[%s1] sm:$0xf]
      %v278 = vld [vmem:[%s1 + $0x4] sm:$0xf]
      %v279 = vld [vmem:[%s1 + $0x8] sm:$0xf]
      %v280 = vld [vmem:[%s1 + $0xc] sm:$0xf]
      %v281 = vld [vmem:[%s1 + $0x10] sm:$0xf]
      %v282 = vld [vmem:[%s1 + $0x14] sm:$0xf]
      %v283 = vld [vmem:[%s1 + $0x18] sm:$0xf]
      %v284 = vld [vmem:[%s1 + $0x1c] sm:$0xf]
      %v285 = vld [vmem:[%s1 + $0x20] sm:$0xf]
      %v286 = vld [vmem:[%s1 + $0x24] sm:$0xf]
      %v287 = vld [vmem:[%s1 + $0x28] sm:$0xf]
      %v288 = vld [vmem:[%s1 + $0x2c] sm:$0xf]
      %v289 = vld [vmem:[%s1 + $0x30] sm:$0xf]
      %v290 = vld [vmem:[%s1 + $0x34] sm:$0xf]
      %v291 = vld [vmem:[%s1 + $0x38] sm:$0xf]
      %v292 = vld [vmem:[%s1 + $0x3c] sm:$0xf]
      %v293 = vld [vmem:[%s2] sm:$0x1]
      %v295 = vlaneseq
      %v296 = vshrl.u32 %v295, 7
      %v297 = vsub.s32 0, %v296
      %v298 = vrot.slane %v293, %v297
      %v364 = vunpack.c.l.b16 %v213
      %v365 = vunpack.c.l.b16 %v214
      %v366 = vunpack.c.l.b16 %v215
      %v367 = vunpack.c.l.b16 %v216
      %v368 = vunpack.c.l.b16 %v217
      %v369 = vunpack.c.l.b16 %v218
      %v370 = vunpack.c.l.b16 %v219
      %v371 = vunpack.c.l.b16 %v220
      %v372 = vunpack.c.l.b16 %v221
      %v373 = vunpack.c.l.b16 %v222
      %v374 = vunpack.c.l.b16 %v223
      %v375 = vunpack.c.l.b16 %v224
      %v376 = vunpack.c.l.b16 %v225
      %v377 = vunpack.c.l.b16 %v226
      %v378 = vunpack.c.l.b16 %v227
      %v379 = vunpack.c.l.b16 %v228
      %v380 = vunpack.c.l.b16 %v229
      %v381 = vunpack.c.l.b16 %v230
      %v382 = vunpack.c.l.b16 %v231
      %v383 = vunpack.c.l.b16 %v232
      %v384 = vunpack.c.l.b16 %v233
      %v385 = vunpack.c.l.b16 %v234
      %v386 = vunpack.c.l.b16 %v235
      %v387 = vunpack.c.l.b16 %v236
      %v388 = vunpack.c.l.b16 %v237
      %v389 = vunpack.c.l.b16 %v238
      %v390 = vunpack.c.l.b16 %v239
      %v391 = vunpack.c.l.b16 %v240
      %v392 = vunpack.c.l.b16 %v241
      %v393 = vunpack.c.l.b16 %v242
      %v394 = vunpack.c.l.b16 %v243
      %v395 = vunpack.c.l.b16 %v244
      %v396 = vunpack.c.l.b16 %v245
      %v397 = vunpack.c.l.b16 %v246
      %v398 = vunpack.c.l.b16 %v247
      %v399 = vunpack.c.l.b16 %v248
      %v400 = vunpack.c.l.b16 %v249
      %v401 = vunpack.c.l.b16 %v250
      %v402 = vunpack.c.l.b16 %v251
      %v403 = vunpack.c.l.b16 %v252
      %v404 = vunpack.c.l.b16 %v253
      %v405 = vunpack.c.l.b16 %v254
      %v406 = vunpack.c.l.b16 %v255
      %v407 = vunpack.c.l.b16 %v256
      %v408 = vunpack.c.l.b16 %v257
      %v409 = vunpack.c.l.b16 %v258
      %v410 = vunpack.c.l.b16 %v259
      %v411 = vunpack.c.l.b16 %v260
      %v412 = vunpack.c.l.b16 %v261
      %v413 = vunpack.c.l.b16 %v262
      %v414 = vunpack.c.l.b16 %v263
      %v415 = vunpack.c.l.b16 %v264
      %v416 = vunpack.c.l.b16 %v265
      %v417 = vunpack.c.l.b16 %v266
      %v418 = vunpack.c.l.b16 %v267
      %v419 = vunpack.c.l.b16 %v268
      %v420 = vunpack.c.l.b16 %v269
      %v421 = vunpack.c.l.b16 %v270
      %v422 = vunpack.c.l.b16 %v271
      %v423 = vunpack.c.l.b16 %v272
      %v424 = vunpack.c.l.b16 %v273
      %v425 = vunpack.c.l.b16 %v274
      %v426 = vunpack.c.l.b16 %v275
      %v427 = vunpack.c.l.b16 %v276
      %v428 = vpack.c.b16 %v365, %v364
      %v429 = vpack.c.b16 %v367, %v366
      %v430 = vpack.c.b16 %v369, %v368
      %v431 = vpack.c.b16 %v371, %v370
      %v432 = vpack.c.b16 %v373, %v372
      %v433 = vpack.c.b16 %v375, %v374
      %v434 = vpack.c.b16 %v377, %v376
      %v435 = vpack.c.b16 %v379, %v378
      %v436 = vpack.c.b16 %v381, %v380
      %v437 = vpack.c.b16 %v383, %v382
      %v438 = vpack.c.b16 %v385, %v384
      %v439 = vpack.c.b16 %v387, %v386
      %v440 = vpack.c.b16 %v389, %v388
      %v441 = vpack.c.b16 %v391, %v390
      %v442 = vpack.c.b16 %v393, %v392
      %v443 = vpack.c.b16 %v395, %v394
      %v444 = vpack.c.b16 %v397, %v396
      %v445 = vpack.c.b16 %v399, %v398
      %v446 = vpack.c.b16 %v401, %v400
      %v447 = vpack.c.b16 %v403, %v402
      %v448 = vpack.c.b16 %v405, %v404
      %v449 = vpack.c.b16 %v407, %v406
      %v450 = vpack.c.b16 %v409, %v408
      %v451 = vpack.c.b16 %v411, %v410
      %v452 = vpack.c.b16 %v413, %v412
      %v453 = vpack.c.b16 %v415, %v414
      %v454 = vpack.c.b16 %v417, %v416
      %v455 = vpack.c.b16 %v419, %v418
      %v456 = vpack.c.b16 %v421, %v420
      %v457 = vpack.c.b16 %v423, %v422
      %v458 = vpack.c.b16 %v425, %v424
      %v459 = vpack.c.b16 %v427, %v426
      %v508 = vunpack.c.l.b16 %v277
      %v509 = vunpack.c.l.b16 %v278
      %v510 = vunpack.c.l.b16 %v279
      %v511 = vunpack.c.l.b16 %v280
      %v512 = vunpack.c.l.b16 %v281
      %v513 = vunpack.c.l.b16 %v282
      %v514 = vunpack.c.l.b16 %v283
      %v515 = vunpack.c.l.b16 %v284
      %v516 = vunpack.c.l.b16 %v285
      %v517 = vunpack.c.l.b16 %v286
      %v518 = vunpack.c.l.b16 %v287
      %v519 = vunpack.c.l.b16 %v288
      %v520 = vunpack.c.l.b16 %v289
      %v521 = vunpack.c.l.b16 %v290
      %v522 = vunpack.c.l.b16 %v291
      %v523 = vunpack.c.l.b16 %v292
      %v524 = vpack.c.b16 %v509, %v508
      %v525 = vpack.c.b16 %v511, %v510
      %v526 = vpack.c.b16 %v513, %v512
      %v527 = vpack.c.b16 %v515, %v514
      %v528 = vpack.c.b16 %v517, %v516
      %v529 = vpack.c.b16 %v519, %v518
      %v530 = vpack.c.b16 %v521, %v520
      %v531 = vpack.c.b16 %v523, %v522
      %540 = vmatprep.subr.bf16.mxu0 0
      %541 = vmatpush1.bf16.msra.mxu0 %v524
      %542 = vmatprep.subr.bf16.mxu0 0
      %543 = vmatpush1.bf16.msra.mxu0 %v525
      %544 = vmatprep.subr.bf16.mxu0 0
      %545 = vmatpush1.bf16.msra.mxu0 %v526
      %546 = vmatprep.subr.bf16.mxu0 0
      %547 = vmatpush1.bf16.msra.mxu0 %v527
      %548 = vmatprep.subr.bf16.mxu0 0
      %549 = vmatpush1.bf16.msra.mxu0 %v528
      %550 = vmatprep.subr.bf16.mxu0 0
      %551 = vmatpush1.bf16.msra.mxu0 %v529
      %552 = vmatprep.subr.bf16.mxu0 0
      %553 = vmatpush1.bf16.msra.mxu0 %v530
      %554 = vmatprep.subr.bf16.mxu0 0
      %555 = vmatpush1.bf16.msra.mxu0 %v531
      %556 = vmatprep.subr.bf16.mxu0 0
      %557 = vmatpush1.bf16.msra.mxu0 0
      %558 = vmatprep.subr.bf16.mxu0 0
      %559 = vmatpush1.bf16.msra.mxu0 0
      %560 = vmatprep.subr.bf16.mxu0 0
      %561 = vmatpush1.bf16.msra.mxu0 0
      %562 = vmatprep.subr.bf16.mxu0 0
      %563 = vmatpush1.bf16.msra.mxu0 0
      %564 = vmatprep.subr.bf16.mxu0 0
      %565 = vmatpush1.bf16.msra.mxu0 0
      %566 = vmatprep.subr.bf16.mxu0 0
      %567 = vmatpush1.bf16.msra.mxu0 0
      %568 = vmatprep.subr.bf16.mxu0 0
      %569 = vmatpush1.bf16.msra.mxu0 0
      %570 = vmatprep.subr.bf16.mxu0 0
      %571 = vmatpush1.bf16.msra.mxu0 0
      %572 = vmatprep.mubr.bf16.mxu0 0
      %573 = vmatmul.mubr.bf16.gmra.mrb[0].mxu0 %v428
      %v574 = vpop.f32.mrb[0].mxu0
      %v575 = vadd.f32 %v298, %v574
      %v576 = vpop.f32.mrb[0].mxu0
      %v577 = vpop.f32.mrb[0].mxu0
      %v578 = vadd.f32 %v298, %v577
      %v579 = vpop.f32.mrb[0].mxu0
      %580 = vmatprep.mubr.bf16.mxu0 0
      %581 = vmatmul.mubr.bf16.gmra.mrb[0].mxu0 %v429
      %v582 = vpop.f32.mrb[0].mxu0
      %v583 = vadd.f32 %v298, %v582
      %v584 = vpop.f32.mrb[0].mxu0
      %v585 = vpop.f32.mrb[0].mxu0
      %v586 = vadd.f32 %v298, %v585
      %v587 = vpop.f32.mrb[0].mxu0
      %588 = vmatprep.mubr.bf16.mxu0 0
      %589 = vmatmul.mubr.bf16.gmra.mrb[0].mxu0 %v430
      %v590 = vpop.f32.mrb[0].mxu0
      %v591 = vadd.f32 %v298, %v590
      %v592 = vpop.f32.mrb[0].mxu0
      %v593 = vpop.f32.mrb[0].mxu0
      %v594 = vadd.f32 %v298, %v593
      %v595 = vpop.f32.mrb[0].mxu0
      %596 = vmatprep.mubr.bf16.mxu0 0
      %597 = vmatmul.mubr.bf16.gmra.mrb[0].mxu0 %v431
      %v598 = vpop.f32.mrb[0].mxu0
      %v599 = vadd.f32 %v298, %v598
      %v600 = vpop.f32.mrb[0].mxu0
      %v601 = vpop.f32.mrb[0].mxu0
      %v602 = vadd.f32 %v298, %v601
      %v603 = vpop.f32.mrb[0].mxu0
      %604 = vmatprep.mubr.bf16.mxu0 0
      %605 = vmatmul.mubr.bf16.gmra.mrb[0].mxu0 %v432
      %v606 = vpop.f32.mrb[0].mxu0
      %v607 = vadd.f32 %v298, %v606
      %v608 = vpop.f32.mrb[0].mxu0
      %v609 = vpop.f32.mrb[0].mxu0
      %v610 = vadd.f32 %v298, %v609
      %v611 = vpop.f32.mrb[0].mxu0
      %612 = vmatprep.mubr.bf16.mxu0 0
      %613 = vmatmul.mubr.bf16.gmra.mrb[0].mxu0 %v433
      %v614 = vpop.f32.mrb[0].mxu0
      %v615 = vadd.f32 %v298, %v614
      %v616 = vpop.f32.mrb[0].mxu0
      %v617 = vpop.f32.mrb[0].mxu0
      %v618 = vadd.f32 %v298, %v617
      %v619 = vpop.f32.mrb[0].mxu0
      %620 = vmatprep.mubr.bf16.mxu0 0
      %621 = vmatmul.mubr.bf16.gmra.mrb[0].mxu0 %v434
      %v622 = vpop.f32.mrb[0].mxu0
      %v623 = vadd.f32 %v298, %v622
      %v624 = vpop.f32.mrb[0].mxu0
      %v625 = vpop.f32.mrb[0].mxu0
      %v626 = vadd.f32 %v298, %v625
      %v627 = vpop.f32.mrb[0].mxu0
      %628 = vmatprep.mubr.bf16.mxu0 0
      %629 = vmatmul.mubr.bf16.gmra.mrb[0].mxu0 %v435
      %v630 = vpop.f32.mrb[0].mxu0
      %v631 = vadd.f32 %v298, %v630
      %v632 = vpop.f32.mrb[0].mxu0
      %v633 = vpop.f32.mrb[0].mxu0
      %v634 = vadd.f32 %v298, %v633
      %v635 = vpop.f32.mrb[0].mxu0
      %636 = vmatprep.mubr.bf16.mxu0 0
      %637 = vmatmul.mubr.bf16.gmra.mrb[0].mxu0 %v436
      %v638 = vpop.f32.mrb[0].mxu0
      %v639 = vadd.f32 %v298, %v638
      %v640 = vpop.f32.mrb[0].mxu0
      %v641 = vpop.f32.mrb[0].mxu0
      %v642 = vadd.f32 %v298, %v641
      %v643 = vpop.f32.mrb[0].mxu0
      %644 = vmatprep.mubr.bf16.mxu0 0
      %645 = vmatmul.mubr.bf16.gmra.mrb[0].mxu0 %v437
      %v646 = vpop.f32.mrb[0].mxu0
      %v647 = vadd.f32 %v298, %v646
      %v648 = vpop.f32.mrb[0].mxu0
      %v649 = vpop.f32.mrb[0].mxu0
      %v650 = vadd.f32 %v298, %v649
      %v651 = vpop.f32.mrb[0].mxu0
      %652 = vmatprep.mubr.bf16.mxu0 0
      %653 = vmatmul.mubr.bf16.gmra.mrb[0].mxu0 %v438
      %v654 = vpop.f32.mrb[0].mxu0
      %v655 = vadd.f32 %v298, %v654
      %v656 = vpop.f32.mrb[0].mxu0
      %v657 = vpop.f32.mrb[0].mxu0
      %v658 = vadd.f32 %v298, %v657
      %v659 = vpop.f32.mrb[0].mxu0
      %660 = vmatprep.mubr.bf16.mxu0 0
      %661 = vmatmul.mubr.bf16.gmra.mrb[0].mxu0 %v439
      %v662 = vpop.f32.mrb[0].mxu0
      %v663 = vadd.f32 %v298, %v662
      %v664 = vpop.f32.mrb[0].mxu0
      %v665 = vpop.f32.mrb[0].mxu0
      %v666 = vadd.f32 %v298, %v665
      %v667 = vpop.f32.mrb[0].mxu0
      %668 = vmatprep.mubr.bf16.mxu0 0
      %669 = vmatmul.mubr.bf16.gmra.mrb[0].mxu0 %v440
      %v670 = vpop.f32.mrb[0].mxu0
      %v671 = vadd.f32 %v298, %v670
      %v672 = vpop.f32.mrb[0].mxu0
      %v673 = vpop.f32.mrb[0].mxu0
      %v674 = vadd.f32 %v298, %v673
      %v675 = vpop.f32.mrb[0].mxu0
      %676 = vmatprep.mubr.bf16.mxu0 0
      %677 = vmatmul.mubr.bf16.gmra.mrb[0].mxu0 %v441
      %v678 = vpop.f32.mrb[0].mxu0
      %v679 = vadd.f32 %v298, %v678
      %v680 = vpop.f32.mrb[0].mxu0
      %v681 = vpop.f32.mrb[0].mxu0
      %v682 = vadd.f32 %v298, %v681
      %v683 = vpop.f32.mrb[0].mxu0
      %684 = vmatprep.mubr.bf16.mxu0 0
      %685 = vmatmul.mubr.bf16.gmra.mrb[0].mxu0 %v442
      %v686 = vpop.f32.mrb[0].mxu0
      %v687 = vadd.f32 %v298, %v686
      %v688 = vpop.f32.mrb[0].mxu0
      %v689 = vpop.f32.mrb[0].mxu0
      %v690 = vadd.f32 %v298, %v689
      %v691 = vpop.f32.mrb[0].mxu0
      %692 = vmatprep.mubr.bf16.mxu0 0
      %693 = vmatmul.mubr.bf16.gmra.mrb[0].mxu0 %v443
      %v694 = vpop.f32.mrb[0].mxu0
      %v695 = vadd.f32 %v298, %v694
      %v696 = vpop.f32.mrb[0].mxu0
      %v697 = vpop.f32.mrb[0].mxu0
      %v698 = vadd.f32 %v298, %v697
      %v699 = vpop.f32.mrb[0].mxu0
      %700 = vmatprep.mubr.bf16.mxu0 0
      %701 = vmatmul.mubr.bf16.gmra.mrb[0].mxu0 %v444
      %v702 = vpop.f32.mrb[0].mxu0
      %v703 = vadd.f32 %v298, %v702
      %v704 = vpop.f32.mrb[0].mxu0
      %v705 = vpop.f32.mrb[0].mxu0
      %v706 = vadd.f32 %v298, %v705
      %v707 = vpop.f32.mrb[0].mxu0
      %708 = vmatprep.mubr.bf16.mxu0 0
      %709 = vmatmul.mubr.bf16.gmra.mrb[0].mxu0 %v445
      %v710 = vpop.f32.mrb[0].mxu0
      %v711 = vadd.f32 %v298, %v710
      %v712 = vpop.f32.mrb[0].mxu0
      %v713 = vpop.f32.mrb[0].mxu0
      %v714 = vadd.f32 %v298, %v713
      %v715 = vpop.f32.mrb[0].mxu0
      %716 = vmatprep.mubr.bf16.mxu0 0
      %717 = vmatmul.mubr.bf16.gmra.mrb[0].mxu0 %v446
      %v718 = vpop.f32.mrb[0].mxu0
      %v719 = vadd.f32 %v298, %v718
      %v720 = vpop.f32.mrb[0].mxu0
      %v721 = vpop.f32.mrb[0].mxu0
      %v722 = vadd.f32 %v298, %v721
      %v723 = vpop.f32.mrb[0].mxu0
      %724 = vmatprep.mubr.bf16.mxu0 0
      %725 = vmatmul.mubr.bf16.gmra.mrb[0].mxu0 %v447
      %v726 = vpop.f32.mrb[0].mxu0
      %v727 = vadd.f32 %v298, %v726
      %v728 = vpop.f32.mrb[0].mxu0
      %v729 = vpop.f32.mrb[0].mxu0
      %v730 = vadd.f32 %v298, %v729
      %v731 = vpop.f32.mrb[0].mxu0
      %732 = vmatprep.mubr.bf16.mxu0 0
      %733 = vmatmul.mubr.bf16.gmra.mrb[0].mxu0 %v448
      %v734 = vpop.f32.mrb[0].mxu0
      %v735 = vadd.f32 %v298, %v734
      %v736 = vpop.f32.mrb[0].mxu0
      %v737 = vpop.f32.mrb[0].mxu0
      %v738 = vadd.f32 %v298, %v737
      %v739 = vpop.f32.mrb[0].mxu0
      %740 = vmatprep.mubr.bf16.mxu0 0
      %741 = vmatmul.mubr.bf16.gmra.mrb[0].mxu0 %v449
      %v742 = vpop.f32.mrb[0].mxu0
      %v743 = vadd.f32 %v298, %v742
      %v744 = vpop.f32.mrb[0].mxu0
      %v745 = vpop.f32.mrb[0].mxu0
      %v746 = vadd.f32 %v298, %v745
      %v747 = vpop.f32.mrb[0].mxu0
      %748 = vmatprep.mubr.bf16.mxu0 0
      %749 = vmatmul.mubr.bf16.gmra.mrb[0].mxu0 %v450
      %v750 = vpop.f32.mrb[0].mxu0
      %v751 = vadd.f32 %v298, %v750
      %v752 = vpop.f32.mrb[0].mxu0
      %v753 = vpop.f32.mrb[0].mxu0
      %v754 = vadd.f32 %v298, %v753
      %v755 = vpop.f32.mrb[0].mxu0
      %756 = vmatprep.mubr.bf16.mxu0 0
      %757 = vmatmul.mubr.bf16.gmra.mrb[0].mxu0 %v451
      %v758 = vpop.f32.mrb[0].mxu0
      %v759 = vadd.f32 %v298, %v758
      %v760 = vpop.f32.mrb[0].mxu0
      %v761 = vpop.f32.mrb[0].mxu0
      %v762 = vadd.f32 %v298, %v761
      %v763 = vpop.f32.mrb[0].mxu0
      %764 = vmatprep.mubr.bf16.mxu0 0
      %765 = vmatmul.mubr.bf16.gmra.mrb[0].mxu0 %v452
      %v766 = vpop.f32.mrb[0].mxu0
      %v767 = vadd.f32 %v298, %v766
      %v768 = vpop.f32.mrb[0].mxu0
      %v769 = vpop.f32.mrb[0].mxu0
      %v770 = vadd.f32 %v298, %v769
      %v771 = vpop.f32.mrb[0].mxu0
      %772 = vmatprep.mubr.bf16.mxu0 0
      %773 = vmatmul.mubr.bf16.gmra.mrb[0].mxu0 %v453
      %v774 = vpop.f32.mrb[0].mxu0
      %v775 = vadd.f32 %v298, %v774
      %v776 = vpop.f32.mrb[0].mxu0
      %v777 = vpop.f32.mrb[0].mxu0
      %v778 = vadd.f32 %v298, %v777
      %v779 = vpop.f32.mrb[0].mxu0
      %780 = vmatprep.mubr.bf16.mxu0 0
      %781 = vmatmul.mubr.bf16.gmra.mrb[0].mxu0 %v454
      %v782 = vpop.f32.mrb[0].mxu0
      %v783 = vadd.f32 %v298, %v782
      %v784 = vpop.f32.mrb[0].mxu0
      %v785 = vpop.f32.mrb[0].mxu0
      %v786 = vadd.f32 %v298, %v785
      %v787 = vpop.f32.mrb[0].mxu0
      %788 = vmatprep.mubr.bf16.mxu0 0
      %789 = vmatmul.mubr.bf16.gmra.mrb[0].mxu0 %v455
      %v790 = vpop.f32.mrb[0].mxu0
      %v791 = vadd.f32 %v298, %v790
      %v792 = vpop.f32.mrb[0].mxu0
      %v793 = vpop.f32.mrb[0].mxu0
      %v794 = vadd.f32 %v298, %v793
      %v795 = vpop.f32.mrb[0].mxu0
      %796 = vmatprep.mubr.bf16.mxu0 0
      %797 = vmatmul.mubr.bf16.gmra.mrb[0].mxu0 %v456
      %v798 = vpop.f32.mrb[0].mxu0
      %v799 = vadd.f32 %v298, %v798
      %v800 = vpop.f32.mrb[0].mxu0
      %v801 = vpop.f32.mrb[0].mxu0
      %v802 = vadd.f32 %v298, %v801
      %v803 = vpop.f32.mrb[0].mxu0
      %804 = vmatprep.mubr.bf16.mxu0 0
      %805 = vmatmul.mubr.bf16.gmra.mrb[0].mxu0 %v457
      %v806 = vpop.f32.mrb[0].mxu0
      %v807 = vadd.f32 %v298, %v806
      %v808 = vpop.f32.mrb[0].mxu0
      %v809 = vpop.f32.mrb[0].mxu0
      %v810 = vadd.f32 %v298, %v809
      %v811 = vpop.f32.mrb[0].mxu0
      %812 = vmatprep.mubr.bf16.mxu0 0
      %813 = vmatmul.mubr.bf16.gmra.mrb[0].mxu0 %v458
      %v814 = vpop.f32.mrb[0].mxu0
      %v815 = vadd.f32 %v298, %v814
      %v816 = vpop.f32.mrb[0].mxu0
      %v817 = vpop.f32.mrb[0].mxu0
      %v818 = vadd.f32 %v298, %v817
      %v819 = vpop.f32.mrb[0].mxu0
      %820 = vmatprep.mubr.bf16.mxu0 0
      %821 = vmatmul.mubr.bf16.gmra.mrb[0].mxu0 %v459
      %v822 = vpop.f32.mrb[0].mxu0
      %v823 = vadd.f32 %v298, %v822
      %v824 = vpop.f32.mrb[0].mxu0
      %v825 = vpop.f32.mrb[0].mxu0
      %v826 = vadd.f32 %v298, %v825
      %v827 = vpop.f32.mrb[0].mxu0
      %828 = vdwg.mxu0
      %s829 = smul.u32 %s16, 512
      %s830 = scalar_lea.vmem [#allocation2], %s829
      %831 = vst [vmem:[%s830] sm:$0xff] %v575
      %832 = vst [vmem:[%s830 + $0x8] sm:$0xff] %v578
      %833 = vst [vmem:[%s830 + $0x10] sm:$0xff] %v583
      %834 = vst [vmem:[%s830 + $0x18] sm:$0xff] %v586
      %835 = vst [vmem:[%s830 + $0x20] sm:$0xff] %v591
      %836 = vst [vmem:[%s830 + $0x28] sm:$0xff] %v594
      %837 = vst [vmem:[%s830 + $0x30] sm:$0xff] %v599
      %838 = vst [vmem:[%s830 + $0x38] sm:$0xff] %v602
      %839 = vst [vmem:[%s830 + $0x40] sm:$0xff] %v607
      %840 = vst [vmem:[%s830 + $0x48] sm:$0xff] %v610
      %841 = vst [vmem:[%s830 + $0x50] sm:$0xff] %v615
      %842 = vst [vmem:[%s830 + $0x58] sm:$0xff] %v618
      %843 = vst [vmem:[%s830 + $0x60] sm:$0xff] %v623
      %844 = vst [vmem:[%s830 + $0x68] sm:$0xff] %v626
      %845 = vst [vmem:[%s830 + $0x70] sm:$0xff] %v631
      %846 = vst [vmem:[%s830 + $0x78] sm:$0xff] %v634
      %847 = vst [vmem:[%s830 + $0x80] sm:$0xff] %v639
      %848 = vst [vmem:[%s830 + $0x88] sm:$0xff] %v642
      %849 = vst [vmem:[%s830 + $0x90] sm:$0xff] %v647
      %850 = vst [vmem:[%s830 + $0x98] sm:$0xff] %v650
      %851 = vst [vmem:[%s830 + $0xa0] sm:$0xff] %v655
      %852 = vst [vmem:[%s830 + $0xa8] sm:$0xff] %v658
      %853 = vst [vmem:[%s830 + $0xb0] sm:$0xff] %v663
      %854 = vst [vmem:[%s830 + $0xb8] sm:$0xff] %v666
      %855 = vst [vmem:[%s830 + $0xc0] sm:$0xff] %v671
      %856 = vst [vmem:[%s830 + $0xc8] sm:$0xff] %v674
      %857 = vst [vmem:[%s830 + $0xd0] sm:$0xff] %v679
      %858 = vst [vmem:[%s830 + $0xd8] sm:$0xff] %v682
      %859 = vst [vmem:[%s830 + $0xe0] sm:$0xff] %v687
      %860 = vst [vmem:[%s830 + $0xe8] sm:$0xff] %v690
      %861 = vst [vmem:[%s830 + $0xf0] sm:$0xff] %v695
      %862 = vst [vmem:[%s830 + $0xf8] sm:$0xff] %v698
      %863 = vst [vmem:[%s830 + $0x100] sm:$0xff] %v703
      %864 = vst [vmem:[%s830 + $0x108] sm:$0xff] %v706
      %865 = vst [vmem:[%s830 + $0x110] sm:$0xff] %v711
      %866 = vst [vmem:[%s830 + $0x118] sm:$0xff] %v714
      %867 = vst [vmem:[%s830 + $0x120] sm:$0xff] %v719
      %868 = vst [vmem:[%s830 + $0x128] sm:$0xff] %v722
      %869 = vst [vmem:[%s830 + $0x130] sm:$0xff] %v727
      %870 = vst [vmem:[%s830 + $0x138] sm:$0xff] %v730
      %871 = vst [vmem:[%s830 + $0x140] sm:$0xff] %v735
      %872 = vst [vmem:[%s830 + $0x148] sm:$0xff] %v738
      %873 = vst [vmem:[%s830 + $0x150] sm:$0xff] %v743
      %874 = vst [vmem:[%s830 + $0x158] sm:$0xff] %v746
      %875 = vst [vmem:[%s830 + $0x160] sm:$0xff] %v751
      %876 = vst [vmem:[%s830 + $0x168] sm:$0xff] %v754
      %877 = vst [vmem:[%s830 + $0x170] sm:$0xff] %v759
      %878 = vst [vmem:[%s830 + $0x178] sm:$0xff] %v762
      %879 = vst [vmem:[%s830 + $0x180] sm:$0xff] %v767
      %880 = vst [vmem:[%s830 + $0x188] sm:$0xff] %v770
      %881 = vst [vmem:[%s830 + $0x190] sm:$0xff] %v775
      %882 = vst [vmem:[%s830 + $0x198] sm:$0xff] %v778
      %883 = vst [vmem:[%s830 + $0x1a0] sm:$0xff] %v783
      %884 = vst [vmem:[%s830 + $0x1a8] sm:$0xff] %v786
      %885 = vst [vmem:[%s830 + $0x1b0] sm:$0xff] %v791
      %886 = vst [vmem:[%s830 + $0x1b8] sm:$0xff] %v794
      %887 = vst [vmem:[%s830 + $0x1c0] sm:$0xff] %v799
      %888 = vst [vmem:[%s830 + $0x1c8] sm:$0xff] %v802
      %889 = vst [vmem:[%s830 + $0x1d0] sm:$0xff] %v807
      %890 = vst [vmem:[%s830 + $0x1d8] sm:$0xff] %v810
      %891 = vst [vmem:[%s830 + $0x1e0] sm:$0xff] %v815
      %892 = vst [vmem:[%s830 + $0x1e8] sm:$0xff] %v818
      %893 = vst [vmem:[%s830 + $0x1f0] sm:$0xff] %v823
      %894 = vst [vmem:[%s830 + $0x1f8] sm:$0xff] %v826
      %p895 = scmp.eq.s32.totalorder %s16, 0
      // Predicated region
      $region41: #{residual_block_forward.2} parent=39 // pred_check
        %p896 = pneg %p895
      $region42: #{residual_block_forward.2} parent=39 // pred_check_branch
        %898 = sbr.rel (%p896) target = $region44
      $region43: #{residual_block_forward.2} parent=39 // pred_region
        %899 = vst [vmem:[#allocation3] sm:$0x1] 0.0
        %900 = vst [vmem:[#allocation4] sm:$0x1] 0.0
      $region44: #{residual_block_forward.2} parent=39 // pred_fallthru
        _
      %v901 = vld [vmem:[#allocation3] sm:$0x1]
      %v902 = vadd.f32 %v575, %v578
      %v903 = vadd.f32 %v902, %v583
      %v904 = vadd.f32 %v903, %v586
      %v905 = vadd.f32 %v904, %v591
      %v906 = vadd.f32 %v905, %v594
      %v907 = vadd.f32 %v906, %v599
      %v908 = vadd.f32 %v907, %v602
      %v909 = vadd.f32 %v908, %v607
      %v910 = vadd.f32 %v909, %v610
      %v911 = vadd.f32 %v910, %v615
      %v912 = vadd.f32 %v911, %v618
      %v913 = vadd.f32 %v912, %v623
      %v914 = vadd.f32 %v913, %v626
      %v915 = vadd.f32 %v914, %v631
      %v916 = vadd.f32 %v915, %v634
      %v917 = vadd.f32 %v916, %v639
      %v918 = vadd.f32 %v917, %v642
      %v919 = vadd.f32 %v918, %v647
      %v920 = vadd.f32 %v919, %v650
      %v921 = vadd.f32 %v920, %v655
      %v922 = vadd.f32 %v921, %v658
      %v923 = vadd.f32 %v922, %v663
      %v924 = vadd.f32 %v923, %v666
      %v925 = vadd.f32 %v924, %v671
      %v926 = vadd.f32 %v925, %v674
      %v927 = vadd.f32 %v926, %v679
      %v928 = vadd.f32 %v927, %v682
      %v929 = vadd.f32 %v928, %v687
      %v930 = vadd.f32 %v929, %v690
      %v931 = vadd.f32 %v930, %v695
      %v932 = vadd.f32 %v931, %v698
      %v933 = vadd.f32 %v932, %v703
      %v934 = vadd.f32 %v933, %v706
      %v935 = vadd.f32 %v934, %v711
      %v936 = vadd.f32 %v935, %v714
      %v937 = vadd.f32 %v936, %v719
      %v938 = vadd.f32 %v937, %v722
      %v939 = vadd.f32 %v938, %v727
      %v940 = vadd.f32 %v939, %v730
      %v941 = vadd.f32 %v940, %v735
      %v942 = vadd.f32 %v941, %v738
      %v943 = vadd.f32 %v942, %v743
      %v944 = vadd.f32 %v943, %v746
      %v945 = vadd.f32 %v944, %v751
      %v946 = vadd.f32 %v945, %v754
      %v947 = vadd.f32 %v946, %v759
      %v948 = vadd.f32 %v947, %v762
      %v949 = vadd.f32 %v948, %v767
      %v950 = vadd.f32 %v949, %v770
      %v951 = vadd.f32 %v950, %v775
      %v952 = vadd.f32 %v951, %v778
      %v953 = vadd.f32 %v952, %v783
      %v954 = vadd.f32 %v953, %v786
      %v955 = vadd.f32 %v954, %v791
      %v956 = vadd.f32 %v955, %v794
      %v957 = vadd.f32 %v956, %v799
      %v958 = vadd.f32 %v957, %v802
      %v959 = vadd.f32 %v958, %v807
      %v960 = vadd.f32 %v959, %v810
      %v961 = vadd.f32 %v960, %v815
      %v962 = vadd.f32 %v961, %v818
      %v963 = vadd.f32 %v962, %v823
      %v964 = vadd.f32 %v963, %v826
      %v965 = vrot.slane %v964, 4
      %v966 = vadd.f32 %v964, %v965
      %v967 = vrot.slane %v966, 2
      %v968 = vadd.f32 %v966, %v967
      %v969 = vrot.slane %v968, 1
      %v970 = vadd.f32 %v968, %v969
      %v971 = vadd.f32 %v901, %v970
      %972 = vst [vmem:[#allocation3] sm:$0x1] %v971
      %v973 = vld [vmem:[#allocation4] sm:$0x1]
      %v974 = vmul.f32 %v575, %v575
      %v975 = vmul.f32 %v578, %v578
      %v976 = vmul.f32 %v583, %v583
      %v977 = vmul.f32 %v586, %v586
      %v978 = vmul.f32 %v591, %v591
      %v979 = vmul.f32 %v594, %v594
      %v980 = vmul.f32 %v599, %v599
      %v981 = vmul.f32 %v602, %v602
      %v982 = vmul.f32 %v607, %v607
      %v983 = vmul.f32 %v610, %v610
      %v984 = vmul.f32 %v615, %v615
      %v985 = vmul.f32 %v618, %v618
      %v986 = vmul.f32 %v623, %v623
      %v987 = vmul.f32 %v626, %v626
      %v988 = vmul.f32 %v631, %v631
      %v989 = vmul.f32 %v634, %v634
      %v990 = vmul.f32 %v639, %v639
      %v991 = vmul.f32 %v642, %v642
      %v992 = vmul.f32 %v647, %v647
      %v993 = vmul.f32 %v650, %v650
      %v994 = vmul.f32 %v655, %v655
      %v995 = vmul.f32 %v658, %v658
      %v996 = vmul.f32 %v663, %v663
      %v997 = vmul.f32 %v666, %v666
      %v998 = vmul.f32 %v671, %v671
      %v999 = vmul.f32 %v674, %v674
      %v1000 = vmul.f32 %v679, %v679
      %v1001 = vmul.f32 %v682, %v682
      %v1002 = vmul.f32 %v687, %v687
      %v1003 = vmul.f32 %v690, %v690
      %v1004 = vmul.f32 %v695, %v695
      %v1005 = vmul.f32 %v698, %v698
      %v1006 = vmul.f32 %v703, %v703
      %v1007 = vmul.f32 %v706, %v706
      %v1008 = vmul.f32 %v711, %v711
      %v1009 = vmul.f32 %v714, %v714
      %v1010 = vmul.f32 %v719, %v719
      %v1011 = vmul.f32 %v722, %v722
      %v1012 = vmul.f32 %v727, %v727
      %v1013 = vmul.f32 %v730, %v730
      %v1014 = vmul.f32 %v735, %v735
      %v1015 = vmul.f32 %v738, %v738
      %v1016 = vmul.f32 %v743, %v743
      %v1017 = vmul.f32 %v746, %v746
      %v1018 = vmul.f32 %v751, %v751
      %v1019 = vmul.f32 %v754, %v754
      %v1020 = vmul.f32 %v759, %v759
      %v1021 = vmul.f32 %v762, %v762
      %v1022 = vmul.f32 %v767, %v767
      %v1023 = vmul.f32 %v770, %v770
      %v1024 = vmul.f32 %v775, %v775
      %v1025 = vmul.f32 %v778, %v778
      %v1026 = vmul.f32 %v783, %v783
      %v1027 = vmul.f32 %v786, %v786
      %v1028 = vmul.f32 %v791, %v791
      %v1029 = vmul.f32 %v794, %v794
      %v1030 = vmul.f32 %v799, %v799
      %v1031 = vmul.f32 %v802, %v802
      %v1032 = vmul.f32 %v807, %v807
      %v1033 = vmul.f32 %v810, %v810
      %v1034 = vmul.f32 %v815, %v815
      %v1035 = vmul.f32 %v818, %v818
      %v1036 = vmul.f32 %v823, %v823
      %v1037 = vmul.f32 %v826, %v826
      %v1038 = vadd.f32 %v974, %v975
      %v1039 = vadd.f32 %v1038, %v976
      %v1040 = vadd.f32 %v1039, %v977
      %v1041 = vadd.f32 %v1040, %v978
      %v1042 = vadd.f32 %v1041, %v979
      %v1043 = vadd.f32 %v1042, %v980
      %v1044 = vadd.f32 %v1043, %v981
      %v1045 = vadd.f32 %v1044, %v982
      %v1046 = vadd.f32 %v1045, %v983
      %v1047 = vadd.f32 %v1046, %v984
      %v1048 = vadd.f32 %v1047, %v985
      %v1049 = vadd.f32 %v1048, %v986
      %v1050 = vadd.f32 %v1049, %v987
      %v1051 = vadd.f32 %v1050, %v988
      %v1052 = vadd.f32 %v1051, %v989
      %v1053 = vadd.f32 %v1052, %v990
      %v1054 = vadd.f32 %v1053, %v991
      %v1055 = vadd.f32 %v1054, %v992
      %v1056 = vadd.f32 %v1055, %v993
      %v1057 = vadd.f32 %v1056, %v994
      %v1058 = vadd.f32 %v1057, %v995
      %v1059 = vadd.f32 %v1058, %v996
      %v1060 = vadd.f32 %v1059, %v997
      %v1061 = vadd.f32 %v1060, %v998
      %v1062 = vadd.f32 %v1061, %v999
      %v1063 = vadd.f32 %v1062, %v1000
      %v1064 = vadd.f32 %v1063, %v1001
      %v1065 = vadd.f32 %v1064, %v1002
      %v1066 = vadd.f32 %v1065, %v1003
      %v1067 = vadd.f32 %v1066, %v1004
      %v1068 = vadd.f32 %v1067, %v1005
      %v1069 = vadd.f32 %v1068, %v1006
      %v1070 = vadd.f32 %v1069, %v1007
      %v1071 = vadd.f32 %v1070, %v1008
      %v1072 = vadd.f32 %v1071, %v1009
      %v1073 = vadd.f32 %v1072, %v1010
      %v1074 = vadd.f32 %v1073, %v1011
      %v1075 = vadd.f32 %v1074, %v1012
      %v1076 = vadd.f32 %v1075, %v1013
      %v1077 = vadd.f32 %v1076, %v1014
      %v1078 = vadd.f32 %v1077, %v1015
      %v1079 = vadd.f32 %v1078, %v1016
      %v1080 = vadd.f32 %v1079, %v1017
      %v1081 = vadd.f32 %v1080, %v1018
      %v1082 = vadd.f32 %v1081, %v1019
      %v1083 = vadd.f32 %v1082, %v1020
      %v1084 = vadd.f32 %v1083, %v1021
      %v1085 = vadd.f32 %v1084, %v1022
      %v1086 = vadd.f32 %v1085, %v1023
      %v1087 = vadd.f32 %v1086, %v1024
      %v1088 = vadd.f32 %v1087, %v1025
      %v1089 = vadd.f32 %v1088, %v1026
      %v1090 = vadd.f32 %v1089, %v1027
      %v1091 = vadd.f32 %v1090, %v1028
      %v1092 = vadd.f32 %v1091, %v1029
      %v1093 = vadd.f32 %v1092, %v1030
      %v1094 = vadd.f32 %v1093, %v1031
      %v1095 = vadd.f32 %v1094, %v1032
      %v1096 = vadd.f32 %v1095, %v1033
      %v1097 = vadd.f32 %v1096, %v1034
      %v1098 = vadd.f32 %v1097, %v1035
      %v1099 = vadd.f32 %v1098, %v1036
      %v1100 = vadd.f32 %v1099, %v1037
      %v1101 = vrot.slane %v1100, 4
      %v1102 = vadd.f32 %v1100, %v1101
      %v1103 = vrot.slane %v1102, 2
      %v1104 = vadd.f32 %v1102, %v1103
      %v1105 = vrot.slane %v1104, 1
      %v1106 = vadd.f32 %v1104, %v1105
      %v1107 = vadd.f32 %v973, %v1106
      %1108 = vst [vmem:[#allocation4] sm:$0x1] %v1107
      %p1109 = scmp.eq.s32.totalorder %s16, 1
      // Predicated region
      $region45: #{residual_block_forward.2} parent=39 // pred_check
        %p1110 = pneg %p1109
      $region46: #{residual_block_forward.2} parent=39 // pred_check_branch
        %1112 = sbr.rel (%p1110) target = $region48
      $region47: #{residual_block_forward.2} parent=39 // pred_region
        %v1113 = vld [vmem:[#allocation3] sm:$0x1]
        %v1114 = vmul.f32 %v1113, 0.0009765625
        %v1115 = vld [vmem:[#allocation4] sm:$0x1]
        %v1116 = vmul.f32 %v1115, 0.0009765625
        %v1117 = vmul.f32 %v1114, %v1114
        %v1118 = vsub.f32 %v1116, %v1117
        %v1119 = vmax.f32 %v1118, 0.0
        %v1120 = vadd.f32 %v1119, 1e-05
        %v1121 = vrsqrt.pop %v1120
        %v1122 = vld [vmem:[%s3] sm:$0x1]
        %v1123 = vmul.f32 %v1122, %v1121
        %v1124 = vld [vmem:[%s4] sm:$0x1]
        %v1125 = vmul.f32 %v1114, %v1123
        %v1126 = vsub.f32 %v1124, %v1125
        %v1127 = vld [vmem:[#allocation2] sm:$0xff]
        %v1128 = vld [vmem:[#allocation2 + $0x8] sm:$0xff]
        %v1129 = vld [vmem:[#allocation2 + $0x10] sm:$0xff]
        %v1130 = vld [vmem:[#allocation2 + $0x18] sm:$0xff]
        %v1131 = vld [vmem:[#allocation2 + $0x20] sm:$0xff]
        %v1132 = vld [vmem:[#allocation2 + $0x28] sm:$0xff]
        %v1133 = vld [vmem:[#allocation2 + $0x30] sm:$0xff]
        %v1134 = vld [vmem:[#allocation2 + $0x38] sm:$0xff]
        %v1135 = vld [vmem:[#allocation2 + $0x40] sm:$0xff]
        %v1136 = vld [vmem:[#allocation2 + $0x48] sm:$0xff]
        %v1137 = vld [vmem:[#allocation2 + $0x50] sm:$0xff]
        %v1138 = vld [vmem:[#allocation2 + $0x58] sm:$0xff]
        %v1139 = vld [vmem:[#allocation2 + $0x60] sm:$0xff]
        %v1140 = vld [vmem:[#allocation2 + $0x68] sm:$0xff]
        %v1141 = vld [vmem:[#allocation2 + $0x70] sm:$0xff]
        %v1142 = vld [vmem:[#allocation2 + $0x78] sm:$0xff]
        %v1143 = vld [vmem:[#allocation2 + $0x80] sm:$0xff]
        %v1144 = vld [vmem:[#allocation2 + $0x88] sm:$0xff]
        %v1145 = vld [vmem:[#allocation2 + $0x90] sm:$0xff]
        %v1146 = vld [vmem:[#allocation2 + $0x98] sm:$0xff]
        %v1147 = vld [vmem:[#allocation2 + $0xa0] sm:$0xff]
        %v1148 = vld [vmem:[#allocation2 + $0xa8] sm:$0xff]
        %v1149 = vld [vmem:[#allocation2 + $0xb0] sm:$0xff]
        %v1150 = vld [vmem:[#allocation2 + $0xb8] sm:$0xff]
        %v1151 = vld [vmem:[#allocation2 + $0xc0] sm:$0xff]
        %v1152 = vld [vmem:[#allocation2 + $0xc8] sm:$0xff]
        %v1153 = vld [vmem:[#allocation2 + $0xd0] sm:$0xff]
        %v1154 = vld [vmem:[#allocation2 + $0xd8] sm:$0xff]
        %v1155 = vld [vmem:[#allocation2 + $0xe0] sm:$0xff]
        %v1156 = vld [vmem:[#allocation2 + $0xe8] sm:$0xff]
        %v1157 = vld [vmem:[#allocation2 + $0xf0] sm:$0xff]
        %v1158 = vld [vmem:[#allocation2 + $0xf8] sm:$0xff]
        %v1159 = vld [vmem:[#allocation2 + $0x100] sm:$0xff]
        %v1160 = vld [vmem:[#allocation2 + $0x108] sm:$0xff]
        %v1161 = vld [vmem:[#allocation2 + $0x110] sm:$0xff]
        %v1162 = vld [vmem:[#allocation2 + $0x118] sm:$0xff]
        %v1163 = vld [vmem:[#allocation2 + $0x120] sm:$0xff]
        %v1164 = vld [vmem:[#allocation2 + $0x128] sm:$0xff]
        %v1165 = vld [vmem:[#allocation2 + $0x130] sm:$0xff]
        %v1166 = vld [vmem:[#allocation2 + $0x138] sm:$0xff]
        %v1167 = vld [vmem:[#allocation2 + $0x140] sm:$0xff]
        %v1168 = vld [vmem:[#allocation2 + $0x148] sm:$0xff]
        %v1169 = vld [vmem:[#allocation2 + $0x150] sm:$0xff]
        %v1170 = vld [vmem:[#allocation2 + $0x158] sm:$0xff]
        %v1171 = vld [vmem:[#allocation2 + $0x160] sm:$0xff]
        %v1172 = vld [vmem:[#allocation2 + $0x168] sm:$0xff]
        %v1173 = vld [vmem:[#allocation2 + $0x170] sm:$0xff]
        %v1174 = vld [vmem:[#allocation2 + $0x178] sm:$0xff]
        %v1175 = vld [vmem:[#allocation2 + $0x180] sm:$0xff]
        %v1176 = vld [vmem:[#allocation2 + $0x188] sm:$0xff]
        %v1177 = vld [vmem:[#allocation2 + $0x190] sm:$0xff]
        %v1178 = vld [vmem:[#allocation2 + $0x198] sm:$0xff]
        %v1179 = vld [vmem:[#allocation2 + $0x1a0] sm:$0xff]
        %v1180 = vld [vmem:[#allocation2 + $0x1a8] sm:$0xff]
        %v1181 = vld [vmem:[#allocation2 + $0x1b0] sm:$0xff]
        %v1182 = vld [vmem:[#allocation2 + $0x1b8] sm:$0xff]
        %v1183 = vld [vmem:[#allocation2 + $0x1c0] sm:$0xff]
        %v1184 = vld [vmem:[#allocation2 + $0x1c8] sm:$0xff]
        %v1185 = vld [vmem:[#allocation2 + $0x1d0] sm:$0xff]
        %v1186 = vld [vmem:[#allocation2 + $0x1d8] sm:$0xff]
        %v1187 = vld [vmem:[#allocation2 + $0x1e0] sm:$0xff]
        %v1188 = vld [vmem:[#allocation2 + $0x1e8] sm:$0xff]
        %v1189 = vld [vmem:[#allocation2 + $0x1f0] sm:$0xff]
        %v1190 = vld [vmem:[#allocation2 + $0x1f8] sm:$0xff]
        %v1192 = vlaneseq
        %v1193 = vshrl.u32 %v1192, 7
        %v1194 = vsub.s32 0, %v1193
        %v1195 = vrot.slane %v1123, %v1194
        %v1197 = vmul.f32 %v1127, %v1195
        %v1198 = vmul.f32 %v1128, %v1195
        %v1199 = vmul.f32 %v1129, %v1195
        %v1200 = vmul.f32 %v1130, %v1195
        %v1201 = vmul.f32 %v1131, %v1195
        %v1202 = vmul.f32 %v1132, %v1195
        %v1203 = vmul.f32 %v1133, %v1195
        %v1204 = vmul.f32 %v1134, %v1195
        %v1205 = vmul.f32 %v1135, %v1195
        %v1206 = vmul.f32 %v1136, %v1195
        %v1207 = vmul.f32 %v1137, %v1195
        %v1208 = vmul.f32 %v1138, %v1195
        %v1209 = vmul.f32 %v1139, %v1195
        %v1210 = vmul.f32 %v1140, %v1195
        %v1211 = vmul.f32 %v1141, %v1195
        %v1212 = vmul.f32 %v1142, %v1195
        %v1213 = vmul.f32 %v1143, %v1195
        %v1214 = vmul.f32 %v1144, %v1195
        %v1215 = vmul.f32 %v1145, %v1195
        %v1216 = vmul.f32 %v1146, %v1195
        %v1217 = vmul.f32 %v1147, %v1195
        %v1218 = vmul.f32 %v1148, %v1195
        %v1219 = vmul.f32 %v1149, %v1195
        %v1220 = vmul.f32 %v1150, %v1195
        %v1221 = vmul.f32 %v1151, %v1195
        %v1222 = vmul.f32 %v1152, %v1195
        %v1223 = vmul.f32 %v1153, %v1195
        %v1224 = vmul.f32 %v1154, %v1195
        %v1225 = vmul.f32 %v1155, %v1195
        %v1226 = vmul.f32 %v1156, %v1195
        %v1227 = vmul.f32 %v1157, %v1195
        %v1228 = vmul.f32 %v1158, %v1195
        %v1229 = vmul.f32 %v1159, %v1195
        %v1230 = vmul.f32 %v1160, %v1195
        %v1231 = vmul.f32 %v1161, %v1195
        %v1232 = vmul.f32 %v1162, %v1195
        %v1233 = vmul.f32 %v1163, %v1195
        %v1234 = vmul.f32 %v1164, %v1195
        %v1235 = vmul.f32 %v1165, %v1195
        %v1236 = vmul.f32 %v1166, %v1195
        %v1237 = vmul.f32 %v1167, %v1195
        %v1238 = vmul.f32 %v1168, %v1195
        %v1239 = vmul.f32 %v1169, %v1195
        %v1240 = vmul.f32 %v1170, %v1195
        %v1241 = vmul.f32 %v1171, %v1195
        %v1242 = vmul.f32 %v1172, %v1195
        %v1243 = vmul.f32 %v1173, %v1195
        %v1244 = vmul.f32 %v1174, %v1195
        %v1245 = vmul.f32 %v1175, %v1195
        %v1246 = vmul.f32 %v1176, %v1195
        %v1247 = vmul.f32 %v1177, %v1195
        %v1248 = vmul.f32 %v1178, %v1195
        %v1249 = vmul.f32 %v1179, %v1195
        %v1250 = vmul.f32 %v1180, %v1195
        %v1251 = vmul.f32 %v1181, %v1195
        %v1252 = vmul.f32 %v1182, %v1195
        %v1253 = vmul.f32 %v1183, %v1195
        %v1254 = vmul.f32 %v1184, %v1195
        %v1255 = vmul.f32 %v1185, %v1195
        %v1256 = vmul.f32 %v1186, %v1195
        %v1257 = vmul.f32 %v1187, %v1195
        %v1258 = vmul.f32 %v1188, %v1195
        %v1259 = vmul.f32 %v1189, %v1195
        %v1260 = vmul.f32 %v1190, %v1195
        %v1262 = vlaneseq
        %v1263 = vshrl.u32 %v1262, 7
        %v1264 = vsub.s32 0, %v1263
        %v1265 = vrot.slane %v1126, %v1264
        %v1267 = vadd.f32 %v1197, %v1265
        %v1268 = vadd.f32 %v1198, %v1265
        %v1269 = vadd.f32 %v1199, %v1265
        %v1270 = vadd.f32 %v1200, %v1265
        %v1271 = vadd.f32 %v1201, %v1265
        %v1272 = vadd.f32 %v1202, %v1265
        %v1273 = vadd.f32 %v1203, %v1265
        %v1274 = vadd.f32 %v1204, %v1265
        %v1275 = vadd.f32 %v1205, %v1265
        %v1276 = vadd.f32 %v1206, %v1265
        %v1277 = vadd.f32 %v1207, %v1265
        %v1278 = vadd.f32 %v1208, %v1265
        %v1279 = vadd.f32 %v1209, %v1265
        %v1280 = vadd.f32 %v1210, %v1265
        %v1281 = vadd.f32 %v1211, %v1265
        %v1282 = vadd.f32 %v1212, %v1265
        %v1283 = vadd.f32 %v1213, %v1265
        %v1284 = vadd.f32 %v1214, %v1265
        %v1285 = vadd.f32 %v1215, %v1265
        %v1286 = vadd.f32 %v1216, %v1265
        %v1287 = vadd.f32 %v1217, %v1265
        %v1288 = vadd.f32 %v1218, %v1265
        %v1289 = vadd.f32 %v1219, %v1265
        %v1290 = vadd.f32 %v1220, %v1265
        %v1291 = vadd.f32 %v1221, %v1265
        %v1292 = vadd.f32 %v1222, %v1265
        %v1293 = vadd.f32 %v1223, %v1265
        %v1294 = vadd.f32 %v1224, %v1265
        %v1295 = vadd.f32 %v1225, %v1265
        %v1296 = vadd.f32 %v1226, %v1265
        %v1297 = vadd.f32 %v1227, %v1265
        %v1298 = vadd.f32 %v1228, %v1265
        %v1299 = vadd.f32 %v1229, %v1265
        %v1300 = vadd.f32 %v1230, %v1265
        %v1301 = vadd.f32 %v1231, %v1265
        %v1302 = vadd.f32 %v1232, %v1265
        %v1303 = vadd.f32 %v1233, %v1265
        %v1304 = vadd.f32 %v1234, %v1265
        %v1305 = vadd.f32 %v1235, %v1265
        %v1306 = vadd.f32 %v1236, %v1265
        %v1307 = vadd.f32 %v1237, %v1265
        %v1308 = vadd.f32 %v1238, %v1265
        %v1309 = vadd.f32 %v1239, %v1265
        %v1310 = vadd.f32 %v1240, %v1265
        %v1311 = vadd.f32 %v1241, %v1265
        %v1312 = vadd.f32 %v1242, %v1265
        %v1313 = vadd.f32 %v1243, %v1265
        %v1314 = vadd.f32 %v1244, %v1265
        %v1315 = vadd.f32 %v1245, %v1265
        %v1316 = vadd.f32 %v1246, %v1265
        %v1317 = vadd.f32 %v1247, %v1265
        %v1318 = vadd.f32 %v1248, %v1265
        %v1319 = vadd.f32 %v1249, %v1265
        %v1320 = vadd.f32 %v1250, %v1265
        %v1321 = vadd.f32 %v1251, %v1265
        %v1322 = vadd.f32 %v1252, %v1265
        %v1323 = vadd.f32 %v1253, %v1265
        %v1324 = vadd.f32 %v1254, %v1265
        %v1325 = vadd.f32 %v1255, %v1265
        %v1326 = vadd.f32 %v1256, %v1265
        %v1327 = vadd.f32 %v1257, %v1265
        %v1328 = vadd.f32 %v1258, %v1265
        %v1329 = vadd.f32 %v1259, %v1265
        %v1330 = vadd.f32 %v1260, %v1265
        %v1331 = vmax.f32 %v1267, 0.0
        %v1332 = vmax.f32 %v1268, 0.0
        %v1333 = vmax.f32 %v1269, 0.0
        %v1334 = vmax.f32 %v1270, 0.0
        %v1335 = vmax.f32 %v1271, 0.0
        %v1336 = vmax.f32 %v1272, 0.0
        %v1337 = vmax.f32 %v1273, 0.0
        %v1338 = vmax.f32 %v1274, 0.0
        %v1339 = vmax.f32 %v1275, 0.0
        %v1340 = vmax.f32 %v1276, 0.0
        %v1341 = vmax.f32 %v1277, 0.0
        %v1342 = vmax.f32 %v1278, 0.0
        %v1343 = vmax.f32 %v1279, 0.0
        %v1344 = vmax.f32 %v1280, 0.0
        %v1345 = vmax.f32 %v1281, 0.0
        %v1346 = vmax.f32 %v1282, 0.0
        %v1347 = vmax.f32 %v1283, 0.0
        %v1348 = vmax.f32 %v1284, 0.0
        %v1349 = vmax.f32 %v1285, 0.0
        %v1350 = vmax.f32 %v1286, 0.0
        %v1351 = vmax.f32 %v1287, 0.0
        %v1352 = vmax.f32 %v1288, 0.0
        %v1353 = vmax.f32 %v1289, 0.0
        %v1354 = vmax.f32 %v1290, 0.0
        %v1355 = vmax.f32 %v1291, 0.0
        %v1356 = vmax.f32 %v1292, 0.0
        %v1357 = vmax.f32 %v1293, 0.0
        %v1358 = vmax.f32 %v1294, 0.0
        %v1359 = vmax.f32 %v1295, 0.0
        %v1360 = vmax.f32 %v1296, 0.0
        %v1361 = vmax.f32 %v1297, 0.0
        %v1362 = vmax.f32 %v1298, 0.0
        %v1363 = vmax.f32 %v1299, 0.0
        %v1364 = vmax.f32 %v1300, 0.0
        %v1365 = vmax.f32 %v1301, 0.0
        %v1366 = vmax.f32 %v1302, 0.0
        %v1367 = vmax.f32 %v1303, 0.0
        %v1368 = vmax.f32 %v1304, 0.0
        %v1369 = vmax.f32 %v1305, 0.0
        %v1370 = vmax.f32 %v1306, 0.0
        %v1371 = vmax.f32 %v1307, 0.0
        %v1372 = vmax.f32 %v1308, 0.0
        %v1373 = vmax.f32 %v1309, 0.0
        %v1374 = vmax.f32 %v1310, 0.0
        %v1375 = vmax.f32 %v1311, 0.0
        %v1376 = vmax.f32 %v1312, 0.0
        %v1377 = vmax.f32 %v1313, 0.0
        %v1378 = vmax.f32 %v1314, 0.0
        %v1379 = vmax.f32 %v1315, 0.0
        %v1380 = vmax.f32 %v1316, 0.0
        %v1381 = vmax.f32 %v1317, 0.0
        %v1382 = vmax.f32 %v1318, 0.0
        %v1383 = vmax.f32 %v1319, 0.0
        %v1384 = vmax.f32 %v1320, 0.0
        %v1385 = vmax.f32 %v1321, 0.0
        %v1386 = vmax.f32 %v1322, 0.0
        %v1387 = vmax.f32 %v1323, 0.0
        %v1388 = vmax.f32 %v1324, 0.0
        %v1389 = vmax.f32 %v1325, 0.0
        %v1390 = vmax.f32 %v1326, 0.0
        %v1391 = vmax.f32 %v1327, 0.0
        %v1392 = vmax.f32 %v1328, 0.0
        %v1393 = vmax.f32 %v1329, 0.0
        %v1394 = vmax.f32 %v1330, 0.0
        %1395 = vxpose.xlu0.b32.start [1/16] %v1331, 128
        %1396 = vxpose.xlu0.b32.cont [2/16] %v1332, 128
        %1397 = vxpose.xlu0.b32.cont [3/16] %v1333, 128
        %1398 = vxpose.xlu0.b32.cont [4/16] %v1334, 128
        %1399 = vxpose.xlu0.b32.cont [5/16] %v1335, 128
        %1400 = vxpose.xlu0.b32.cont [6/16] %v1336, 128
        %1401 = vxpose.xlu0.b32.cont [7/16] %v1337, 128
        %1402 = vxpose.xlu0.b32.cont [8/16] %v1338, 128
        %1403 = vxpose.xlu0.b32.cont [9/16] %v1339, 128
        %1404 = vxpose.xlu0.b32.cont [10/16] %v1340, 128
        %1405 = vxpose.xlu0.b32.cont [11/16] %v1341, 128
        %1406 = vxpose.xlu0.b32.cont [12/16] %v1342, 128
        %1407 = vxpose.xlu0.b32.cont [13/16] %v1343, 128
        %1408 = vxpose.xlu0.b32.cont [14/16] %v1344, 128
        %1409 = vxpose.xlu0.b32.cont [15/16] %v1345, 128
        %1410 = vxpose.xlu0.b32.end [16/16] %v1346, 128
        %v1411 = vpop.trf.xlu0
        %v1412 = vpop.trf.xlu0
        %v1413 = vpop.trf.xlu0
        %v1414 = vpop.trf.xlu0
        %v1415 = vpop.trf.xlu0
        %v1416 = vpop.trf.xlu0
        %v1417 = vpop.trf.xlu0
        %v1418 = vpop.trf.xlu0
        %v1419 = vpop.trf.xlu0
        %v1420 = vpop.trf.xlu0
        %v1421 = vpop.trf.xlu0
        %v1422 = vpop.trf.xlu0
        %v1423 = vpop.trf.xlu0
        %v1424 = vpop.trf.xlu0
        %v1425 = vpop.trf.xlu0
        %v1426 = vpop.trf.xlu0
        %1427 = vxpose.xlu0.b32.start [1/16] %v1347, 128
        %1428 = vxpose.xlu0.b32.cont [2/16] %v1348, 128
        %1429 = vxpose.xlu0.b32.cont [3/16] %v1349, 128
        %1430 = vxpose.xlu0.b32.cont [4/16] %v1350, 128
        %1431 = vxpose.xlu0.b32.cont [5/16] %v1351, 128
        %1432 = vxpose.xlu0.b32.cont [6/16] %v1352, 128
        %1433 = vxpose.xlu0.b32.cont [7/16] %v1353, 128
        %1434 = vxpose.xlu0.b32.cont [8/16] %v1354, 128
        %1435 = vxpose.xlu0.b32.cont [9/16] %v1355, 128
        %1436 = vxpose.xlu0.b32.cont [10/16] %v1356, 128
        %1437 = vxpose.xlu0.b32.cont [11/16] %v1357, 128
        %1438 = vxpose.xlu0.b32.cont [12/16] %v1358, 128
        %1439 = vxpose.xlu0.b32.cont [13/16] %v1359, 128
        %1440 = vxpose.xlu0.b32.cont [14/16] %v1360, 128
        %1441 = vxpose.xlu0.b32.cont [15/16] %v1361, 128
        %1442 = vxpose.xlu0.b32.end [16/16] %v1362, 128
        %v1443 = vpop.trf.xlu0
        %v1444 = vpop.trf.xlu0
        %v1445 = vpop.trf.xlu0
        %v1446 = vpop.trf.xlu0
        %v1447 = vpop.trf.xlu0
        %v1448 = vpop.trf.xlu0
        %v1449 = vpop.trf.xlu0
        %v1450 = vpop.trf.xlu0
        %v1451 = vpop.trf.xlu0
        %v1452 = vpop.trf.xlu0
        %v1453 = vpop.trf.xlu0
        %v1454 = vpop.trf.xlu0
        %v1455 = vpop.trf.xlu0
        %v1456 = vpop.trf.xlu0
        %v1457 = vpop.trf.xlu0
        %v1458 = vpop.trf.xlu0
        %1459 = vxpose.xlu0.b32.start [1/16] %v1363, 128
        %1460 = vxpose.xlu0.b32.cont [2/16] %v1364, 128
        %1461 = vxpose.xlu0.b32.cont [3/16] %v1365, 128
        %1462 = vxpose.xlu0.b32.cont [4/16] %v1366, 128
        %1463 = vxpose.xlu0.b32.cont [5/16] %v1367, 128
        %1464 = vxpose.xlu0.b32.cont [6/16] %v1368, 128
        %1465 = vxpose.xlu0.b32.cont [7/16] %v1369, 128
        %1466 = vxpose.xlu0.b32.cont [8/16] %v1370, 128
        %1467 = vxpose.xlu0.b32.cont [9/16] %v1371, 128
        %1468 = vxpose.xlu0.b32.cont [10/16] %v1372, 128
        %1469 = vxpose.xlu0.b32.cont [11/16] %v1373, 128
        %1470 = vxpose.xlu0.b32.cont [12/16] %v1374, 128
        %1471 = vxpose.xlu0.b32.cont [13/16] %v1375, 128
        %1472 = vxpose.xlu0.b32.cont [14/16] %v1376, 128
        %1473 = vxpose.xlu0.b32.cont [15/16] %v1377, 128
        %1474 = vxpose.xlu0.b32.end [16/16] %v1378, 128
        %v1475 = vpop.trf.xlu0
        %v1476 = vpop.trf.xlu0
        %v1477 = vpop.trf.xlu0
        %v1478 = vpop.trf.xlu0
        %v1479 = vpop.trf.xlu0
        %v1480 = vpop.trf.xlu0
        %v1481 = vpop.trf.xlu0
        %v1482 = vpop.trf.xlu0
        %v1483 = vpop.trf.xlu0
        %v1484 = vpop.trf.xlu0
        %v1485 = vpop.trf.xlu0
        %v1486 = vpop.trf.xlu0
        %v1487 = vpop.trf.xlu0
        %v1488 = vpop.trf.xlu0
        %v1489 = vpop.trf.xlu0
        %v1490 = vpop.trf.xlu0
        %1491 = vxpose.xlu0.b32.start [1/16] %v1379, 128
        %1492 = vxpose.xlu0.b32.cont [2/16] %v1380, 128
        %1493 = vxpose.xlu0.b32.cont [3/16] %v1381, 128
        %1494 = vxpose.xlu0.b32.cont [4/16] %v1382, 128
        %1495 = vxpose.xlu0.b32.cont [5/16] %v1383, 128
        %1496 = vxpose.xlu0.b32.cont [6/16] %v1384, 128
        %1497 = vxpose.xlu0.b32.cont [7/16] %v1385, 128
        %1498 = vxpose.xlu0.b32.cont [8/16] %v1386, 128
        %1499 = vxpose.xlu0.b32.cont [9/16] %v1387, 128
        %1500 = vxpose.xlu0.b32.cont [10/16] %v1388, 128
        %1501 = vxpose.xlu0.b32.cont [11/16] %v1389, 128
        %1502 = vxpose.xlu0.b32.cont [12/16] %v1390, 128
        %1503 = vxpose.xlu0.b32.cont [13/16] %v1391, 128
        %1504 = vxpose.xlu0.b32.cont [14/16] %v1392, 128
        %1505 = vxpose.xlu0.b32.cont [15/16] %v1393, 128
        %1506 = vxpose.xlu0.b32.end [16/16] %v1394, 128
        %v1507 = vpop.trf.xlu0
        %v1508 = vpop.trf.xlu0
        %v1509 = vpop.trf.xlu0
        %v1510 = vpop.trf.xlu0
        %v1511 = vpop.trf.xlu0
        %v1512 = vpop.trf.xlu0
        %v1513 = vpop.trf.xlu0
        %v1514 = vpop.trf.xlu0
        %v1515 = vpop.trf.xlu0
        %v1516 = vpop.trf.xlu0
        %v1517 = vpop.trf.xlu0
        %v1518 = vpop.trf.xlu0
        %v1519 = vpop.trf.xlu0
        %v1520 = vpop.trf.xlu0
        %v1521 = vpop.trf.xlu0
        %v1522 = vpop.trf.xlu0
        %1523 = vst [vmem:[%s5] sm:$0xff] %v1411
        %1524 = vst [vmem:[%s5 + $0x8] sm:$0xff] %v1443
        %1525 = vst [vmem:[%s5 + $0x10] sm:$0xff] %v1475
        %1526 = vst [vmem:[%s5 + $0x18] sm:$0xff] %v1507
        %s1527 = scalar_lea.vmem [#allocation2], 512
        %v1528 = vld [vmem:[%s1527] sm:$0xff]
        %v1529 = vld [vmem:[%s1527 + $0x8] sm:$0xff]
        %v1530 = vld [vmem:[%s1527 + $0x10] sm:$0xff]
        %v1531 = vld [vmem:[%s1527 + $0x18] sm:$0xff]
        %v1532 = vld [vmem:[%s1527 + $0x20] sm:$0xff]
        %v1533 = vld [vmem:[%s1527 + $0x28] sm:$0xff]
        %v1534 = vld [vmem:[%s1527 + $0x30] sm:$0xff]
        %v1535 = vld [vmem:[%s1527 + $0x38] sm:$0xff]
        %v1536 = vld [vmem:[%s1527 + $0x40] sm:$0xff]
        %v1537 = vld [vmem:[%s1527 + $0x48] sm:$0xff]
        %v1538 = vld [vmem:[%s1527 + $0x50] sm:$0xff]
        %v1539 = vld [vmem:[%s1527 + $0x58] sm:$0xff]
        %v1540 = vld [vmem:[%s1527 + $0x60] sm:$0xff]
        %v1541 = vld [vmem:[%s1527 + $0x68] sm:$0xff]
        %v1542 = vld [vmem:[%s1527 + $0x70] sm:$0xff]
        %v1543 = vld [vmem:[%s1527 + $0x78] sm:$0xff]
        %v1544 = vld [vmem:[%s1527 + $0x80] sm:$0xff]
        %v1545 = vld [vmem:[%s1527 + $0x88] sm:$0xff]
        %v1546 = vld [vmem:[%s1527 + $0x90] sm:$0xff]
        %v1547 = vld [vmem:[%s1527 + $0x98] sm:$0xff]
        %v1548 = vld [vmem:[%s1527 + $0xa0] sm:$0xff]
        %v1549 = vld [vmem:[%s1527 + $0xa8] sm:$0xff]
        %v1550 = vld [vmem:[%s1527 + $0xb0] sm:$0xff]
        %v1551 = vld [vmem:[%s1527 + $0xb8] sm:$0xff]
        %v1552 = vld [vmem:[%s1527 + $0xc0] sm:$0xff]
        %v1553 = vld [vmem:[%s1527 + $0xc8] sm:$0xff]
        %v1554 = vld [vmem:[%s1527 + $0xd0] sm:$0xff]
        %v1555 = vld [vmem:[%s1527 + $0xd8] sm:$0xff]
        %v1556 = vld [vmem:[%s1527 + $0xe0] sm:$0xff]
        %v1557 = vld [vmem:[%s1527 + $0xe8] sm:$0xff]
        %v1558 = vld [vmem:[%s1527 + $0xf0] sm:$0xff]
        %v1559 = vld [vmem:[%s1527 + $0xf8] sm:$0xff]
        %v1560 = vld [vmem:[%s1527 + $0x100] sm:$0xff]
        %v1561 = vld [vmem:[%s1527 + $0x108] sm:$0xff]
        %v1562 = vld [vmem:[%s1527 + $0x110] sm:$0xff]
        %v1563 = vld [vmem:[%s1527 + $0x118] sm:$0xff]
        %v1564 = vld [vmem:[%s1527 + $0x120] sm:$0xff]
        %v1565 = vld [vmem:[%s1527 + $0x128] sm:$0xff]
        %v1566 = vld [vmem:[%s1527 + $0x130] sm:$0xff]
        %v1567 = vld [vmem:[%s1527 + $0x138] sm:$0xff]
        %v1568 = vld [vmem:[%s1527 + $0x140] sm:$0xff]
        %v1569 = vld [vmem:[%s1527 + $0x148] sm:$0xff]
        %v1570 = vld [vmem:[%s1527 + $0x150] sm:$0xff]
        %v1571 = vld [vmem:[%s1527 + $0x158] sm:$0xff]
        %v1572 = vld [vmem:[%s1527 + $0x160] sm:$0xff]
        %v1573 = vld [vmem:[%s1527 + $0x168] sm:$0xff]
        %v1574 = vld [vmem:[%s1527 + $0x170] sm:$0xff]
        %v1575 = vld [vmem:[%s1527 + $0x178] sm:$0xff]
        %v1576 = vld [vmem:[%s1527 + $0x180] sm:$0xff]
        %v1577 = vld [vmem:[%s1527 + $0x188] sm:$0xff]
        %v1578 = vld [vmem:[%s1527 + $0x190] sm:$0xff]
        %v1579 = vld [vmem:[%s1527 + $0x198] sm:$0xff]
        %v1580 = vld [vmem:[%s1527 + $0x1a0] sm:$0xff]
        %v1581 = vld [vmem:[%s1527 + $0x1a8] sm:$0xff]
        %v1582 = vld [vmem:[%s1527 + $0x1b0] sm:$0xff]
        %v1583 = vld [vmem:[%s1527 + $0x1b8] sm:$0xff]
        %v1584 = vld [vmem:[%s1527 + $0x1c0] sm:$0xff]
        %v1585 = vld [vmem:[%s1527 + $0x1c8] sm:$0xff]
        %v1586 = vld [vmem:[%s1527 + $0x1d0] sm:$0xff]
        %v1587 = vld [vmem:[%s1527 + $0x1d8] sm:$0xff]
        %v1588 = vld [vmem:[%s1527 + $0x1e0] sm:$0xff]
        %v1589 = vld [vmem:[%s1527 + $0x1e8] sm:$0xff]
        %v1590 = vld [vmem:[%s1527 + $0x1f0] sm:$0xff]
        %v1591 = vld [vmem:[%s1527 + $0x1f8] sm:$0xff]
        %v1592 = vmul.f32 %v1528, %v1195
        %v1593 = vmul.f32 %v1529, %v1195
        %v1594 = vmul.f32 %v1530, %v1195
        %v1595 = vmul.f32 %v1531, %v1195
        %v1596 = vmul.f32 %v1532, %v1195
        %v1597 = vmul.f32 %v1533, %v1195
        %v1598 = vmul.f32 %v1534, %v1195
        %v1599 = vmul.f32 %v1535, %v1195
        %v1600 = vmul.f32 %v1536, %v1195
        %v1601 = vmul.f32 %v1537, %v1195
        %v1602 = vmul.f32 %v1538, %v1195
        %v1603 = vmul.f32 %v1539, %v1195
        %v1604 = vmul.f32 %v1540, %v1195
        %v1605 = vmul.f32 %v1541, %v1195
        %v1606 = vmul.f32 %v1542, %v1195
        %v1607 = vmul.f32 %v1543, %v1195
        %v1608 = vmul.f32 %v1544, %v1195
        %v1609 = vmul.f32 %v1545, %v1195
        %v1610 = vmul.f32 %v1546, %v1195
        %v1611 = vmul.f32 %v1547, %v1195
        %v1612 = vmul.f32 %v1548, %v1195
        %v1613 = vmul.f32 %v1549, %v1195
        %v1614 = vmul.f32 %v1550, %v1195
        %v1615 = vmul.f32 %v1551, %v1195
        %v1616 = vmul.f32 %v1552, %v1195
        %v1617 = vmul.f32 %v1553, %v1195
        %v1618 = vmul.f32 %v1554, %v1195
        %v1619 = vmul.f32 %v1555, %v1195
        %v1620 = vmul.f32 %v1556, %v1195
        %v1621 = vmul.f32 %v1557, %v1195
        %v1622 = vmul.f32 %v1558, %v1195
        %v1623 = vmul.f32 %v1559, %v1195
        %v1624 = vmul.f32 %v1560, %v1195
        %v1625 = vmul.f32 %v1561, %v1195
        %v1626 = vmul.f32 %v1562, %v1195
        %v1627 = vmul.f32 %v1563, %v1195
        %v1628 = vmul.f32 %v1564, %v1195
        %v1629 = vmul.f32 %v1565, %v1195
        %v1630 = vmul.f32 %v1566, %v1195
        %v1631 = vmul.f32 %v1567, %v1195
        %v1632 = vmul.f32 %v1568, %v1195
        %v1633 = vmul.f32 %v1569, %v1195
        %v1634 = vmul.f32 %v1570, %v1195
        %v1635 = vmul.f32 %v1571, %v1195
        %v1636 = vmul.f32 %v1572, %v1195
        %v1637 = vmul.f32 %v1573, %v1195
        %v1638 = vmul.f32 %v1574, %v1195
        %v1639 = vmul.f32 %v1575, %v1195
        %v1640 = vmul.f32 %v1576, %v1195
        %v1641 = vmul.f32 %v1577, %v1195
        %v1642 = vmul.f32 %v1578, %v1195
        %v1643 = vmul.f32 %v1579, %v1195
        %v1644 = vmul.f32 %v1580, %v1195
        %v1645 = vmul.f32 %v1581, %v1195
        %v1646 = vmul.f32 %v1582, %v1195
        %v1647 = vmul.f32 %v1583, %v1195
        %v1648 = vmul.f32 %v1584, %v1195
        %v1649 = vmul.f32 %v1585, %v1195
        %v1650 = vmul.f32 %v1586, %v1195
        %v1651 = vmul.f32 %v1587, %v1195
        %v1652 = vmul.f32 %v1588, %v1195
        %v1653 = vmul.f32 %v1589, %v1195
        %v1654 = vmul.f32 %v1590, %v1195
        %v1655 = vmul.f32 %v1591, %v1195
        %v1656 = vadd.f32 %v1592, %v1265
        %v1657 = vadd.f32 %v1593, %v1265
        %v1658 = vadd.f32 %v1594, %v1265
        %v1659 = vadd.f32 %v1595, %v1265
        %v1660 = vadd.f32 %v1596, %v1265
        %v1661 = vadd.f32 %v1597, %v1265
        %v1662 = vadd.f32 %v1598, %v1265
        %v1663 = vadd.f32 %v1599, %v1265
        %v1664 = vadd.f32 %v1600, %v1265
        %v1665 = vadd.f32 %v1601, %v1265
        %v1666 = vadd.f32 %v1602, %v1265
        %v1667 = vadd.f32 %v1603, %v1265
        %v1668 = vadd.f32 %v1604, %v1265
        %v1669 = vadd.f32 %v1605, %v1265
        %v1670 = vadd.f32 %v1606, %v1265
        %v1671 = vadd.f32 %v1607, %v1265
        %v1672 = vadd.f32 %v1608, %v1265
        %v1673 = vadd.f32 %v1609, %v1265
        %v1674 = vadd.f32 %v1610, %v1265
        %v1675 = vadd.f32 %v1611, %v1265
        %v1676 = vadd.f32 %v1612, %v1265
        %v1677 = vadd.f32 %v1613, %v1265
        %v1678 = vadd.f32 %v1614, %v1265
        %v1679 = vadd.f32 %v1615, %v1265
        %v1680 = vadd.f32 %v1616, %v1265
        %v1681 = vadd.f32 %v1617, %v1265
        %v1682 = vadd.f32 %v1618, %v1265
        %v1683 = vadd.f32 %v1619, %v1265
        %v1684 = vadd.f32 %v1620, %v1265
        %v1685 = vadd.f32 %v1621, %v1265
        %v1686 = vadd.f32 %v1622, %v1265
        %v1687 = vadd.f32 %v1623, %v1265
        %v1688 = vadd.f32 %v1624, %v1265
        %v1689 = vadd.f32 %v1625, %v1265
        %v1690 = vadd.f32 %v1626, %v1265
        %v1691 = vadd.f32 %v1627, %v1265
        %v1692 = vadd.f32 %v1628, %v1265
        %v1693 = vadd.f32 %v1629, %v1265
        %v1694 = vadd.f32 %v1630, %v1265
        %v1695 = vadd.f32 %v1631, %v1265
        %v1696 = vadd.f32 %v1632, %v1265
        %v1697 = vadd.f32 %v1633, %v1265
        %v1698 = vadd.f32 %v1634, %v1265
        %v1699 = vadd.f32 %v1635, %v1265
        %v1700 = vadd.f32 %v1636, %v1265
        %v1701 = vadd.f32 %v1637, %v1265
        %v1702 = vadd.f32 %v1638, %v1265
        %v1703 = vadd.f32 %v1639, %v1265
        %v1704 = vadd.f32 %v1640, %v1265
        %v1705 = vadd.f32 %v1641, %v1265
        %v1706 = vadd.f32 %v1642, %v1265
        %v1707 = vadd.f32 %v1643, %v1265
        %v1708 = vadd.f32 %v1644, %v1265
        %v1709 = vadd.f32 %v1645, %v1265
        %v1710 = vadd.f32 %v1646, %v1265
        %v1711 = vadd.f32 %v1647, %v1265
        %v1712 = vadd.f32 %v1648, %v1265
        %v1713 = vadd.f32 %v1649, %v1265
        %v1714 = vadd.f32 %v1650, %v1265
        %v1715 = vadd.f32 %v1651, %v1265
        %v1716 = vadd.f32 %v1652, %v1265
        %v1717 = vadd.f32 %v1653, %v1265
        %v1718 = vadd.f32 %v1654, %v1265
        %v1719 = vadd.f32 %v1655, %v1265
        %v1720 = vmax.f32 %v1656, 0.0
        %v1721 = vmax.f32 %v1657, 0.0
        %v1722 = vmax.f32 %v1658, 0.0
        %v1723 = vmax.f32 %v1659, 0.0
        %v1724 = vmax.f32 %v1660, 0.0
        %v1725 = vmax.f32 %v1661, 0.0
        %v1726 = vmax.f32 %v1662, 0.0
        %v1727 = vmax.f32 %v1663, 0.0
        %v1728 = vmax.f32 %v1664, 0.0
        %v1729 = vmax.f32 %v1665, 0.0
        %v1730 = vmax.f32 %v1666, 0.0
        %v1731 = vmax.f32 %v1667, 0.0
        %v1732 = vmax.f32 %v1668, 0.0
        %v1733 = vmax.f32 %v1669, 0.0
        %v1734 = vmax.f32 %v1670, 0.0
        %v1735 = vmax.f32 %v1671, 0.0
        %v1736 = vmax.f32 %v1672, 0.0
        %v1737 = vmax.f32 %v1673, 0.0
        %v1738 = vmax.f32 %v1674, 0.0
        %v1739 = vmax.f32 %v1675, 0.0
        %v1740 = vmax.f32 %v1676, 0.0
        %v1741 = vmax.f32 %v1677, 0.0
        %v1742 = vmax.f32 %v1678, 0.0
        %v1743 = vmax.f32 %v1679, 0.0
        %v1744 = vmax.f32 %v1680, 0.0
        %v1745 = vmax.f32 %v1681, 0.0
        %v1746 = vmax.f32 %v1682, 0.0
        %v1747 = vmax.f32 %v1683, 0.0
        %v1748 = vmax.f32 %v1684, 0.0
        %v1749 = vmax.f32 %v1685, 0.0
        %v1750 = vmax.f32 %v1686, 0.0
        %v1751 = vmax.f32 %v1687, 0.0
        %v1752 = vmax.f32 %v1688, 0.0
        %v1753 = vmax.f32 %v1689, 0.0
        %v1754 = vmax.f32 %v1690, 0.0
        %v1755 = vmax.f32 %v1691, 0.0
        %v1756 = vmax.f32 %v1692, 0.0
        %v1757 = vmax.f32 %v1693, 0.0
        %v1758 = vmax.f32 %v1694, 0.0
        %v1759 = vmax.f32 %v1695, 0.0
        %v1760 = vmax.f32 %v1696, 0.0
        %v1761 = vmax.f32 %v1697, 0.0
        %v1762 = vmax.f32 %v1698, 0.0
        %v1763 = vmax.f32 %v1699, 0.0
        %v1764 = vmax.f32 %v1700, 0.0
        %v1765 = vmax.f32 %v1701, 0.0
        %v1766 = vmax.f32 %v1702, 0.0
        %v1767 = vmax.f32 %v1703, 0.0
        %v1768 = vmax.f32 %v1704, 0.0
        %v1769 = vmax.f32 %v1705, 0.0
        %v1770 = vmax.f32 %v1706, 0.0
        %v1771 = vmax.f32 %v1707, 0.0
        %v1772 = vmax.f32 %v1708, 0.0
        %v1773 = vmax.f32 %v1709, 0.0
        %v1774 = vmax.f32 %v1710, 0.0
        %v1775 = vmax.f32 %v1711, 0.0
        %v1776 = vmax.f32 %v1712, 0.0
        %v1777 = vmax.f32 %v1713, 0.0
        %v1778 = vmax.f32 %v1714, 0.0
        %v1779 = vmax.f32 %v1715, 0.0
        %v1780 = vmax.f32 %v1716, 0.0
        %v1781 = vmax.f32 %v1717, 0.0
        %v1782 = vmax.f32 %v1718, 0.0
        %v1783 = vmax.f32 %v1719, 0.0
        %1784 = vxpose.xlu0.b32.start [1/16] %v1720, 128
        %1785 = vxpose.xlu0.b32.cont [2/16] %v1721, 128
        %1786 = vxpose.xlu0.b32.cont [3/16] %v1722, 128
        %1787 = vxpose.xlu0.b32.cont [4/16] %v1723, 128
        %1788 = vxpose.xlu0.b32.cont [5/16] %v1724, 128
        %1789 = vxpose.xlu0.b32.cont [6/16] %v1725, 128
        %1790 = vxpose.xlu0.b32.cont [7/16] %v1726, 128
        %1791 = vxpose.xlu0.b32.cont [8/16] %v1727, 128
        %1792 = vxpose.xlu0.b32.cont [9/16] %v1728, 128
        %1793 = vxpose.xlu0.b32.cont [10/16] %v1729, 128
        %1794 = vxpose.xlu0.b32.cont [11/16] %v1730, 128
        %1795 = vxpose.xlu0.b32.cont [12/16] %v1731, 128
        %1796 = vxpose.xlu0.b32.cont [13/16] %v1732, 128
        %1797 = vxpose.xlu0.b32.cont [14/16] %v1733, 128
        %1798 = vxpose.xlu0.b32.cont [15/16] %v1734, 128
        %1799 = vxpose.xlu0.b32.end [16/16] %v1735, 128
        %v1800 = vpop.trf.xlu0
        %v1801 = vpop.trf.xlu0
        %v1802 = vpop.trf.xlu0
        %v1803 = vpop.trf.xlu0
        %v1804 = vpop.trf.xlu0
        %v1805 = vpop.trf.xlu0
        %v1806 = vpop.trf.xlu0
        %v1807 = vpop.trf.xlu0
        %v1808 = vpop.trf.xlu0
        %v1809 = vpop.trf.xlu0
        %v1810 = vpop.trf.xlu0
        %v1811 = vpop.trf.xlu0
        %v1812 = vpop.trf.xlu0
        %v1813 = vpop.trf.xlu0
        %v1814 = vpop.trf.xlu0
        %v1815 = vpop.trf.xlu0
        %1816 = vxpose.xlu0.b32.start [1/16] %v1736, 128
        %1817 = vxpose.xlu0.b32.cont [2/16] %v1737, 128
        %1818 = vxpose.xlu0.b32.cont [3/16] %v1738, 128
        %1819 = vxpose.xlu0.b32.cont [4/16] %v1739, 128
        %1820 = vxpose.xlu0.b32.cont [5/16] %v1740, 128
        %1821 = vxpose.xlu0.b32.cont [6/16] %v1741, 128
        %1822 = vxpose.xlu0.b32.cont [7/16] %v1742, 128
        %1823 = vxpose.xlu0.b32.cont [8/16] %v1743, 128
        %1824 = vxpose.xlu0.b32.cont [9/16] %v1744, 128
        %1825 = vxpose.xlu0.b32.cont [10/16] %v1745, 128
        %1826 = vxpose.xlu0.b32.cont [11/16] %v1746, 128
        %1827 = vxpose.xlu0.b32.cont [12/16] %v1747, 128
        %1828 = vxpose.xlu0.b32.cont [13/16] %v1748, 128
        %1829 = vxpose.xlu0.b32.cont [14/16] %v1749, 128
        %1830 = vxpose.xlu0.b32.cont [15/16] %v1750, 128
        %1831 = vxpose.xlu0.b32.end [16/16] %v1751, 128
        %v1832 = vpop.trf.xlu0
        %v1833 = vpop.trf.xlu0
        %v1834 = vpop.trf.xlu0
        %v1835 = vpop.trf.xlu0
        %v1836 = vpop.trf.xlu0
        %v1837 = vpop.trf.xlu0
        %v1838 = vpop.trf.xlu0
        %v1839 = vpop.trf.xlu0
        %v1840 = vpop.trf.xlu0
        %v1841 = vpop.trf.xlu0
        %v1842 = vpop.trf.xlu0
        %v1843 = vpop.trf.xlu0
        %v1844 = vpop.trf.xlu0
        %v1845 = vpop.trf.xlu0
        %v1846 = vpop.trf.xlu0
        %v1847 = vpop.trf.xlu0
        %1848 = vxpose.xlu0.b32.start [1/16] %v1752, 128
        %1849 = vxpose.xlu0.b32.cont [2/16] %v1753, 128
        %1850 = vxpose.xlu0.b32.cont [3/16] %v1754, 128
        %1851 = vxpose.xlu0.b32.cont [4/16] %v1755, 128
        %1852 = vxpose.xlu0.b32.cont [5/16] %v1756, 128
        %1853 = vxpose.xlu0.b32.cont [6/16] %v1757, 128
        %1854 = vxpose.xlu0.b32.cont [7/16] %v1758, 128
        %1855 = vxpose.xlu0.b32.cont [8/16] %v1759, 128
        %1856 = vxpose.xlu0.b32.cont [9/16] %v1760, 128
        %1857 = vxpose.xlu0.b32.cont [10/16] %v1761, 128
        %1858 = vxpose.xlu0.b32.cont [11/16] %v1762, 128
        %1859 = vxpose.xlu0.b32.cont [12/16] %v1763, 128
        %1860 = vxpose.xlu0.b32.cont [13/16] %v1764, 128
        %1861 = vxpose.xlu0.b32.cont [14/16] %v1765, 128
        %1862 = vxpose.xlu0.b32.cont [15/16] %v1766, 128
        %1863 = vxpose.xlu0.b32.end [16/16] %v1767, 128
        %v1864 = vpop.trf.xlu0
        %v1865 = vpop.trf.xlu0
        %v1866 = vpop.trf.xlu0
        %v1867 = vpop.trf.xlu0
        %v1868 = vpop.trf.xlu0
        %v1869 = vpop.trf.xlu0
        %v1870 = vpop.trf.xlu0
        %v1871 = vpop.trf.xlu0
        %v1872 = vpop.trf.xlu0
        %v1873 = vpop.trf.xlu0
        %v1874 = vpop.trf.xlu0
        %v1875 = vpop.trf.xlu0
        %v1876 = vpop.trf.xlu0
        %v1877 = vpop.trf.xlu0
        %v1878 = vpop.trf.xlu0
        %v1879 = vpop.trf.xlu0
        %1880 = vxpose.xlu0.b32.start [1/16] %v1768, 128
        %1881 = vxpose.xlu0.b32.cont [2/16] %v1769, 128
        %1882 = vxpose.xlu0.b32.cont [3/16] %v1770, 128
        %1883 = vxpose.xlu0.b32.cont [4/16] %v1771, 128
        %1884 = vxpose.xlu0.b32.cont [5/16] %v1772, 128
        %1885 = vxpose.xlu0.b32.cont [6/16] %v1773, 128
        %1886 = vxpose.xlu0.b32.cont [7/16] %v1774, 128
        %1887 = vxpose.xlu0.b32.cont [8/16] %v1775, 128
        %1888 = vxpose.xlu0.b32.cont [9/16] %v1776, 128
        %1889 = vxpose.xlu0.b32.cont [10/16] %v1777, 128
        %1890 = vxpose.xlu0.b32.cont [11/16] %v1778, 128
        %1891 = vxpose.xlu0.b32.cont [12/16] %v1779, 128
        %1892 = vxpose.xlu0.b32.cont [13/16] %v1780, 128
        %1893 = vxpose.xlu0.b32.cont [14/16] %v1781, 128
        %1894 = vxpose.xlu0.b32.cont [15/16] %v1782, 128
        %1895 = vxpose.xlu0.b32.end [16/16] %v1783, 128
        %v1896 = vpop.trf.xlu0
        %v1897 = vpop.trf.xlu0
        %v1898 = vpop.trf.xlu0
        %v1899 = vpop.trf.xlu0
        %v1900 = vpop.trf.xlu0
        %v1901 = vpop.trf.xlu0
        %v1902 = vpop.trf.xlu0
        %v1903 = vpop.trf.xlu0
        %v1904 = vpop.trf.xlu0
        %v1905 = vpop.trf.xlu0
        %v1906 = vpop.trf.xlu0
        %v1907 = vpop.trf.xlu0
        %v1908 = vpop.trf.xlu0
        %v1909 = vpop.trf.xlu0
        %v1910 = vpop.trf.xlu0
        %v1911 = vpop.trf.xlu0
        %1912 = vst [vmem:[%s5 + $0x20] sm:$0xff] %v1800
        %1913 = vst [vmem:[%s5 + $0x28] sm:$0xff] %v1832
        %1914 = vst [vmem:[%s5 + $0x30] sm:$0xff] %v1864
        %1915 = vst [vmem:[%s5 + $0x38] sm:$0xff] %v1896
      $region48: #{residual_block_forward.2} parent=39 // pred_fallthru
        _
      // Predicated region
      $region49: #{residual_block_forward.2} parent=39 // pred_check
        %p1916 = pneg %p139
      $region50: #{residual_block_forward.2} parent=39 // pred_check_branch
        %1918 = sbr.rel (%p1916) target = $region52
      $region51: #{residual_block_forward.2} parent=39 // pred_region
        _
      $region52: #{residual_block_forward.2} parent=39 // pred_fallthru
        _
      // Predicated region
      $region53: #{residual_block_forward.2} parent=39 // pred_check
        %p1919 = pneg %p139
      $region54: #{residual_block_forward.2} parent=39 // pred_check_branch
        %1921 = sbr.rel (%p1919) target = $region56
      $region55: #{residual_block_forward.2} parent=39 // pred_region
        _
      $region56: #{residual_block_forward.2} parent=39 // pred_fallthru
        _
    $region40: #{residual_block_forward.2} parent=5 // pred_fallthru
      _
    %p1922 = scmp.le.s32.totalorder 2, %s11
    // Predicated region
    $region57: #{residual_block_forward.2} parent=5 // pred_check
      %p1923 = pneg %p1922
    $region58: #{residual_block_forward.2} parent=5 // pred_check_branch
      %1925 = sbr.rel (%p1923) target = $region60
    $region59: #{residual_block_forward.2} parent=5 // pred_region
      %s1926 = ssub.s32 %s11, 2
    $region60: #{residual_block_forward.2} parent=5 // pred_fallthru
      _
  $region6: #{residual_block_forward.2} parent=0 // loop_footer
    %s15 = sadd.s32 1, %s11
  $region7: #{residual_block_forward.2} parent=0 // loop_footer_branch
    %10 = sbr.rel target = $region3
  $region8: #{residual_block_forward.2} parent=0 // loop_exit
    _

// kernel: residual_block_forward.3
$region0: #{residual_block_forward.3}
  #allocation0 [shape = 'u32[]', space=smem, size = 0x4, offset = 0x4, fixed_abs, tag = 'smem constant byte address 0x4 - core index']
  #allocation1 [shape = 'u32[144,128]{1,0:T(1,128)}', space=vmem, size = 0x12000, scoped, tag = 'internal scratch']
  #allocation2 [shape = 'f32[2,512,128]{2,1,0:T(8,128)}', space=vmem, size = 0x80000, scoped, tag = 'scratch operand']
  #allocation3 [shape = 'f32[1,128]{1,0:T(1,128)}', space=vmem, size = 0x200, scoped, tag = 'scratch operand']
  #allocation4 [shape = 'f32[1,128]{1,0:T(1,128)}', space=vmem, size = 0x200, scoped, tag = 'scratch operand']
  %s0 = inlined_call_operand.vmem [shape: bf16[1024,256], index: 0, kind: input, shape index: {}]
  %s1 = inlined_call_operand.vmem [shape: bf16[256,128], index: 1, kind: input, shape index: {}]
  %s2 = inlined_call_operand.vmem [shape: f32[1,128], index: 2, kind: input, shape index: {}]
  %s3 = inlined_call_operand.vmem [shape: f32[1,128], index: 3, kind: input, shape index: {}]
  %s4 = inlined_call_operand.vmem [shape: f32[1,128], index: 4, kind: input, shape index: {}]
  %s5 = inlined_call_operand.vmem [shape: f32[8,1024], index: 5, kind: output, shape index: {}]
  %s6 = sld [smem:[#allocation0]]
  $region61: #{residual_block_forward.3} parent=0
    _
  %s8 = ssub.s32 1, %s6
  %s9 = scalar_select 0, %s8, %s6
  loop: start=0, step=1, limit=4
  $region2: #{residual_block_forward.3} parent=0 // loop_pre_header
    _
  $region3: #{residual_block_forward.3} parent=0 // loop_header
    %s11 = sphi 0, %s15
    %p12 = scmp.ge.s32.totalorder %s11, 4
    %s21 = sphi 0, %s23
    %s24 = sphi 0, %s21
    %s25 = sphi 0, %s24
    %s41 = sphi 0, %s25
    %s45 = sphi 0, %s45
    %s47 = sphi 0, %s45
    %s48 = sphi 0, %s47
    %s62 = sphi 0, %s48
    %s66 = sphi 0, %s66
    %s68 = sphi 0, %s66
    %s69 = sphi 0, %s68
    %s83 = sphi 0, %s69
    %s87 = sphi 0, %s87
    %s89 = sphi 0, %s87
    %s90 = sphi 0, %s89
    %s104 = sphi 0, %s90
    %s108 = sphi 0, %s108
    %s110 = sphi 0, %s108
    %s111 = sphi 0, %s110
    %s125 = sphi 0, %s111
    %s129 = sphi 0, %s129
    %s131 = sphi 0, %s129
    %s132 = sphi 0, %s131
    %s146 = sphi 0, %s132
  $region4: #{residual_block_forward.3} parent=0 // loop_header_branch
    %14 = sbr.rel (%p12) target = $region8
  $region5: #{residual_block_forward.3} parent=0 // loop_body
    %s16 = ssub.s32 %s11, 1
    %s17 = ssub.s32 %s11, 2
    %s18 = sadd.s32 %s11, 1
    %s19 = ssub.s32 %s11, %s18
    %p20 = scmp.eq.s32.totalorder %s19, 0
    %s22 = sadd.s32 %s21, 1
    %s23 = scalar_select %p20, %s21, %s22
    %p26 = pneg %p20
    %p27 = scmp.eq.s32.totalorder %s11, 1
    %p28 = por %p26, %p27
    %p29 = scmp.ne.s32.totalorder %s21, %s24
    %p30 = scmp.eq.s32.totalorder %s11, 0
    %p31 = por %p29, %p30
    %p32 = scmp.ne.s32.totalorder %s21, %s24
    %p33 = scmp.eq.s32.totalorder %s16, 1
    %p34 = por %p32, %p33
    %p35 = scmp.ne.s32.totalorder %s24, %s25
    %p36 = scmp.eq.s32.totalorder %s16, 0
    %p37 = por %p35, %p36
    %p38 = scmp.ne.s32.totalorder %s24, %s25
    %p39 = scmp.eq.s32.totalorder %s17, 1
    %p40 = por %p38, %p39
    %p42 = scmp.ne.s32.totalorder %s25, %s41
    %p43 = scmp.eq.s32.totalorder %s17, 0
    %p44 = por %p42, %p43
    %s46 = sadd.s32 %s45, 1
    %p49 = scmp.eq.s32.totalorder %s11, 1
    %p50 = scmp.ne.s32.totalorder %s45, %s47
    %p51 = scmp.eq.s32.totalorder %s11, 0
    %p52 = por %p50, %p51
    %p53 = scmp.ne.s32.totalorder %s45, %s47
    %p54 = scmp.eq.s32.totalorder %s16, 1
    %p55 = por %p53, %p54
    %p56 = scmp.ne.s32.totalorder %s47, %s48
    %p57 = scmp.eq.s32.totalorder %s16, 0
    %p58 = por %p56, %p57
    %p59 = scmp.ne.s32.totalorder %s47, %s48
    %p60 = scmp.eq.s32.totalorder %s17, 1
    %p61 = por %p59, %p60
    %p63 = scmp.ne.s32.totalorder %s48, %s62
    %p64 = scmp.eq.s32.totalorder %s17, 0
    %p65 = por %p63, %p64
    %s67 = sadd.s32 %s66, 1
    %p70 = scmp.eq.s32.totalorder %s11, 1
    %p71 = scmp.ne.s32.totalorder %s66, %s68
    %p72 = scmp.eq.s32.totalorder %s11, 0
    %p73 = por %p71, %p72
    %p74 = scmp.ne.s32.totalorder %s66, %s68
    %p75 = scmp.eq.s32.totalorder %s16, 1
    %p76 = por %p74, %p75
    %p77 = scmp.ne.s32.totalorder %s68, %s69
    %p78 = scmp.eq.s32.totalorder %s16, 0
    %p79 = por %p77, %p78
    %p80 = scmp.ne.s32.totalorder %s68, %s69
    %p81 = scmp.eq.s32.totalorder %s17, 1
    %p82 = por %p80, %p81
    %p84 = scmp.ne.s32.totalorder %s69, %s83
    %p85 = scmp.eq.s32.totalorder %s17, 0
    %p86 = por %p84, %p85
    %s88 = sadd.s32 %s87, 1
    %p91 = scmp.eq.s32.totalorder %s11, 1
    %p92 = scmp.ne.s32.totalorder %s87, %s89
    %p93 = scmp.eq.s32.totalorder %s11, 0
    %p94 = por %p92, %p93
    %p95 = scmp.ne.s32.totalorder %s87, %s89
    %p96 = scmp.eq.s32.totalorder %s16, 1
    %p97 = por %p95, %p96
    %p98 = scmp.ne.s32.totalorder %s89, %s90
    %p99 = scmp.eq.s32.totalorder %s16, 0
    %p100 = por %p98, %p99
    %p101 = scmp.ne.s32.totalorder %s89, %s90
    %p102 = scmp.eq.s32.totalorder %s17, 1
    %p103 = por %p101, %p102
    %p105 = scmp.ne.s32.totalorder %s90, %s104
    %p106 = scmp.eq.s32.totalorder %s17, 0
    %p107 = por %p105, %p106
    %s109 = sadd.s32 %s108, 1
    %p112 = scmp.eq.s32.totalorder %s11, 1
    %p113 = scmp.ne.s32.totalorder %s108, %s110
    %p114 = scmp.eq.s32.totalorder %s11, 0
    %p115 = por %p113, %p114
    %p116 = scmp.ne.s32.totalorder %s108, %s110
    %p117 = scmp.eq.s32.totalorder %s16, 1
    %p118 = por %p116, %p117
    %p119 = scmp.ne.s32.totalorder %s110, %s111
    %p120 = scmp.eq.s32.totalorder %s16, 0
    %p121 = por %p119, %p120
    %p122 = scmp.ne.s32.totalorder %s110, %s111
    %p123 = scmp.eq.s32.totalorder %s17, 1
    %p124 = por %p122, %p123
    %p126 = scmp.ne.s32.totalorder %s111, %s125
    %p127 = scmp.eq.s32.totalorder %s17, 0
    %p128 = por %p126, %p127
    %s130 = sadd.s32 %s129, 1
    %p133 = scmp.eq.s32.totalorder %s11, 1
    %p134 = scmp.ne.s32.totalorder %s129, %s131
    %p135 = scmp.eq.s32.totalorder %s11, 0
    %p136 = por %p134, %p135
    %p137 = scmp.ne.s32.totalorder %s129, %s131
    %p138 = scmp.eq.s32.totalorder %s16, 1
    %p139 = por %p137, %p138
    %p140 = scmp.ne.s32.totalorder %s131, %s132
    %p141 = scmp.eq.s32.totalorder %s16, 0
    %p142 = por %p140, %p141
    %p143 = scmp.ne.s32.totalorder %s131, %s132
    %p144 = scmp.eq.s32.totalorder %s17, 1
    %p145 = por %p143, %p144
    %p147 = scmp.ne.s32.totalorder %s132, %s146
    %p148 = scmp.eq.s32.totalorder %s17, 0
    %p149 = por %p147, %p148
    %p150 = scmp.le.s32.totalorder 1, %s11
    %p151 = scmp.lt.s32.totalorder %s11, 3
    %p152 = pnand %p150, %p151
    %p153 = pneg %p152
    // Predicated region
    $region9: #{residual_block_forward.3} parent=5 // pred_check
      _
    $region10: #{residual_block_forward.3} parent=5 // pred_check_branch
      %155 = sbr.rel (%p152) target = $region12
    $region11: #{residual_block_forward.3} parent=5 // pred_region
      %s156 = ssub.s32 %s11, 1
      // Predicated region
      $region13: #{residual_block_forward.3} parent=11 // pred_check
        %p157 = pneg %p58
      $region14: #{residual_block_forward.3} parent=11 // pred_check_branch
        %159 = sbr.rel (%p157) target = $region16
      $region15: #{residual_block_forward.3} parent=11 // pred_region
        _
      $region16: #{residual_block_forward.3} parent=11 // pred_fallthru
        _
      // Predicated region
      $region17: #{residual_block_forward.3} parent=11 // pred_check
        %p160 = pneg %p79
      $region18: #{residual_block_forward.3} parent=11 // pred_check_branch
        %162 = sbr.rel (%p160) target = $region20
      $region19: #{residual_block_forward.3} parent=11 // pred_region
        _
      $region20: #{residual_block_forward.3} parent=11 // pred_fallthru
        _
      // Predicated region
      $region21: #{residual_block_forward.3} parent=11 // pred_check
        %p163 = pneg %p100
      $region22: #{residual_block_forward.3} parent=11 // pred_check_branch
        %165 = sbr.rel (%p163) target = $region24
      $region23: #{residual_block_forward.3} parent=11 // pred_region
        _
      $region24: #{residual_block_forward.3} parent=11 // pred_fallthru
        _
      // Predicated region
      $region25: #{residual_block_forward.3} parent=11 // pred_check
        %p166 = pneg %p121
      $region26: #{residual_block_forward.3} parent=11 // pred_check_branch
        %168 = sbr.rel (%p166) target = $region28
      $region27: #{residual_block_forward.3} parent=11 // pred_region
        _
      $region28: #{residual_block_forward.3} parent=11 // pred_fallthru
        _
    $region12: #{residual_block_forward.3} parent=5 // pred_fallthru
      _
    %p169 = scmp.lt.s32.totalorder %s11, 2
    // Predicated region
    $region29: #{residual_block_forward.3} parent=5 // pred_check
      %p170 = pneg %p169
    $region30: #{residual_block_forward.3} parent=5 // pred_check_branch
      %172 = sbr.rel (%p170) target = $region32
    $region31: #{residual_block_forward.3} parent=5 // pred_region
      // Predicated region
      $region33: #{residual_block_forward.3} parent=31 // pred_check
        %p173 = pneg %p31
      $region34: #{residual_block_forward.3} parent=31 // pred_check_branch
        %175 = sbr.rel (%p173) target = $region36
      $region35: #{residual_block_forward.3} parent=31 // pred_region
        %s176 = smul.u32 64, %s11
        %p177 = scmp.lt.s32.totalorder %s176, 127
        %s178 = scalar_select %p177, %s176, 127
        %s179 = smul.addr %s178, 2
        %s180 = smul.addr %s179, 4
        %s181 = scalar_lea.vmem %s0, %s180
        %s182 = smul.u32 64, %s11
      $region36: #{residual_block_forward.3} parent=31 // pred_fallthru
        _
    $region32: #{residual_block_forward.3} parent=5 // pred_fallthru
      _
    %p183 = scmp.le.s32.totalorder 1, %s11
    %p184 = scmp.lt.s32.totalorder %s11, 3
    %p185 = pnand %p183, %p184
    %p186 = pneg %p185
    // Predicated region
    $region37: #{residual_block_forward.3} parent=5 // pred_check
      _
    $region38: #{residual_block_forward.3} parent=5 // pred_check_branch
      %188 = sbr.rel (%p185) target = $region40
    $region39: #{residual_block_forward.3} parent=5 // pred_region
      %s189 = ssub.s32 %s11, 1
      %s190 = smul.u32 64, %s16
      %p191 = scmp.lt.s32.totalorder %s190, 127
      %s192 = scalar_select %p191, %s190, 127
      %s193 = smul.addr %s192, 2
      %s194 = smul.addr %s193, 4
      %s195 = scalar_lea.vmem %s0, %s194
      %p196 = pneg %p37
      %p197 = pneg %p34
      %p198 = pneg %p58
      %p199 = pneg %p55
      %p200 = pneg %p79
      %p201 = pneg %p76
      %p202 = pneg %p100
      %p203 = pneg %p97
      %p204 = pneg %p121
      %p205 = pneg %p118
      %p206 = pneg %p142
      %p207 = pneg %p139
      %s208 = smul.u32 64, %s16
      %p209 = scmp.lt.s32.totalorder %s208, 127
      %s210 = scalar_select %p209, %s208, 127
      %s211 = smul.addr %s210, 2
      %s212 = smul.addr %s211, 4
      %s213 = scalar_lea.vmem %s0, %s212
      %s214 = smul.u32 64, %s16
      %v216 = vld [vmem:[%s213] sm:$0xff]
      %v217 = vld [vmem:[%s213 + $0x8] sm:$0xff]
      %v218 = vld [vmem:[%s213 + $0x10] sm:$0xff]
      %v219 = vld [vmem:[%s213 + $0x18] sm:$0xff]
      %v220 = vld [vmem:[%s213 + $0x20] sm:$0xff]
      %v221 = vld [vmem:[%s213 + $0x28] sm:$0xff]
      %v222 = vld [vmem:[%s213 + $0x30] sm:$0xff]
      %v223 = vld [vmem:[%s213 + $0x38] sm:$0xff]
      %v224 = vld [vmem:[%s213 + $0x40] sm:$0xff]
      %v225 = vld [vmem:[%s213 + $0x48] sm:$0xff]
      %v226 = vld [vmem:[%s213 + $0x50] sm:$0xff]
      %v227 = vld [vmem:[%s213 + $0x58] sm:$0xff]
      %v228 = vld [vmem:[%s213 + $0x60] sm:$0xff]
      %v229 = vld [vmem:[%s213 + $0x68] sm:$0xff]
      %v230 = vld [vmem:[%s213 + $0x70] sm:$0xff]
      %v231 = vld [vmem:[%s213 + $0x78] sm:$0xff]
      %v232 = vld [vmem:[%s213 + $0x80] sm:$0xff]
      %v233 = vld [vmem:[%s213 + $0x88] sm:$0xff]
      %v234 = vld [vmem:[%s213 + $0x90] sm:$0xff]
      %v235 = vld [vmem:[%s213 + $0x98] sm:$0xff]
      %v236 = vld [vmem:[%s213 + $0xa0] sm:$0xff]
      %v237 = vld [vmem:[%s213 + $0xa8] sm:$0xff]
      %v238 = vld [vmem:[%s213 + $0xb0] sm:$0xff]
      %v239 = vld [vmem:[%s213 + $0xb8] sm:$0xff]
      %v240 = vld [vmem:[%s213 + $0xc0] sm:$0xff]
      %v241 = vld [vmem:[%s213 + $0xc8] sm:$0xff]
      %v242 = vld [vmem:[%s213 + $0xd0] sm:$0xff]
      %v243 = vld [vmem:[%s213 + $0xd8] sm:$0xff]
      %v244 = vld [vmem:[%s213 + $0xe0] sm:$0xff]
      %v245 = vld [vmem:[%s213 + $0xe8] sm:$0xff]
      %v246 = vld [vmem:[%s213 + $0xf0] sm:$0xff]
      %v247 = vld [vmem:[%s213 + $0xf8] sm:$0xff]
      %v248 = vld [vmem:[%s213 + $0x100] sm:$0xff]
      %v249 = vld [vmem:[%s213 + $0x108] sm:$0xff]
      %v250 = vld [vmem:[%s213 + $0x110] sm:$0xff]
      %v251 = vld [vmem:[%s213 + $0x118] sm:$0xff]
      %v252 = vld [vmem:[%s213 + $0x120] sm:$0xff]
      %v253 = vld [vmem:[%s213 + $0x128] sm:$0xff]
      %v254 = vld [vmem:[%s213 + $0x130] sm:$0xff]
      %v255 = vld [vmem:[%s213 + $0x138] sm:$0xff]
      %v256 = vld [vmem:[%s213 + $0x140] sm:$0xff]
      %v257 = vld [vmem:[%s213 + $0x148] sm:$0xff]
      %v258 = vld [vmem:[%s213 + $0x150] sm:$0xff]
      %v259 = vld [vmem:[%s213 + $0x158] sm:$0xff]
      %v260 = vld [vmem:[%s213 + $0x160] sm:$0xff]
      %v261 = vld [vmem:[%s213 + $0x168] sm:$0xff]
      %v262 = vld [vmem:[%s213 + $0x170] sm:$0xff]
      %v263 = vld [vmem:[%s213 + $0x178] sm:$0xff]
      %v264 = vld [vmem:[%s213 + $0x180] sm:$0xff]
      %v265 = vld [vmem:[%s213 + $0x188] sm:$0xff]
      %v266 = vld [vmem:[%s213 + $0x190] sm:$0xff]
      %v267 = vld [vmem:[%s213 + $0x198] sm:$0xff]
      %v268 = vld [vmem:[%s213 + $0x1a0] sm:$0xff]
      %v269 = vld [vmem:[%s213 + $0x1a8] sm:$0xff]
      %v270 = vld [vmem:[%s213 + $0x1b0] sm:$0xff]
      %v271 = vld [vmem:[%s213 + $0x1b8] sm:$0xff]
      %v272 = vld [vmem:[%s213 + $0x1c0] sm:$0xff]
      %v273 = vld [vmem:[%s213 + $0x1c8] sm:$0xff]
      %v274 = vld [vmem:[%s213 + $0x1d0] sm:$0xff]
      %v275 = vld [vmem:[%s213 + $0x1d8] sm:$0xff]
      %v276 = vld [vmem:[%s213 + $0x1e0] sm:$0xff]
      %v277 = vld [vmem:[%s213 + $0x1e8] sm:$0xff]
      %v278 = vld [vmem:[%s213 + $0x1f0] sm:$0xff]
      %v279 = vld [vmem:[%s213 + $0x1f8] sm:$0xff]
      %v280 = vld [vmem:[%s1] sm:$0xf]
      %v281 = vld [vmem:[%s1 + $0x4] sm:$0xf]
      %v282 = vld [vmem:[%s1 + $0x8] sm:$0xf]
      %v283 = vld [vmem:[%s1 + $0xc] sm:$0xf]
      %v284 = vld [vmem:[%s1 + $0x10] sm:$0xf]
      %v285 = vld [vmem:[%s1 + $0x14] sm:$0xf]
      %v286 = vld [vmem:[%s1 + $0x18] sm:$0xf]
      %v287 = vld [vmem:[%s1 + $0x1c] sm:$0xf]
      %v288 = vld [vmem:[%s1 + $0x20] sm:$0xf]
      %v289 = vld [vmem:[%s1 + $0x24] sm:$0xf]
      %v290 = vld [vmem:[%s1 + $0x28] sm:$0xf]
      %v291 = vld [vmem:[%s1 + $0x2c] sm:$0xf]
      %v292 = vld [vmem:[%s1 + $0x30] sm:$0xf]
      %v293 = vld [vmem:[%s1 + $0x34] sm:$0xf]
      %v294 = vld [vmem:[%s1 + $0x38] sm:$0xf]
      %v295 = vld [vmem:[%s1 + $0x3c] sm:$0xf]
      %v296 = vld [vmem:[%s1 + $0x40] sm:$0xf]
      %v297 = vld [vmem:[%s1 + $0x44] sm:$0xf]
      %v298 = vld [vmem:[%s1 + $0x48] sm:$0xf]
      %v299 = vld [vmem:[%s1 + $0x4c] sm:$0xf]
      %v300 = vld [vmem:[%s1 + $0x50] sm:$0xf]
      %v301 = vld [vmem:[%s1 + $0x54] sm:$0xf]
      %v302 = vld [vmem:[%s1 + $0x58] sm:$0xf]
      %v303 = vld [vmem:[%s1 + $0x5c] sm:$0xf]
      %v304 = vld [vmem:[%s1 + $0x60] sm:$0xf]
      %v305 = vld [vmem:[%s1 + $0x64] sm:$0xf]
      %v306 = vld [vmem:[%s1 + $0x68] sm:$0xf]
      %v307 = vld [vmem:[%s1 + $0x6c] sm:$0xf]
      %v308 = vld [vmem:[%s1 + $0x70] sm:$0xf]
      %v309 = vld [vmem:[%s1 + $0x74] sm:$0xf]
      %v310 = vld [vmem:[%s1 + $0x78] sm:$0xf]
      %v311 = vld [vmem:[%s1 + $0x7c] sm:$0xf]
      %v312 = vld [vmem:[%s2] sm:$0x1]
      %v314 = vlaneseq
      %v315 = vshrl.u32 %v314, 7
      %v316 = vsub.s32 0, %v315
      %v317 = vrot.slane %v312, %v316
      %v383 = vunpack.c.l.b16 %v216
      %v384 = vunpack.c.h.b16 %v216
      %v385 = vunpack.c.l.b16 %v217
      %v386 = vunpack.c.h.b16 %v217
      %v387 = vunpack.c.l.b16 %v218
      %v388 = vunpack.c.h.b16 %v218
      %v389 = vunpack.c.l.b16 %v219
      %v390 = vunpack.c.h.b16 %v219
      %v391 = vunpack.c.l.b16 %v220
      %v392 = vunpack.c.h.b16 %v220
      %v393 = vunpack.c.l.b16 %v221
      %v394 = vunpack.c.h.b16 %v221
      %v395 = vunpack.c.l.b16 %v222
      %v396 = vunpack.c.h.b16 %v222
      %v397 = vunpack.c.l.b16 %v223
      %v398 = vunpack.c.h.b16 %v223
      %v399 = vunpack.c.l.b16 %v224
      %v400 = vunpack.c.h.b16 %v224
      %v401 = vunpack.c.l.b16 %v225
      %v402 = vunpack.c.h.b16 %v225
      %v403 = vunpack.c.l.b16 %v226
      %v404 = vunpack.c.h.b16 %v226
      %v405 = vunpack.c.l.b16 %v227
      %v406 = vunpack.c.h.b16 %v227
      %v407 = vunpack.c.l.b16 %v228
      %v408 = vunpack.c.h.b16 %v228
      %v409 = vunpack.c.l.b16 %v229
      %v410 = vunpack.c.h.b16 %v229
      %v411 = vunpack.c.l.b16 %v230
      %v412 = vunpack.c.h.b16 %v230
      %v413 = vunpack.c.l.b16 %v231
      %v414 = vunpack.c.h.b16 %v231
      %v415 = vunpack.c.l.b16 %v232
      %v416 = vunpack.c.h.b16 %v232
      %v417 = vunpack.c.l.b16 %v233
      %v418 = vunpack.c.h.b16 %v233
      %v419 = vunpack.c.l.b16 %v234
      %v420 = vunpack.c.h.b16 %v234
      %v421 = vunpack.c.l.b16 %v235
      %v422 = vunpack.c.h.b16 %v235
      %v423 = vunpack.c.l.b16 %v236
      %v424 = vunpack.c.h.b16 %v236
      %v425 = vunpack.c.l.b16 %v237
      %v426 = vunpack.c.h.b16 %v237
      %v427 = vunpack.c.l.b16 %v238
      %v428 = vunpack.c.h.b16 %v238
      %v429 = vunpack.c.l.b16 %v239
      %v430 = vunpack.c.h.b16 %v239
      %v431 = vunpack.c.l.b16 %v240
      %v432 = vunpack.c.h.b16 %v240
      %v433 = vunpack.c.l.b16 %v241
      %v434 = vunpack.c.h.b16 %v241
      %v435 = vunpack.c.l.b16 %v242
      %v436 = vunpack.c.h.b16 %v242
      %v437 = vunpack.c.l.b16 %v243
      %v438 = vunpack.c.h.b16 %v243
      %v439 = vunpack.c.l.b16 %v244
      %v440 = vunpack.c.h.b16 %v244
      %v441 = vunpack.c.l.b16 %v245
      %v442 = vunpack.c.h.b16 %v245
      %v443 = vunpack.c.l.b16 %v246
      %v444 = vunpack.c.h.b16 %v246
      %v445 = vunpack.c.l.b16 %v247
      %v446 = vunpack.c.h.b16 %v247
      %v447 = vunpack.c.l.b16 %v248
      %v448 = vunpack.c.h.b16 %v248
      %v449 = vunpack.c.l.b16 %v249
      %v450 = vunpack.c.h.b16 %v249
      %v451 = vunpack.c.l.b16 %v250
      %v452 = vunpack.c.h.b16 %v250
      %v453 = vunpack.c.l.b16 %v251
      %v454 = vunpack.c.h.b16 %v251
      %v455 = vunpack.c.l.b16 %v252
      %v456 = vunpack.c.h.b16 %v252
      %v457 = vunpack.c.l.b16 %v253
      %v458 = vunpack.c.h.b16 %v253
      %v459 = vunpack.c.l.b16 %v254
      %v460 = vunpack.c.h.b16 %v254
      %v461 = vunpack.c.l.b16 %v255
      %v462 = vunpack.c.h.b16 %v255
      %v463 = vunpack.c.l.b16 %v256
      %v464 = vunpack.c.h.b16 %v256
      %v465 = vunpack.c.l.b16 %v257
      %v466 = vunpack.c.h.b16 %v257
      %v467 = vunpack.c.l.b16 %v258
      %v468 = vunpack.c.h.b16 %v258
      %v469 = vunpack.c.l.b16 %v259
      %v470 = vunpack.c.h.b16 %v259
      %v471 = vunpack.c.l.b16 %v260
      %v472 = vunpack.c.h.b16 %v260
      %v473 = vunpack.c.l.b16 %v261
      %v474 = vunpack.c.h.b16 %v261
      %v475 = vunpack.c.l.b16 %v262
      %v476 = vunpack.c.h.b16 %v262
      %v477 = vunpack.c.l.b16 %v263
      %v478 = vunpack.c.h.b16 %v263
      %v479 = vunpack.c.l.b16 %v264
      %v480 = vunpack.c.h.b16 %v264
      %v481 = vunpack.c.l.b16 %v265
      %v482 = vunpack.c.h.b16 %v265
      %v483 = vunpack.c.l.b16 %v266
      %v484 = vunpack.c.h.b16 %v266
      %v485 = vunpack.c.l.b16 %v267
      %v486 = vunpack.c.h.b16 %v267
      %v487 = vunpack.c.l.b16 %v268
      %v488 = vunpack.c.h.b16 %v268
      %v489 = vunpack.c.l.b16 %v269
      %v490 = vunpack.c.h.b16 %v269
      %v491 = vunpack.c.l.b16 %v270
      %v492 = vunpack.c.h.b16 %v270
      %v493 = vunpack.c.l.b16 %v271
      %v494 = vunpack.c.h.b16 %v271
      %v495 = vunpack.c.l.b16 %v272
      %v496 = vunpack.c.h.b16 %v272
      %v497 = vunpack.c.l.b16 %v273
      %v498 = vunpack.c.h.b16 %v273
      %v499 = vunpack.c.l.b16 %v274
      %v500 = vunpack.c.h.b16 %v274
      %v501 = vunpack.c.l.b16 %v275
      %v502 = vunpack.c.h.b16 %v275
      %v503 = vunpack.c.l.b16 %v276
      %v504 = vunpack.c.h.b16 %v276
      %v505 = vunpack.c.l.b16 %v277
      %v506 = vunpack.c.h.b16 %v277
      %v507 = vunpack.c.l.b16 %v278
      %v508 = vunpack.c.h.b16 %v278
      %v509 = vunpack.c.l.b16 %v279
      %v510 = vunpack.c.h.b16 %v279
      %v511 = vpack.c.b16 %v385, %v383
      %v512 = vpack.c.b16 %v386, %v384
      %v513 = vpack.c.b16 %v389, %v387
      %v514 = vpack.c.b16 %v390, %v388
      %v515 = vpack.c.b16 %v393, %v391
      %v516 = vpack.c.b16 %v394, %v392
      %v517 = vpack.c.b16 %v397, %v395
      %v518 = vpack.c.b16 %v398, %v396
      %v519 = vpack.c.b16 %v401, %v399
      %v520 = vpack.c.b16 %v402, %v400
      %v521 = vpack.c.b16 %v405, %v403
      %v522 = vpack.c.b16 %v406, %v404
      %v523 = vpack.c.b16 %v409, %v407
      %v524 = vpack.c.b16 %v410, %v408
      %v525 = vpack.c.b16 %v413, %v411
      %v526 = vpack.c.b16 %v414, %v412
      %v527 = vpack.c.b16 %v417, %v415
      %v528 = vpack.c.b16 %v418, %v416
      %v529 = vpack.c.b16 %v421, %v419
      %v530 = vpack.c.b16 %v422, %v420
      %v531 = vpack.c.b16 %v425, %v423
      %v532 = vpack.c.b16 %v426, %v424
      %v533 = vpack.c.b16 %v429, %v427
      %v534 = vpack.c.b16 %v430, %v428
      %v535 = vpack.c.b16 %v433, %v431
      %v536 = vpack.c.b16 %v434, %v432
      %v537 = vpack.c.b16 %v437, %v435
      %v538 = vpack.c.b16 %v438, %v436
      %v539 = vpack.c.b16 %v441, %v439
      %v540 = vpack.c.b16 %v442, %v440
      %v541 = vpack.c.b16 %v445, %v443
      %v542 = vpack.c.b16 %v446, %v444
      %v543 = vpack.c.b16 %v449, %v447
      %v544 = vpack.c.b16 %v450, %v448
      %v545 = vpack.c.b16 %v453, %v451
      %v546 = vpack.c.b16 %v454, %v452
      %v547 = vpack.c.b16 %v457, %v455
      %v548 = vpack.c.b16 %v458, %v456
      %v549 = vpack.c.b16 %v461, %v459
      %v550 = vpack.c.b16 %v462, %v460
      %v551 = vpack.c.b16 %v465, %v463
      %v552 = vpack.c.b16 %v466, %v464
      %v553 = vpack.c.b16 %v469, %v467
      %v554 = vpack.c.b16 %v470, %v468
      %v555 = vpack.c.b16 %v473, %v471
      %v556 = vpack.c.b16 %v474, %v472
      %v557 = vpack.c.b16 %v477, %v475
      %v558 = vpack.c.b16 %v478, %v476
      %v559 = vpack.c.b16 %v481, %v479
      %v560 = vpack.c.b16 %v482, %v480
      %v561 = vpack.c.b16 %v485, %v483
      %v562 = vpack.c.b16 %v486, %v484
      %v563 = vpack.c.b16 %v489, %v487
      %v564 = vpack.c.b16 %v490, %v488
      %v565 = vpack.c.b16 %v493, %v491
      %v566 = vpack.c.b16 %v494, %v492
      %v567 = vpack.c.b16 %v497, %v495
      %v568 = vpack.c.b16 %v498, %v496
      %v569 = vpack.c.b16 %v501, %v499
      %v570 = vpack.c.b16 %v502, %v500
      %v571 = vpack.c.b16 %v505, %v503
      %v572 = vpack.c.b16 %v506, %v504
      %v573 = vpack.c.b16 %v509, %v507
      %v574 = vpack.c.b16 %v510, %v508
      %v671 = vunpack.c.l.b16 %v280
      %v672 = vunpack.c.l.b16 %v281
      %v673 = vunpack.c.l.b16 %v282
      %v674 = vunpack.c.l.b16 %v283
      %v675 = vunpack.c.l.b16 %v284
      %v676 = vunpack.c.l.b16 %v285
      %v677 = vunpack.c.l.b16 %v286
      %v678 = vunpack.c.l.b16 %v287
      %v679 = vunpack.c.l.b16 %v288
      %v680 = vunpack.c.l.b16 %v289
      %v681 = vunpack.c.l.b16 %v290
      %v682 = vunpack.c.l.b16 %v291
      %v683 = vunpack.c.l.b16 %v292
      %v684 = vunpack.c.l.b16 %v293
      %v685 = vunpack.c.l.b16 %v294
      %v686 = vunpack.c.l.b16 %v295
      %v687 = vunpack.c.l.b16 %v296
      %v688 = vunpack.c.l.b16 %v297
      %v689 = vunpack.c.l.b16 %v298
      %v690 = vunpack.c.l.b16 %v299
      %v691 = vunpack.c.l.b16 %v300
      %v692 = vunpack.c.l.b16 %v301
      %v693 = vunpack.c.l.b16 %v302
      %v694 = vunpack.c.l.b16 %v303
      %v695 = vunpack.c.l.b16 %v304
      %v696 = vunpack.c.l.b16 %v305
      %v697 = vunpack.c.l.b16 %v306
      %v698 = vunpack.c.l.b16 %v307
      %v699 = vunpack.c.l.b16 %v308
      %v700 = vunpack.c.l.b16 %v309
      %v701 = vunpack.c.l.b16 %v310
      %v702 = vunpack.c.l.b16 %v311
      %v703 = vpack.c.b16 %v672, %v671
      %v704 = vpack.c.b16 %v674, %v673
      %v705 = vpack.c.b16 %v676, %v675
      %v706 = vpack.c.b16 %v678, %v677
      %v707 = vpack.c.b16 %v680, %v679
      %v708 = vpack.c.b16 %v682, %v681
      %v709 = vpack.c.b16 %v684, %v683
      %v710 = vpack.c.b16 %v686, %v685
      %v711 = vpack.c.b16 %v688, %v687
      %v712 = vpack.c.b16 %v690, %v689
      %v713 = vpack.c.b16 %v692, %v691
      %v714 = vpack.c.b16 %v694, %v693
      %v715 = vpack.c.b16 %v696, %v695
      %v716 = vpack.c.b16 %v698, %v697
      %v717 = vpack.c.b16 %v700, %v699
      %v718 = vpack.c.b16 %v702, %v701
      %735 = vmatprep.subr.bf16.mxu0 0
      %736 = vmatpush1.bf16.msra.mxu0 %v703
      %737 = vmatprep.subr.bf16.mxu0 0
      %738 = vmatpush1.bf16.msra.mxu0 %v704
      %739 = vmatprep.subr.bf16.mxu0 0
      %740 = vmatpush1.bf16.msra.mxu0 %v705
      %741 = vmatprep.subr.bf16.mxu0 0
      %742 = vmatpush1.bf16.msra.mxu0 %v706
      %743 = vmatprep.subr.bf16.mxu0 0
      %744 = vmatpush1.bf16.msra.mxu0 %v707
      %745 = vmatprep.subr.bf16.mxu0 0
      %746 = vmatpush1.bf16.msra.mxu0 %v708
      %747 = vmatprep.subr.bf16.mxu0 0
      %748 = vmatpush1.bf16.msra.mxu0 %v709
      %749 = vmatprep.subr.bf16.mxu0 0
      %750 = vmatpush1.bf16.msra.mxu0 %v710
      %751 = vmatprep.subr.bf16.mxu0 0
      %752 = vmatpush1.bf16.msra.mxu0 %v711
      %753 = vmatprep.subr.bf16.mxu0 0
      %754 = vmatpush1.bf16.msra.mxu0 %v712
      %755 = vmatprep.subr.bf16.mxu0 0
      %756 = vmatpush1.bf16.msra.mxu0 %v713
      %757 = vmatprep.subr.bf16.mxu0 0
      %758 = vmatpush1.bf16.msra.mxu0 %v714
      %759 = vmatprep.subr.bf16.mxu0 0
      %760 = vmatpush1.bf16.msra.mxu0 %v715
      %761 = vmatprep.subr.bf16.mxu0 0
      %762 = vmatpush1.bf16.msra.mxu0 %v716
      %763 = vmatprep.subr.bf16.mxu0 0
      %764 = vmatpush1.bf16.msra.mxu0 %v717
      %765 = vmatprep.subr.bf16.mxu0 0
      %766 = vmatpush1.bf16.msra.mxu0 %v718
      %767 = vmatprep.mubr.bf16.mxu0 %v512
      %768 = vmatmul.mubr.bf16.gmra.mrb[0].mxu0 %v511
      %v769 = vpop.f32.mrb[0].mxu0
      %v770 = vadd.f32 %v317, %v769
      %v771 = vpop.f32.mrb[0].mxu0
      %v772 = vpop.f32.mrb[0].mxu0
      %v773 = vadd.f32 %v317, %v772
      %v774 = vpop.f32.mrb[0].mxu0
      %775 = vmatprep.mubr.bf16.mxu0 %v514
      %776 = vmatmul.mubr.bf16.gmra.mrb[0].mxu0 %v513
      %v777 = vpop.f32.mrb[0].mxu0
      %v778 = vadd.f32 %v317, %v777
      %v779 = vpop.f32.mrb[0].mxu0
      %v780 = vpop.f32.mrb[0].mxu0
      %v781 = vadd.f32 %v317, %v780
      %v782 = vpop.f32.mrb[0].mxu0
      %783 = vmatprep.mubr.bf16.mxu0 %v516
      %784 = vmatmul.mubr.bf16.gmra.mrb[0].mxu0 %v515
      %v785 = vpop.f32.mrb[0].mxu0
      %v786 = vadd.f32 %v317, %v785
      %v787 = vpop.f32.mrb[0].mxu0
      %v788 = vpop.f32.mrb[0].mxu0
      %v789 = vadd.f32 %v317, %v788
      %v790 = vpop.f32.mrb[0].mxu0
      %791 = vmatprep.mubr.bf16.mxu0 %v518
      %792 = vmatmul.mubr.bf16.gmra.mrb[0].mxu0 %v517
      %v793 = vpop.f32.mrb[0].mxu0
      %v794 = vadd.f32 %v317, %v793
      %v795 = vpop.f32.mrb[0].mxu0
      %v796 = vpop.f32.mrb[0].mxu0
      %v797 = vadd.f32 %v317, %v796
      %v798 = vpop.f32.mrb[0].mxu0
      %799 = vmatprep.mubr.bf16.mxu0 %v520
      %800 = vmatmul.mubr.bf16.gmra.mrb[0].mxu0 %v519
      %v801 = vpop.f32.mrb[0].mxu0
      %v802 = vadd.f32 %v317, %v801
      %v803 = vpop.f32.mrb[0].mxu0
      %v804 = vpop.f32.mrb[0].mxu0
      %v805 = vadd.f32 %v317, %v804
      %v806 = vpop.f32.mrb[0].mxu0
      %807 = vmatprep.mubr.bf16.mxu0 %v522
      %808 = vmatmul.mubr.bf16.gmra.mrb[0].mxu0 %v521
      %v809 = vpop.f32.mrb[0].mxu0
      %v810 = vadd.f32 %v317, %v809
      %v811 = vpop.f32.mrb[0].mxu0
      %v812 = vpop.f32.mrb[0].mxu0
      %v813 = vadd.f32 %v317, %v812
      %v814 = vpop.f32.mrb[0].mxu0
      %815 = vmatprep.mubr.bf16.mxu0 %v524
      %816 = vmatmul.mubr.bf16.gmra.mrb[0].mxu0 %v523
      %v817 = vpop.f32.mrb[0].mxu0
      %v818 = vadd.f32 %v317, %v817
      %v819 = vpop.f32.mrb[0].mxu0
      %v820 = vpop.f32.mrb[0].mxu0
      %v821 = vadd.f32 %v317, %v820
      %v822 = vpop.f32.mrb[0].mxu0
      %823 = vmatprep.mubr.bf16.mxu0 %v526
      %824 = vmatmul.mubr.bf16.gmra.mrb[0].mxu0 %v525
      %v825 = vpop.f32.mrb[0].mxu0
      %v826 = vadd.f32 %v317, %v825
      %v827 = vpop.f32.mrb[0].mxu0
      %v828 = vpop.f32.mrb[0].mxu0
      %v829 = vadd.f32 %v317, %v828
      %v830 = vpop.f32.mrb[0].mxu0
      %831 = vmatprep.mubr.bf16.mxu0 %v528
      %832 = vmatmul.mubr.bf16.gmra.mrb[0].mxu0 %v527
      %v833 = vpop.f32.mrb[0].mxu0
      %v834 = vadd.f32 %v317, %v833
      %v835 = vpop.f32.mrb[0].mxu0
      %v836 = vpop.f32.mrb[0].mxu0
      %v837 = vadd.f32 %v317, %v836
      %v838 = vpop.f32.mrb[0].mxu0
      %839 = vmatprep.mubr.bf16.mxu0 %v530
      %840 = vmatmul.mubr.bf16.gmra.mrb[0].mxu0 %v529
      %v841 = vpop.f32.mrb[0].mxu0
      %v842 = vadd.f32 %v317, %v841
      %v843 = vpop.f32.mrb[0].mxu0
      %v844 = vpop.f32.mrb[0].mxu0
      %v845 = vadd.f32 %v317, %v844
      %v846 = vpop.f32.mrb[0].mxu0
      %847 = vmatprep.mubr.bf16.mxu0 %v532
      %848 = vmatmul.mubr.bf16.gmra.mrb[0].mxu0 %v531
      %v849 = vpop.f32.mrb[0].mxu0
      %v850 = vadd.f32 %v317, %v849
      %v851 = vpop.f32.mrb[0].mxu0
      %v852 = vpop.f32.mrb[0].mxu0
      %v853 = vadd.f32 %v317, %v852
      %v854 = vpop.f32.mrb[0].mxu0
      %855 = vmatprep.mubr.bf16.mxu0 %v534
      %856 = vmatmul.mubr.bf16.gmra.mrb[0].mxu0 %v533
      %v857 = vpop.f32.mrb[0].mxu0
      %v858 = vadd.f32 %v317, %v857
      %v859 = vpop.f32.mrb[0].mxu0
      %v860 = vpop.f32.mrb[0].mxu0
      %v861 = vadd.f32 %v317, %v860
      %v862 = vpop.f32.mrb[0].mxu0
      %863 = vmatprep.mubr.bf16.mxu0 %v536
      %864 = vmatmul.mubr.bf16.gmra.mrb[0].mxu0 %v535
      %v865 = vpop.f32.mrb[0].mxu0
      %v866 = vadd.f32 %v317, %v865
      %v867 = vpop.f32.mrb[0].mxu0
      %v868 = vpop.f32.mrb[0].mxu0
      %v869 = vadd.f32 %v317, %v868
      %v870 = vpop.f32.mrb[0].mxu0
      %871 = vmatprep.mubr.bf16.mxu0 %v538
      %872 = vmatmul.mubr.bf16.gmra.mrb[0].mxu0 %v537
      %v873 = vpop.f32.mrb[0].mxu0
      %v874 = vadd.f32 %v317, %v873
      %v875 = vpop.f32.mrb[0].mxu0
      %v876 = vpop.f32.mrb[0].mxu0
      %v877 = vadd.f32 %v317, %v876
      %v878 = vpop.f32.mrb[0].mxu0
      %879 = vmatprep.mubr.bf16.mxu0 %v540
      %880 = vmatmul.mubr.bf16.gmra.mrb[0].mxu0 %v539
      %v881 = vpop.f32.mrb[0].mxu0
      %v882 = vadd.f32 %v317, %v881
      %v883 = vpop.f32.mrb[0].mxu0
      %v884 = vpop.f32.mrb[0].mxu0
      %v885 = vadd.f32 %v317, %v884
      %v886 = vpop.f32.mrb[0].mxu0
      %887 = vmatprep.mubr.bf16.mxu0 %v542
      %888 = vmatmul.mubr.bf16.gmra.mrb[0].mxu0 %v541
      %v889 = vpop.f32.mrb[0].mxu0
      %v890 = vadd.f32 %v317, %v889
      %v891 = vpop.f32.mrb[0].mxu0
      %v892 = vpop.f32.mrb[0].mxu0
      %v893 = vadd.f32 %v317, %v892
      %v894 = vpop.f32.mrb[0].mxu0
      %895 = vmatprep.mubr.bf16.mxu0 %v544
      %896 = vmatmul.mubr.bf16.gmra.mrb[0].mxu0 %v543
      %v897 = vpop.f32.mrb[0].mxu0
      %v898 = vadd.f32 %v317, %v897
      %v899 = vpop.f32.mrb[0].mxu0
      %v900 = vpop.f32.mrb[0].mxu0
      %v901 = vadd.f32 %v317, %v900
      %v902 = vpop.f32.mrb[0].mxu0
      %903 = vmatprep.mubr.bf16.mxu0 %v546
      %904 = vmatmul.mubr.bf16.gmra.mrb[0].mxu0 %v545
      %v905 = vpop.f32.mrb[0].mxu0
      %v906 = vadd.f32 %v317, %v905
      %v907 = vpop.f32.mrb[0].mxu0
      %v908 = vpop.f32.mrb[0].mxu0
      %v909 = vadd.f32 %v317, %v908
      %v910 = vpop.f32.mrb[0].mxu0
      %911 = vmatprep.mubr.bf16.mxu0 %v548
      %912 = vmatmul.mubr.bf16.gmra.mrb[0].mxu0 %v547
      %v913 = vpop.f32.mrb[0].mxu0
      %v914 = vadd.f32 %v317, %v913
      %v915 = vpop.f32.mrb[0].mxu0
      %v916 = vpop.f32.mrb[0].mxu0
      %v917 = vadd.f32 %v317, %v916
      %v918 = vpop.f32.mrb[0].mxu0
      %919 = vmatprep.mubr.bf16.mxu0 %v550
      %920 = vmatmul.mubr.bf16.gmra.mrb[0].mxu0 %v549
      %v921 = vpop.f32.mrb[0].mxu0
      %v922 = vadd.f32 %v317, %v921
      %v923 = vpop.f32.mrb[0].mxu0
      %v924 = vpop.f32.mrb[0].mxu0
      %v925 = vadd.f32 %v317, %v924
      %v926 = vpop.f32.mrb[0].mxu0
      %927 = vmatprep.mubr.bf16.mxu0 %v552
      %928 = vmatmul.mubr.bf16.gmra.mrb[0].mxu0 %v551
      %v929 = vpop.f32.mrb[0].mxu0
      %v930 = vadd.f32 %v317, %v929
      %v931 = vpop.f32.mrb[0].mxu0
      %v932 = vpop.f32.mrb[0].mxu0
      %v933 = vadd.f32 %v317, %v932
      %v934 = vpop.f32.mrb[0].mxu0
      %935 = vmatprep.mubr.bf16.mxu0 %v554
      %936 = vmatmul.mubr.bf16.gmra.mrb[0].mxu0 %v553
      %v937 = vpop.f32.mrb[0].mxu0
      %v938 = vadd.f32 %v317, %v937
      %v939 = vpop.f32.mrb[0].mxu0
      %v940 = vpop.f32.mrb[0].mxu0
      %v941 = vadd.f32 %v317, %v940
      %v942 = vpop.f32.mrb[0].mxu0
      %943 = vmatprep.mubr.bf16.mxu0 %v556
      %944 = vmatmul.mubr.bf16.gmra.mrb[0].mxu0 %v555
      %v945 = vpop.f32.mrb[0].mxu0
      %v946 = vadd.f32 %v317, %v945
      %v947 = vpop.f32.mrb[0].mxu0
      %v948 = vpop.f32.mrb[0].mxu0
      %v949 = vadd.f32 %v317, %v948
      %v950 = vpop.f32.mrb[0].mxu0
      %951 = vmatprep.mubr.bf16.mxu0 %v558
      %952 = vmatmul.mubr.bf16.gmra.mrb[0].mxu0 %v557
      %v953 = vpop.f32.mrb[0].mxu0
      %v954 = vadd.f32 %v317, %v953
      %v955 = vpop.f32.mrb[0].mxu0
      %v956 = vpop.f32.mrb[0].mxu0
      %v957 = vadd.f32 %v317, %v956
      %v958 = vpop.f32.mrb[0].mxu0
      %959 = vmatprep.mubr.bf16.mxu0 %v560
      %960 = vmatmul.mubr.bf16.gmra.mrb[0].mxu0 %v559
      %v961 = vpop.f32.mrb[0].mxu0
      %v962 = vadd.f32 %v317, %v961
      %v963 = vpop.f32.mrb[0].mxu0
      %v964 = vpop.f32.mrb[0].mxu0
      %v965 = vadd.f32 %v317, %v964
      %v966 = vpop.f32.mrb[0].mxu0
      %967 = vmatprep.mubr.bf16.mxu0 %v562
      %968 = vmatmul.mubr.bf16.gmra.mrb[0].mxu0 %v561
      %v969 = vpop.f32.mrb[0].mxu0
      %v970 = vadd.f32 %v317, %v969
      %v971 = vpop.f32.mrb[0].mxu0
      %v972 = vpop.f32.mrb[0].mxu0
      %v973 = vadd.f32 %v317, %v972
      %v974 = vpop.f32.mrb[0].mxu0
      %975 = vmatprep.mubr.bf16.mxu0 %v564
      %976 = vmatmul.mubr.bf16.gmra.mrb[0].mxu0 %v563
      %v977 = vpop.f32.mrb[0].mxu0
      %v978 = vadd.f32 %v317, %v977
      %v979 = vpop.f32.mrb[0].mxu0
      %v980 = vpop.f32.mrb[0].mxu0
      %v981 = vadd.f32 %v317, %v980
      %v982 = vpop.f32.mrb[0].mxu0
      %983 = vmatprep.mubr.bf16.mxu0 %v566
      %984 = vmatmul.mubr.bf16.gmra.mrb[0].mxu0 %v565
      %v985 = vpop.f32.mrb[0].mxu0
      %v986 = vadd.f32 %v317, %v985
      %v987 = vpop.f32.mrb[0].mxu0
      %v988 = vpop.f32.mrb[0].mxu0
      %v989 = vadd.f32 %v317, %v988
      %v990 = vpop.f32.mrb[0].mxu0
      %991 = vmatprep.mubr.bf16.mxu0 %v568
      %992 = vmatmul.mubr.bf16.gmra.mrb[0].mxu0 %v567
      %v993 = vpop.f32.mrb[0].mxu0
      %v994 = vadd.f32 %v317, %v993
      %v995 = vpop.f32.mrb[0].mxu0
      %v996 = vpop.f32.mrb[0].mxu0
      %v997 = vadd.f32 %v317, %v996
      %v998 = vpop.f32.mrb[0].mxu0
      %999 = vmatprep.mubr.bf16.mxu0 %v570
      %1000 = vmatmul.mubr.bf16.gmra.mrb[0].mxu0 %v569
      %v1001 = vpop.f32.mrb[0].mxu0
      %v1002 = vadd.f32 %v317, %v1001
      %v1003 = vpop.f32.mrb[0].mxu0
      %v1004 = vpop.f32.mrb[0].mxu0
      %v1005 = vadd.f32 %v317, %v1004
      %v1006 = vpop.f32.mrb[0].mxu0
      %1007 = vmatprep.mubr.bf16.mxu0 %v572
      %1008 = vmatmul.mubr.bf16.gmra.mrb[0].mxu0 %v571
      %v1009 = vpop.f32.mrb[0].mxu0
      %v1010 = vadd.f32 %v317, %v1009
      %v1011 = vpop.f32.mrb[0].mxu0
      %v1012 = vpop.f32.mrb[0].mxu0
      %v1013 = vadd.f32 %v317, %v1012
      %v1014 = vpop.f32.mrb[0].mxu0
      %1015 = vmatprep.mubr.bf16.mxu0 %v574
      %1016 = vmatmul.mubr.bf16.gmra.mrb[0].mxu0 %v573
      %v1017 = vpop.f32.mrb[0].mxu0
      %v1018 = vadd.f32 %v317, %v1017
      %v1019 = vpop.f32.mrb[0].mxu0
      %v1020 = vpop.f32.mrb[0].mxu0
      %v1021 = vadd.f32 %v317, %v1020
      %v1022 = vpop.f32.mrb[0].mxu0
      %1023 = vdwg.mxu0
      %s1024 = smul.u32 %s16, 512
      %s1025 = scalar_lea.vmem [#allocation2], %s1024
      %1026 = vst [vmem:[%s1025] sm:$0xff] %v770
      %1027 = vst [vmem:[%s1025 + $0x8] sm:$0xff] %v773
      %1028 = vst [vmem:[%s1025 + $0x10] sm:$0xff] %v778
      %1029 = vst [vmem:[%s1025 + $0x18] sm:$0xff] %v781
      %1030 = vst [vmem:[%s1025 + $0x20] sm:$0xff] %v786
      %1031 = vst [vmem:[%s1025 + $0x28] sm:$0xff] %v789
      %1032 = vst [vmem:[%s1025 + $0x30] sm:$0xff] %v794
      %1033 = vst [vmem:[%s1025 + $0x38] sm:$0xff] %v797
      %1034 = vst [vmem:[%s1025 + $0x40] sm:$0xff] %v802
      %1035 = vst [vmem:[%s1025 + $0x48] sm:$0xff] %v805
      %1036 = vst [vmem:[%s1025 + $0x50] sm:$0xff] %v810
      %1037 = vst [vmem:[%s1025 + $0x58] sm:$0xff] %v813
      %1038 = vst [vmem:[%s1025 + $0x60] sm:$0xff] %v818
      %1039 = vst [vmem:[%s1025 + $0x68] sm:$0xff] %v821
      %1040 = vst [vmem:[%s1025 + $0x70] sm:$0xff] %v826
      %1041 = vst [vmem:[%s1025 + $0x78] sm:$0xff] %v829
      %1042 = vst [vmem:[%s1025 + $0x80] sm:$0xff] %v834
      %1043 = vst [vmem:[%s1025 + $0x88] sm:$0xff] %v837
      %1044 = vst [vmem:[%s1025 + $0x90] sm:$0xff] %v842
      %1045 = vst [vmem:[%s1025 + $0x98] sm:$0xff] %v845
      %1046 = vst [vmem:[%s1025 + $0xa0] sm:$0xff] %v850
      %1047 = vst [vmem:[%s1025 + $0xa8] sm:$0xff] %v853
      %1048 = vst [vmem:[%s1025 + $0xb0] sm:$0xff] %v858
      %1049 = vst [vmem:[%s1025 + $0xb8] sm:$0xff] %v861
      %1050 = vst [vmem:[%s1025 + $0xc0] sm:$0xff] %v866
      %1051 = vst [vmem:[%s1025 + $0xc8] sm:$0xff] %v869
      %1052 = vst [vmem:[%s1025 + $0xd0] sm:$0xff] %v874
      %1053 = vst [vmem:[%s1025 + $0xd8] sm:$0xff] %v877
      %1054 = vst [vmem:[%s1025 + $0xe0] sm:$0xff] %v882
      %1055 = vst [vmem:[%s1025 + $0xe8] sm:$0xff] %v885
      %1056 = vst [vmem:[%s1025 + $0xf0] sm:$0xff] %v890
      %1057 = vst [vmem:[%s1025 + $0xf8] sm:$0xff] %v893
      %1058 = vst [vmem:[%s1025 + $0x100] sm:$0xff] %v898
      %1059 = vst [vmem:[%s1025 + $0x108] sm:$0xff] %v901
      %1060 = vst [vmem:[%s1025 + $0x110] sm:$0xff] %v906
      %1061 = vst [vmem:[%s1025 + $0x118] sm:$0xff] %v909
      %1062 = vst [vmem:[%s1025 + $0x120] sm:$0xff] %v914
      %1063 = vst [vmem:[%s1025 + $0x128] sm:$0xff] %v917
      %1064 = vst [vmem:[%s1025 + $0x130] sm:$0xff] %v922
      %1065 = vst [vmem:[%s1025 + $0x138] sm:$0xff] %v925
      %1066 = vst [vmem:[%s1025 + $0x140] sm:$0xff] %v930
      %1067 = vst [vmem:[%s1025 + $0x148] sm:$0xff] %v933
      %1068 = vst [vmem:[%s1025 + $0x150] sm:$0xff] %v938
      %1069 = vst [vmem:[%s1025 + $0x158] sm:$0xff] %v941
      %1070 = vst [vmem:[%s1025 + $0x160] sm:$0xff] %v946
      %1071 = vst [vmem:[%s1025 + $0x168] sm:$0xff] %v949
      %1072 = vst [vmem:[%s1025 + $0x170] sm:$0xff] %v954
      %1073 = vst [vmem:[%s1025 + $0x178] sm:$0xff] %v957
      %1074 = vst [vmem:[%s1025 + $0x180] sm:$0xff] %v962
      %1075 = vst [vmem:[%s1025 + $0x188] sm:$0xff] %v965
      %1076 = vst [vmem:[%s1025 + $0x190] sm:$0xff] %v970
      %1077 = vst [vmem:[%s1025 + $0x198] sm:$0xff] %v973
      %1078 = vst [vmem:[%s1025 + $0x1a0] sm:$0xff] %v978
      %1079 = vst [vmem:[%s1025 + $0x1a8] sm:$0xff] %v981
      %1080 = vst [vmem:[%s1025 + $0x1b0] sm:$0xff] %v986
      %1081 = vst [vmem:[%s1025 + $0x1b8] sm:$0xff] %v989
      %1082 = vst [vmem:[%s1025 + $0x1c0] sm:$0xff] %v994
      %1083 = vst [vmem:[%s1025 + $0x1c8] sm:$0xff] %v997
      %1084 = vst [vmem:[%s1025 + $0x1d0] sm:$0xff] %v1002
      %1085 = vst [vmem:[%s1025 + $0x1d8] sm:$0xff] %v1005
      %1086 = vst [vmem:[%s1025 + $0x1e0] sm:$0xff] %v1010
      %1087 = vst [vmem:[%s1025 + $0x1e8] sm:$0xff] %v1013
      %1088 = vst [vmem:[%s1025 + $0x1f0] sm:$0xff] %v1018
      %1089 = vst [vmem:[%s1025 + $0x1f8] sm:$0xff] %v1021
      %p1090 = scmp.eq.s32.totalorder %s16, 0
      // Predicated region
      $region41: #{residual_block_forward.3} parent=39 // pred_check
        %p1091 = pneg %p1090
      $region42: #{residual_block_forward.3} parent=39 // pred_check_branch
        %1093 = sbr.rel (%p1091) target = $region44
      $region43: #{residual_block_forward.3} parent=39 // pred_region
        %1094 = vst [vmem:[#allocation3] sm:$0x1] 0.0
        %1095 = vst [vmem:[#allocation4] sm:$0x1] 0.0
      $region44: #{residual_block_forward.3} parent=39 // pred_fallthru
        _
      %v1096 = vld [vmem:[#allocation3] sm:$0x1]
      %v1097 = vadd.f32 %v770, %v773
      %v1098 = vadd.f32 %v1097, %v778
      %v1099 = vadd.f32 %v1098, %v781
      %v1100 = vadd.f32 %v1099, %v786
      %v1101 = vadd.f32 %v1100, %v789
      %v1102 = vadd.f32 %v1101, %v794
      %v1103 = vadd.f32 %v1102, %v797
      %v1104 = vadd.f32 %v1103, %v802
      %v1105 = vadd.f32 %v1104, %v805
      %v1106 = vadd.f32 %v1105, %v810
      %v1107 = vadd.f32 %v1106, %v813
      %v1108 = vadd.f32 %v1107, %v818
      %v1109 = vadd.f32 %v1108, %v821
      %v1110 = vadd.f32 %v1109, %v826
      %v1111 = vadd.f32 %v1110, %v829
      %v1112 = vadd.f32 %v1111, %v834
      %v1113 = vadd.f32 %v1112, %v837
      %v1114 = vadd.f32 %v1113, %v842
      %v1115 = vadd.f32 %v1114, %v845
      %v1116 = vadd.f32 %v1115, %v850
      %v1117 = vadd.f32 %v1116, %v853
      %v1118 = vadd.f32 %v1117, %v858
      %v1119 = vadd.f32 %v1118, %v861
      %v1120 = vadd.f32 %v1119, %v866
      %v1121 = vadd.f32 %v1120, %v869
      %v1122 = vadd.f32 %v1121, %v874
      %v1123 = vadd.f32 %v1122, %v877
      %v1124 = vadd.f32 %v1123, %v882
      %v1125 = vadd.f32 %v1124, %v885
      %v1126 = vadd.f32 %v1125, %v890
      %v1127 = vadd.f32 %v1126, %v893
      %v1128 = vadd.f32 %v1127, %v898
      %v1129 = vadd.f32 %v1128, %v901
      %v1130 = vadd.f32 %v1129, %v906
      %v1131 = vadd.f32 %v1130, %v909
      %v1132 = vadd.f32 %v1131, %v914
      %v1133 = vadd.f32 %v1132, %v917
      %v1134 = vadd.f32 %v1133, %v922
      %v1135 = vadd.f32 %v1134, %v925
      %v1136 = vadd.f32 %v1135, %v930
      %v1137 = vadd.f32 %v1136, %v933
      %v1138 = vadd.f32 %v1137, %v938
      %v1139 = vadd.f32 %v1138, %v941
      %v1140 = vadd.f32 %v1139, %v946
      %v1141 = vadd.f32 %v1140, %v949
      %v1142 = vadd.f32 %v1141, %v954
      %v1143 = vadd.f32 %v1142, %v957
      %v1144 = vadd.f32 %v1143, %v962
      %v1145 = vadd.f32 %v1144, %v965
      %v1146 = vadd.f32 %v1145, %v970
      %v1147 = vadd.f32 %v1146, %v973
      %v1148 = vadd.f32 %v1147, %v978
      %v1149 = vadd.f32 %v1148, %v981
      %v1150 = vadd.f32 %v1149, %v986
      %v1151 = vadd.f32 %v1150, %v989
      %v1152 = vadd.f32 %v1151, %v994
      %v1153 = vadd.f32 %v1152, %v997
      %v1154 = vadd.f32 %v1153, %v1002
      %v1155 = vadd.f32 %v1154, %v1005
      %v1156 = vadd.f32 %v1155, %v1010
      %v1157 = vadd.f32 %v1156, %v1013
      %v1158 = vadd.f32 %v1157, %v1018
      %v1159 = vadd.f32 %v1158, %v1021
      %v1160 = vrot.slane %v1159, 4
      %v1161 = vadd.f32 %v1159, %v1160
      %v1162 = vrot.slane %v1161, 2
      %v1163 = vadd.f32 %v1161, %v1162
      %v1164 = vrot.slane %v1163, 1
      %v1165 = vadd.f32 %v1163, %v1164
      %v1166 = vadd.f32 %v1096, %v1165
      %1167 = vst [vmem:[#allocation3] sm:$0x1] %v1166
      %v1168 = vld [vmem:[#allocation4] sm:$0x1]
      %v1169 = vmul.f32 %v770, %v770
      %v1170 = vmul.f32 %v773, %v773
      %v1171 = vmul.f32 %v778, %v778
      %v1172 = vmul.f32 %v781, %v781
      %v1173 = vmul.f32 %v786, %v786
      %v1174 = vmul.f32 %v789, %v789
      %v1175 = vmul.f32 %v794, %v794
      %v1176 = vmul.f32 %v797, %v797
      %v1177 = vmul.f32 %v802, %v802
      %v1178 = vmul.f32 %v805, %v805
      %v1179 = vmul.f32 %v810, %v810
      %v1180 = vmul.f32 %v813, %v813
      %v1181 = vmul.f32 %v818, %v818
      %v1182 = vmul.f32 %v821, %v821
      %v1183 = vmul.f32 %v826, %v826
      %v1184 = vmul.f32 %v829, %v829
      %v1185 = vmul.f32 %v834, %v834
      %v1186 = vmul.f32 %v837, %v837
      %v1187 = vmul.f32 %v842, %v842
      %v1188 = vmul.f32 %v845, %v845
      %v1189 = vmul.f32 %v850, %v850
      %v1190 = vmul.f32 %v853, %v853
      %v1191 = vmul.f32 %v858, %v858
      %v1192 = vmul.f32 %v861, %v861
      %v1193 = vmul.f32 %v866, %v866
      %v1194 = vmul.f32 %v869, %v869
      %v1195 = vmul.f32 %v874, %v874
      %v1196 = vmul.f32 %v877, %v877
      %v1197 = vmul.f32 %v882, %v882
      %v1198 = vmul.f32 %v885, %v885
      %v1199 = vmul.f32 %v890, %v890
      %v1200 = vmul.f32 %v893, %v893
      %v1201 = vmul.f32 %v898, %v898
      %v1202 = vmul.f32 %v901, %v901
      %v1203 = vmul.f32 %v906, %v906
      %v1204 = vmul.f32 %v909, %v909
      %v1205 = vmul.f32 %v914, %v914
      %v1206 = vmul.f32 %v917, %v917
      %v1207 = vmul.f32 %v922, %v922
      %v1208 = vmul.f32 %v925, %v925
      %v1209 = vmul.f32 %v930, %v930
      %v1210 = vmul.f32 %v933, %v933
      %v1211 = vmul.f32 %v938, %v938
      %v1212 = vmul.f32 %v941, %v941
      %v1213 = vmul.f32 %v946, %v946
      %v1214 = vmul.f32 %v949, %v949
      %v1215 = vmul.f32 %v954, %v954
      %v1216 = vmul.f32 %v957, %v957
      %v1217 = vmul.f32 %v962, %v962
      %v1218 = vmul.f32 %v965, %v965
      %v1219 = vmul.f32 %v970, %v970
      %v1220 = vmul.f32 %v973, %v973
      %v1221 = vmul.f32 %v978, %v978
      %v1222 = vmul.f32 %v981, %v981
      %v1223 = vmul.f32 %v986, %v986
      %v1224 = vmul.f32 %v989, %v989
      %v1225 = vmul.f32 %v994, %v994
      %v1226 = vmul.f32 %v997, %v997
      %v1227 = vmul.f32 %v1002, %v1002
      %v1228 = vmul.f32 %v1005, %v1005
      %v1229 = vmul.f32 %v1010, %v1010
      %v1230 = vmul.f32 %v1013, %v1013
      %v1231 = vmul.f32 %v1018, %v1018
      %v1232 = vmul.f32 %v1021, %v1021
      %v1233 = vadd.f32 %v1169, %v1170
      %v1234 = vadd.f32 %v1233, %v1171
      %v1235 = vadd.f32 %v1234, %v1172
      %v1236 = vadd.f32 %v1235, %v1173
      %v1237 = vadd.f32 %v1236, %v1174
      %v1238 = vadd.f32 %v1237, %v1175
      %v1239 = vadd.f32 %v1238, %v1176
      %v1240 = vadd.f32 %v1239, %v1177
      %v1241 = vadd.f32 %v1240, %v1178
      %v1242 = vadd.f32 %v1241, %v1179
      %v1243 = vadd.f32 %v1242, %v1180
      %v1244 = vadd.f32 %v1243, %v1181
      %v1245 = vadd.f32 %v1244, %v1182
      %v1246 = vadd.f32 %v1245, %v1183
      %v1247 = vadd.f32 %v1246, %v1184
      %v1248 = vadd.f32 %v1247, %v1185
      %v1249 = vadd.f32 %v1248, %v1186
      %v1250 = vadd.f32 %v1249, %v1187
      %v1251 = vadd.f32 %v1250, %v1188
      %v1252 = vadd.f32 %v1251, %v1189
      %v1253 = vadd.f32 %v1252, %v1190
      %v1254 = vadd.f32 %v1253, %v1191
      %v1255 = vadd.f32 %v1254, %v1192
      %v1256 = vadd.f32 %v1255, %v1193
      %v1257 = vadd.f32 %v1256, %v1194
      %v1258 = vadd.f32 %v1257, %v1195
      %v1259 = vadd.f32 %v1258, %v1196
      %v1260 = vadd.f32 %v1259, %v1197
      %v1261 = vadd.f32 %v1260, %v1198
      %v1262 = vadd.f32 %v1261, %v1199
      %v1263 = vadd.f32 %v1262, %v1200
      %v1264 = vadd.f32 %v1263, %v1201
      %v1265 = vadd.f32 %v1264, %v1202
      %v1266 = vadd.f32 %v1265, %v1203
      %v1267 = vadd.f32 %v1266, %v1204
      %v1268 = vadd.f32 %v1267, %v1205
      %v1269 = vadd.f32 %v1268, %v1206
      %v1270 = vadd.f32 %v1269, %v1207
      %v1271 = vadd.f32 %v1270, %v1208
      %v1272 = vadd.f32 %v1271, %v1209
      %v1273 = vadd.f32 %v1272, %v1210
      %v1274 = vadd.f32 %v1273, %v1211
      %v1275 = vadd.f32 %v1274, %v1212
      %v1276 = vadd.f32 %v1275, %v1213
      %v1277 = vadd.f32 %v1276, %v1214
      %v1278 = vadd.f32 %v1277, %v1215
      %v1279 = vadd.f32 %v1278, %v1216
      %v1280 = vadd.f32 %v1279, %v1217
      %v1281 = vadd.f32 %v1280, %v1218
      %v1282 = vadd.f32 %v1281, %v1219
      %v1283 = vadd.f32 %v1282, %v1220
      %v1284 = vadd.f32 %v1283, %v1221
      %v1285 = vadd.f32 %v1284, %v1222
      %v1286 = vadd.f32 %v1285, %v1223
      %v1287 = vadd.f32 %v1286, %v1224
      %v1288 = vadd.f32 %v1287, %v1225
      %v1289 = vadd.f32 %v1288, %v1226
      %v1290 = vadd.f32 %v1289, %v1227
      %v1291 = vadd.f32 %v1290, %v1228
      %v1292 = vadd.f32 %v1291, %v1229
      %v1293 = vadd.f32 %v1292, %v1230
      %v1294 = vadd.f32 %v1293, %v1231
      %v1295 = vadd.f32 %v1294, %v1232
      %v1296 = vrot.slane %v1295, 4
      %v1297 = vadd.f32 %v1295, %v1296
      %v1298 = vrot.slane %v1297, 2
      %v1299 = vadd.f32 %v1297, %v1298
      %v1300 = vrot.slane %v1299, 1
      %v1301 = vadd.f32 %v1299, %v1300
      %v1302 = vadd.f32 %v1168, %v1301
      %1303 = vst [vmem:[#allocation4] sm:$0x1] %v1302
      %p1304 = scmp.eq.s32.totalorder %s16, 1
      // Predicated region
      $region45: #{residual_block_forward.3} parent=39 // pred_check
        %p1305 = pneg %p1304
      $region46: #{residual_block_forward.3} parent=39 // pred_check_branch
        %1307 = sbr.rel (%p1305) target = $region48
      $region47: #{residual_block_forward.3} parent=39 // pred_region
        %v1308 = vld [vmem:[#allocation3] sm:$0x1]
        %v1309 = vmul.f32 %v1308, 0.0009765625
        %v1310 = vld [vmem:[#allocation4] sm:$0x1]
        %v1311 = vmul.f32 %v1310, 0.0009765625
        %v1312 = vmul.f32 %v1309, %v1309
        %v1313 = vsub.f32 %v1311, %v1312
        %v1314 = vmax.f32 %v1313, 0.0
        %v1315 = vadd.f32 %v1314, 1e-05
        %v1316 = vrsqrt.pop %v1315
        %v1317 = vld [vmem:[%s3] sm:$0x1]
        %v1318 = vmul.f32 %v1317, %v1316
        %v1319 = vld [vmem:[%s4] sm:$0x1]
        %v1320 = vmul.f32 %v1309, %v1318
        %v1321 = vsub.f32 %v1319, %v1320
        %v1322 = vld [vmem:[#allocation2] sm:$0xff]
        %v1323 = vld [vmem:[#allocation2 + $0x8] sm:$0xff]
        %v1324 = vld [vmem:[#allocation2 + $0x10] sm:$0xff]
        %v1325 = vld [vmem:[#allocation2 + $0x18] sm:$0xff]
        %v1326 = vld [vmem:[#allocation2 + $0x20] sm:$0xff]
        %v1327 = vld [vmem:[#allocation2 + $0x28] sm:$0xff]
        %v1328 = vld [vmem:[#allocation2 + $0x30] sm:$0xff]
        %v1329 = vld [vmem:[#allocation2 + $0x38] sm:$0xff]
        %v1330 = vld [vmem:[#allocation2 + $0x40] sm:$0xff]
        %v1331 = vld [vmem:[#allocation2 + $0x48] sm:$0xff]
        %v1332 = vld [vmem:[#allocation2 + $0x50] sm:$0xff]
        %v1333 = vld [vmem:[#allocation2 + $0x58] sm:$0xff]
        %v1334 = vld [vmem:[#allocation2 + $0x60] sm:$0xff]
        %v1335 = vld [vmem:[#allocation2 + $0x68] sm:$0xff]
        %v1336 = vld [vmem:[#allocation2 + $0x70] sm:$0xff]
        %v1337 = vld [vmem:[#allocation2 + $0x78] sm:$0xff]
        %v1338 = vld [vmem:[#allocation2 + $0x80] sm:$0xff]
        %v1339 = vld [vmem:[#allocation2 + $0x88] sm:$0xff]
        %v1340 = vld [vmem:[#allocation2 + $0x90] sm:$0xff]
        %v1341 = vld [vmem:[#allocation2 + $0x98] sm:$0xff]
        %v1342 = vld [vmem:[#allocation2 + $0xa0] sm:$0xff]
        %v1343 = vld [vmem:[#allocation2 + $0xa8] sm:$0xff]
        %v1344 = vld [vmem:[#allocation2 + $0xb0] sm:$0xff]
        %v1345 = vld [vmem:[#allocation2 + $0xb8] sm:$0xff]
        %v1346 = vld [vmem:[#allocation2 + $0xc0] sm:$0xff]
        %v1347 = vld [vmem:[#allocation2 + $0xc8] sm:$0xff]
        %v1348 = vld [vmem:[#allocation2 + $0xd0] sm:$0xff]
        %v1349 = vld [vmem:[#allocation2 + $0xd8] sm:$0xff]
        %v1350 = vld [vmem:[#allocation2 + $0xe0] sm:$0xff]
        %v1351 = vld [vmem:[#allocation2 + $0xe8] sm:$0xff]
        %v1352 = vld [vmem:[#allocation2 + $0xf0] sm:$0xff]
        %v1353 = vld [vmem:[#allocation2 + $0xf8] sm:$0xff]
        %v1354 = vld [vmem:[#allocation2 + $0x100] sm:$0xff]
        %v1355 = vld [vmem:[#allocation2 + $0x108] sm:$0xff]
        %v1356 = vld [vmem:[#allocation2 + $0x110] sm:$0xff]
        %v1357 = vld [vmem:[#allocation2 + $0x118] sm:$0xff]
        %v1358 = vld [vmem:[#allocation2 + $0x120] sm:$0xff]
        %v1359 = vld [vmem:[#allocation2 + $0x128] sm:$0xff]
        %v1360 = vld [vmem:[#allocation2 + $0x130] sm:$0xff]
        %v1361 = vld [vmem:[#allocation2 + $0x138] sm:$0xff]
        %v1362 = vld [vmem:[#allocation2 + $0x140] sm:$0xff]
        %v1363 = vld [vmem:[#allocation2 + $0x148] sm:$0xff]
        %v1364 = vld [vmem:[#allocation2 + $0x150] sm:$0xff]
        %v1365 = vld [vmem:[#allocation2 + $0x158] sm:$0xff]
        %v1366 = vld [vmem:[#allocation2 + $0x160] sm:$0xff]
        %v1367 = vld [vmem:[#allocation2 + $0x168] sm:$0xff]
        %v1368 = vld [vmem:[#allocation2 + $0x170] sm:$0xff]
        %v1369 = vld [vmem:[#allocation2 + $0x178] sm:$0xff]
        %v1370 = vld [vmem:[#allocation2 + $0x180] sm:$0xff]
        %v1371 = vld [vmem:[#allocation2 + $0x188] sm:$0xff]
        %v1372 = vld [vmem:[#allocation2 + $0x190] sm:$0xff]
        %v1373 = vld [vmem:[#allocation2 + $0x198] sm:$0xff]
        %v1374 = vld [vmem:[#allocation2 + $0x1a0] sm:$0xff]
        %v1375 = vld [vmem:[#allocation2 + $0x1a8] sm:$0xff]
        %v1376 = vld [vmem:[#allocation2 + $0x1b0] sm:$0xff]
        %v1377 = vld [vmem:[#allocation2 + $0x1b8] sm:$0xff]
        %v1378 = vld [vmem:[#allocation2 + $0x1c0] sm:$0xff]
        %v1379 = vld [vmem:[#allocation2 + $0x1c8] sm:$0xff]
        %v1380 = vld [vmem:[#allocation2 + $0x1d0] sm:$0xff]
        %v1381 = vld [vmem:[#allocation2 + $0x1d8] sm:$0xff]
        %v1382 = vld [vmem:[#allocation2 + $0x1e0] sm:$0xff]
        %v1383 = vld [vmem:[#allocation2 + $0x1e8] sm:$0xff]
        %v1384 = vld [vmem:[#allocation2 + $0x1f0] sm:$0xff]
        %v1385 = vld [vmem:[#allocation2 + $0x1f8] sm:$0xff]
        %v1387 = vlaneseq
        %v1388 = vshrl.u32 %v1387, 7
        %v1389 = vsub.s32 0, %v1388
        %v1390 = vrot.slane %v1318, %v1389
        %v1392 = vmul.f32 %v1322, %v1390
        %v1393 = vmul.f32 %v1323, %v1390
        %v1394 = vmul.f32 %v1324, %v1390
        %v1395 = vmul.f32 %v1325, %v1390
        %v1396 = vmul.f32 %v1326, %v1390
        %v1397 = vmul.f32 %v1327, %v1390
        %v1398 = vmul.f32 %v1328, %v1390
        %v1399 = vmul.f32 %v1329, %v1390
        %v1400 = vmul.f32 %v1330, %v1390
        %v1401 = vmul.f32 %v1331, %v1390
        %v1402 = vmul.f32 %v1332, %v1390
        %v1403 = vmul.f32 %v1333, %v1390
        %v1404 = vmul.f32 %v1334, %v1390
        %v1405 = vmul.f32 %v1335, %v1390
        %v1406 = vmul.f32 %v1336, %v1390
        %v1407 = vmul.f32 %v1337, %v1390
        %v1408 = vmul.f32 %v1338, %v1390
        %v1409 = vmul.f32 %v1339, %v1390
        %v1410 = vmul.f32 %v1340, %v1390
        %v1411 = vmul.f32 %v1341, %v1390
        %v1412 = vmul.f32 %v1342, %v1390
        %v1413 = vmul.f32 %v1343, %v1390
        %v1414 = vmul.f32 %v1344, %v1390
        %v1415 = vmul.f32 %v1345, %v1390
        %v1416 = vmul.f32 %v1346, %v1390
        %v1417 = vmul.f32 %v1347, %v1390
        %v1418 = vmul.f32 %v1348, %v1390
        %v1419 = vmul.f32 %v1349, %v1390
        %v1420 = vmul.f32 %v1350, %v1390
        %v1421 = vmul.f32 %v1351, %v1390
        %v1422 = vmul.f32 %v1352, %v1390
        %v1423 = vmul.f32 %v1353, %v1390
        %v1424 = vmul.f32 %v1354, %v1390
        %v1425 = vmul.f32 %v1355, %v1390
        %v1426 = vmul.f32 %v1356, %v1390
        %v1427 = vmul.f32 %v1357, %v1390
        %v1428 = vmul.f32 %v1358, %v1390
        %v1429 = vmul.f32 %v1359, %v1390
        %v1430 = vmul.f32 %v1360, %v1390
        %v1431 = vmul.f32 %v1361, %v1390
        %v1432 = vmul.f32 %v1362, %v1390
        %v1433 = vmul.f32 %v1363, %v1390
        %v1434 = vmul.f32 %v1364, %v1390
        %v1435 = vmul.f32 %v1365, %v1390
        %v1436 = vmul.f32 %v1366, %v1390
        %v1437 = vmul.f32 %v1367, %v1390
        %v1438 = vmul.f32 %v1368, %v1390
        %v1439 = vmul.f32 %v1369, %v1390
        %v1440 = vmul.f32 %v1370, %v1390
        %v1441 = vmul.f32 %v1371, %v1390
        %v1442 = vmul.f32 %v1372, %v1390
        %v1443 = vmul.f32 %v1373, %v1390
        %v1444 = vmul.f32 %v1374, %v1390
        %v1445 = vmul.f32 %v1375, %v1390
        %v1446 = vmul.f32 %v1376, %v1390
        %v1447 = vmul.f32 %v1377, %v1390
        %v1448 = vmul.f32 %v1378, %v1390
        %v1449 = vmul.f32 %v1379, %v1390
        %v1450 = vmul.f32 %v1380, %v1390
        %v1451 = vmul.f32 %v1381, %v1390
        %v1452 = vmul.f32 %v1382, %v1390
        %v1453 = vmul.f32 %v1383, %v1390
        %v1454 = vmul.f32 %v1384, %v1390
        %v1455 = vmul.f32 %v1385, %v1390
        %v1457 = vlaneseq
        %v1458 = vshrl.u32 %v1457, 7
        %v1459 = vsub.s32 0, %v1458
        %v1460 = vrot.slane %v1321, %v1459
        %v1462 = vadd.f32 %v1392, %v1460
        %v1463 = vadd.f32 %v1393, %v1460
        %v1464 = vadd.f32 %v1394, %v1460
        %v1465 = vadd.f32 %v1395, %v1460
        %v1466 = vadd.f32 %v1396, %v1460
        %v1467 = vadd.f32 %v1397, %v1460
        %v1468 = vadd.f32 %v1398, %v1460
        %v1469 = vadd.f32 %v1399, %v1460
        %v1470 = vadd.f32 %v1400, %v1460
        %v1471 = vadd.f32 %v1401, %v1460
        %v1472 = vadd.f32 %v1402, %v1460
        %v1473 = vadd.f32 %v1403, %v1460
        %v1474 = vadd.f32 %v1404, %v1460
        %v1475 = vadd.f32 %v1405, %v1460
        %v1476 = vadd.f32 %v1406, %v1460
        %v1477 = vadd.f32 %v1407, %v1460
        %v1478 = vadd.f32 %v1408, %v1460
        %v1479 = vadd.f32 %v1409, %v1460
        %v1480 = vadd.f32 %v1410, %v1460
        %v1481 = vadd.f32 %v1411, %v1460
        %v1482 = vadd.f32 %v1412, %v1460
        %v1483 = vadd.f32 %v1413, %v1460
        %v1484 = vadd.f32 %v1414, %v1460
        %v1485 = vadd.f32 %v1415, %v1460
        %v1486 = vadd.f32 %v1416, %v1460
        %v1487 = vadd.f32 %v1417, %v1460
        %v1488 = vadd.f32 %v1418, %v1460
        %v1489 = vadd.f32 %v1419, %v1460
        %v1490 = vadd.f32 %v1420, %v1460
        %v1491 = vadd.f32 %v1421, %v1460
        %v1492 = vadd.f32 %v1422, %v1460
        %v1493 = vadd.f32 %v1423, %v1460
        %v1494 = vadd.f32 %v1424, %v1460
        %v1495 = vadd.f32 %v1425, %v1460
        %v1496 = vadd.f32 %v1426, %v1460
        %v1497 = vadd.f32 %v1427, %v1460
        %v1498 = vadd.f32 %v1428, %v1460
        %v1499 = vadd.f32 %v1429, %v1460
        %v1500 = vadd.f32 %v1430, %v1460
        %v1501 = vadd.f32 %v1431, %v1460
        %v1502 = vadd.f32 %v1432, %v1460
        %v1503 = vadd.f32 %v1433, %v1460
        %v1504 = vadd.f32 %v1434, %v1460
        %v1505 = vadd.f32 %v1435, %v1460
        %v1506 = vadd.f32 %v1436, %v1460
        %v1507 = vadd.f32 %v1437, %v1460
        %v1508 = vadd.f32 %v1438, %v1460
        %v1509 = vadd.f32 %v1439, %v1460
        %v1510 = vadd.f32 %v1440, %v1460
        %v1511 = vadd.f32 %v1441, %v1460
        %v1512 = vadd.f32 %v1442, %v1460
        %v1513 = vadd.f32 %v1443, %v1460
        %v1514 = vadd.f32 %v1444, %v1460
        %v1515 = vadd.f32 %v1445, %v1460
        %v1516 = vadd.f32 %v1446, %v1460
        %v1517 = vadd.f32 %v1447, %v1460
        %v1518 = vadd.f32 %v1448, %v1460
        %v1519 = vadd.f32 %v1449, %v1460
        %v1520 = vadd.f32 %v1450, %v1460
        %v1521 = vadd.f32 %v1451, %v1460
        %v1522 = vadd.f32 %v1452, %v1460
        %v1523 = vadd.f32 %v1453, %v1460
        %v1524 = vadd.f32 %v1454, %v1460
        %v1525 = vadd.f32 %v1455, %v1460
        %v1526 = vmax.f32 %v1462, 0.0
        %v1527 = vmax.f32 %v1463, 0.0
        %v1528 = vmax.f32 %v1464, 0.0
        %v1529 = vmax.f32 %v1465, 0.0
        %v1530 = vmax.f32 %v1466, 0.0
        %v1531 = vmax.f32 %v1467, 0.0
        %v1532 = vmax.f32 %v1468, 0.0
        %v1533 = vmax.f32 %v1469, 0.0
        %v1534 = vmax.f32 %v1470, 0.0
        %v1535 = vmax.f32 %v1471, 0.0
        %v1536 = vmax.f32 %v1472, 0.0
        %v1537 = vmax.f32 %v1473, 0.0
        %v1538 = vmax.f32 %v1474, 0.0
        %v1539 = vmax.f32 %v1475, 0.0
        %v1540 = vmax.f32 %v1476, 0.0
        %v1541 = vmax.f32 %v1477, 0.0
        %v1542 = vmax.f32 %v1478, 0.0
        %v1543 = vmax.f32 %v1479, 0.0
        %v1544 = vmax.f32 %v1480, 0.0
        %v1545 = vmax.f32 %v1481, 0.0
        %v1546 = vmax.f32 %v1482, 0.0
        %v1547 = vmax.f32 %v1483, 0.0
        %v1548 = vmax.f32 %v1484, 0.0
        %v1549 = vmax.f32 %v1485, 0.0
        %v1550 = vmax.f32 %v1486, 0.0
        %v1551 = vmax.f32 %v1487, 0.0
        %v1552 = vmax.f32 %v1488, 0.0
        %v1553 = vmax.f32 %v1489, 0.0
        %v1554 = vmax.f32 %v1490, 0.0
        %v1555 = vmax.f32 %v1491, 0.0
        %v1556 = vmax.f32 %v1492, 0.0
        %v1557 = vmax.f32 %v1493, 0.0
        %v1558 = vmax.f32 %v1494, 0.0
        %v1559 = vmax.f32 %v1495, 0.0
        %v1560 = vmax.f32 %v1496, 0.0
        %v1561 = vmax.f32 %v1497, 0.0
        %v1562 = vmax.f32 %v1498, 0.0
        %v1563 = vmax.f32 %v1499, 0.0
        %v1564 = vmax.f32 %v1500, 0.0
        %v1565 = vmax.f32 %v1501, 0.0
        %v1566 = vmax.f32 %v1502, 0.0
        %v1567 = vmax.f32 %v1503, 0.0
        %v1568 = vmax.f32 %v1504, 0.0
        %v1569 = vmax.f32 %v1505, 0.0
        %v1570 = vmax.f32 %v1506, 0.0
        %v1571 = vmax.f32 %v1507, 0.0
        %v1572 = vmax.f32 %v1508, 0.0
        %v1573 = vmax.f32 %v1509, 0.0
        %v1574 = vmax.f32 %v1510, 0.0
        %v1575 = vmax.f32 %v1511, 0.0
        %v1576 = vmax.f32 %v1512, 0.0
        %v1577 = vmax.f32 %v1513, 0.0
        %v1578 = vmax.f32 %v1514, 0.0
        %v1579 = vmax.f32 %v1515, 0.0
        %v1580 = vmax.f32 %v1516, 0.0
        %v1581 = vmax.f32 %v1517, 0.0
        %v1582 = vmax.f32 %v1518, 0.0
        %v1583 = vmax.f32 %v1519, 0.0
        %v1584 = vmax.f32 %v1520, 0.0
        %v1585 = vmax.f32 %v1521, 0.0
        %v1586 = vmax.f32 %v1522, 0.0
        %v1587 = vmax.f32 %v1523, 0.0
        %v1588 = vmax.f32 %v1524, 0.0
        %v1589 = vmax.f32 %v1525, 0.0
        %1590 = vxpose.xlu0.b32.start [1/16] %v1526, 128
        %1591 = vxpose.xlu0.b32.cont [2/16] %v1527, 128
        %1592 = vxpose.xlu0.b32.cont [3/16] %v1528, 128
        %1593 = vxpose.xlu0.b32.cont [4/16] %v1529, 128
        %1594 = vxpose.xlu0.b32.cont [5/16] %v1530, 128
        %1595 = vxpose.xlu0.b32.cont [6/16] %v1531, 128
        %1596 = vxpose.xlu0.b32.cont [7/16] %v1532, 128
        %1597 = vxpose.xlu0.b32.cont [8/16] %v1533, 128
        %1598 = vxpose.xlu0.b32.cont [9/16] %v1534, 128
        %1599 = vxpose.xlu0.b32.cont [10/16] %v1535, 128
        %1600 = vxpose.xlu0.b32.cont [11/16] %v1536, 128
        %1601 = vxpose.xlu0.b32.cont [12/16] %v1537, 128
        %1602 = vxpose.xlu0.b32.cont [13/16] %v1538, 128
        %1603 = vxpose.xlu0.b32.cont [14/16] %v1539, 128
        %1604 = vxpose.xlu0.b32.cont [15/16] %v1540, 128
        %1605 = vxpose.xlu0.b32.end [16/16] %v1541, 128
        %v1606 = vpop.trf.xlu0
        %v1607 = vpop.trf.xlu0
        %v1608 = vpop.trf.xlu0
        %v1609 = vpop.trf.xlu0
        %v1610 = vpop.trf.xlu0
        %v1611 = vpop.trf.xlu0
        %v1612 = vpop.trf.xlu0
        %v1613 = vpop.trf.xlu0
        %v1614 = vpop.trf.xlu0
        %v1615 = vpop.trf.xlu0
        %v1616 = vpop.trf.xlu0
        %v1617 = vpop.trf.xlu0
        %v1618 = vpop.trf.xlu0
        %v1619 = vpop.trf.xlu0
        %v1620 = vpop.trf.xlu0
        %v1621 = vpop.trf.xlu0
        %1622 = vxpose.xlu0.b32.start [1/16] %v1542, 128
        %1623 = vxpose.xlu0.b32.cont [2/16] %v1543, 128
        %1624 = vxpose.xlu0.b32.cont [3/16] %v1544, 128
        %1625 = vxpose.xlu0.b32.cont [4/16] %v1545, 128
        %1626 = vxpose.xlu0.b32.cont [5/16] %v1546, 128
        %1627 = vxpose.xlu0.b32.cont [6/16] %v1547, 128
        %1628 = vxpose.xlu0.b32.cont [7/16] %v1548, 128
        %1629 = vxpose.xlu0.b32.cont [8/16] %v1549, 128
        %1630 = vxpose.xlu0.b32.cont [9/16] %v1550, 128
        %1631 = vxpose.xlu0.b32.cont [10/16] %v1551, 128
        %1632 = vxpose.xlu0.b32.cont [11/16] %v1552, 128
        %1633 = vxpose.xlu0.b32.cont [12/16] %v1553, 128
        %1634 = vxpose.xlu0.b32.cont [13/16] %v1554, 128
        %1635 = vxpose.xlu0.b32.cont [14/16] %v1555, 128
        %1636 = vxpose.xlu0.b32.cont [15/16] %v1556, 128
        %1637 = vxpose.xlu0.b32.end [16/16] %v1557, 128
        %v1638 = vpop.trf.xlu0
        %v1639 = vpop.trf.xlu0
        %v1640 = vpop.trf.xlu0
        %v1641 = vpop.trf.xlu0
        %v1642 = vpop.trf.xlu0
        %v1643 = vpop.trf.xlu0
        %v1644 = vpop.trf.xlu0
        %v1645 = vpop.trf.xlu0
        %v1646 = vpop.trf.xlu0
        %v1647 = vpop.trf.xlu0
        %v1648 = vpop.trf.xlu0
        %v1649 = vpop.trf.xlu0
        %v1650 = vpop.trf.xlu0
        %v1651 = vpop.trf.xlu0
        %v1652 = vpop.trf.xlu0
        %v1653 = vpop.trf.xlu0
        %1654 = vxpose.xlu0.b32.start [1/16] %v1558, 128
        %1655 = vxpose.xlu0.b32.cont [2/16] %v1559, 128
        %1656 = vxpose.xlu0.b32.cont [3/16] %v1560, 128
        %1657 = vxpose.xlu0.b32.cont [4/16] %v1561, 128
        %1658 = vxpose.xlu0.b32.cont [5/16] %v1562, 128
        %1659 = vxpose.xlu0.b32.cont [6/16] %v1563, 128
        %1660 = vxpose.xlu0.b32.cont [7/16] %v1564, 128
        %1661 = vxpose.xlu0.b32.cont [8/16] %v1565, 128
        %1662 = vxpose.xlu0.b32.cont [9/16] %v1566, 128
        %1663 = vxpose.xlu0.b32.cont [10/16] %v1567, 128
        %1664 = vxpose.xlu0.b32.cont [11/16] %v1568, 128
        %1665 = vxpose.xlu0.b32.cont [12/16] %v1569, 128
        %1666 = vxpose.xlu0.b32.cont [13/16] %v1570, 128
        %1667 = vxpose.xlu0.b32.cont [14/16] %v1571, 128
        %1668 = vxpose.xlu0.b32.cont [15/16] %v1572, 128
        %1669 = vxpose.xlu0.b32.end [16/16] %v1573, 128
        %v1670 = vpop.trf.xlu0
        %v1671 = vpop.trf.xlu0
        %v1672 = vpop.trf.xlu0
        %v1673 = vpop.trf.xlu0
        %v1674 = vpop.trf.xlu0
        %v1675 = vpop.trf.xlu0
        %v1676 = vpop.trf.xlu0
        %v1677 = vpop.trf.xlu0
        %v1678 = vpop.trf.xlu0
        %v1679 = vpop.trf.xlu0
        %v1680 = vpop.trf.xlu0
        %v1681 = vpop.trf.xlu0
        %v1682 = vpop.trf.xlu0
        %v1683 = vpop.trf.xlu0
        %v1684 = vpop.trf.xlu0
        %v1685 = vpop.trf.xlu0
        %1686 = vxpose.xlu0.b32.start [1/16] %v1574, 128
        %1687 = vxpose.xlu0.b32.cont [2/16] %v1575, 128
        %1688 = vxpose.xlu0.b32.cont [3/16] %v1576, 128
        %1689 = vxpose.xlu0.b32.cont [4/16] %v1577, 128
        %1690 = vxpose.xlu0.b32.cont [5/16] %v1578, 128
        %1691 = vxpose.xlu0.b32.cont [6/16] %v1579, 128
        %1692 = vxpose.xlu0.b32.cont [7/16] %v1580, 128
        %1693 = vxpose.xlu0.b32.cont [8/16] %v1581, 128
        %1694 = vxpose.xlu0.b32.cont [9/16] %v1582, 128
        %1695 = vxpose.xlu0.b32.cont [10/16] %v1583, 128
        %1696 = vxpose.xlu0.b32.cont [11/16] %v1584, 128
        %1697 = vxpose.xlu0.b32.cont [12/16] %v1585, 128
        %1698 = vxpose.xlu0.b32.cont [13/16] %v1586, 128
        %1699 = vxpose.xlu0.b32.cont [14/16] %v1587, 128
        %1700 = vxpose.xlu0.b32.cont [15/16] %v1588, 128
        %1701 = vxpose.xlu0.b32.end [16/16] %v1589, 128
        %v1702 = vpop.trf.xlu0
        %v1703 = vpop.trf.xlu0
        %v1704 = vpop.trf.xlu0
        %v1705 = vpop.trf.xlu0
        %v1706 = vpop.trf.xlu0
        %v1707 = vpop.trf.xlu0
        %v1708 = vpop.trf.xlu0
        %v1709 = vpop.trf.xlu0
        %v1710 = vpop.trf.xlu0
        %v1711 = vpop.trf.xlu0
        %v1712 = vpop.trf.xlu0
        %v1713 = vpop.trf.xlu0
        %v1714 = vpop.trf.xlu0
        %v1715 = vpop.trf.xlu0
        %v1716 = vpop.trf.xlu0
        %v1717 = vpop.trf.xlu0
        %1718 = vst [vmem:[%s5] sm:$0xff] %v1606
        %1719 = vst [vmem:[%s5 + $0x8] sm:$0xff] %v1638
        %1720 = vst [vmem:[%s5 + $0x10] sm:$0xff] %v1670
        %1721 = vst [vmem:[%s5 + $0x18] sm:$0xff] %v1702
        %s1722 = scalar_lea.vmem [#allocation2], 512
        %v1723 = vld [vmem:[%s1722] sm:$0xff]
        %v1724 = vld [vmem:[%s1722 + $0x8] sm:$0xff]
        %v1725 = vld [vmem:[%s1722 + $0x10] sm:$0xff]
        %v1726 = vld [vmem:[%s1722 + $0x18] sm:$0xff]
        %v1727 = vld [vmem:[%s1722 + $0x20] sm:$0xff]
        %v1728 = vld [vmem:[%s1722 + $0x28] sm:$0xff]
        %v1729 = vld [vmem:[%s1722 + $0x30] sm:$0xff]
        %v1730 = vld [vmem:[%s1722 + $0x38] sm:$0xff]
        %v1731 = vld [vmem:[%s1722 + $0x40] sm:$0xff]
        %v1732 = vld [vmem:[%s1722 + $0x48] sm:$0xff]
        %v1733 = vld [vmem:[%s1722 + $0x50] sm:$0xff]
        %v1734 = vld [vmem:[%s1722 + $0x58] sm:$0xff]
        %v1735 = vld [vmem:[%s1722 + $0x60] sm:$0xff]
        %v1736 = vld [vmem:[%s1722 + $0x68] sm:$0xff]
        %v1737 = vld [vmem:[%s1722 + $0x70] sm:$0xff]
        %v1738 = vld [vmem:[%s1722 + $0x78] sm:$0xff]
        %v1739 = vld [vmem:[%s1722 + $0x80] sm:$0xff]
        %v1740 = vld [vmem:[%s1722 + $0x88] sm:$0xff]
        %v1741 = vld [vmem:[%s1722 + $0x90] sm:$0xff]
        %v1742 = vld [vmem:[%s1722 + $0x98] sm:$0xff]
        %v1743 = vld [vmem:[%s1722 + $0xa0] sm:$0xff]
        %v1744 = vld [vmem:[%s1722 + $0xa8] sm:$0xff]
        %v1745 = vld [vmem:[%s1722 + $0xb0] sm:$0xff]
        %v1746 = vld [vmem:[%s1722 + $0xb8] sm:$0xff]
        %v1747 = vld [vmem:[%s1722 + $0xc0] sm:$0xff]
        %v1748 = vld [vmem:[%s1722 + $0xc8] sm:$0xff]
        %v1749 = vld [vmem:[%s1722 + $0xd0] sm:$0xff]
        %v1750 = vld [vmem:[%s1722 + $0xd8] sm:$0xff]
        %v1751 = vld [vmem:[%s1722 + $0xe0] sm:$0xff]
        %v1752 = vld [vmem:[%s1722 + $0xe8] sm:$0xff]
        %v1753 = vld [vmem:[%s1722 + $0xf0] sm:$0xff]
        %v1754 = vld [vmem:[%s1722 + $0xf8] sm:$0xff]
        %v1755 = vld [vmem:[%s1722 + $0x100] sm:$0xff]
        %v1756 = vld [vmem:[%s1722 + $0x108] sm:$0xff]
        %v1757 = vld [vmem:[%s1722 + $0x110] sm:$0xff]
        %v1758 = vld [vmem:[%s1722 + $0x118] sm:$0xff]
        %v1759 = vld [vmem:[%s1722 + $0x120] sm:$0xff]
        %v1760 = vld [vmem:[%s1722 + $0x128] sm:$0xff]
        %v1761 = vld [vmem:[%s1722 + $0x130] sm:$0xff]
        %v1762 = vld [vmem:[%s1722 + $0x138] sm:$0xff]
        %v1763 = vld [vmem:[%s1722 + $0x140] sm:$0xff]
        %v1764 = vld [vmem:[%s1722 + $0x148] sm:$0xff]
        %v1765 = vld [vmem:[%s1722 + $0x150] sm:$0xff]
        %v1766 = vld [vmem:[%s1722 + $0x158] sm:$0xff]
        %v1767 = vld [vmem:[%s1722 + $0x160] sm:$0xff]
        %v1768 = vld [vmem:[%s1722 + $0x168] sm:$0xff]
        %v1769 = vld [vmem:[%s1722 + $0x170] sm:$0xff]
        %v1770 = vld [vmem:[%s1722 + $0x178] sm:$0xff]
        %v1771 = vld [vmem:[%s1722 + $0x180] sm:$0xff]
        %v1772 = vld [vmem:[%s1722 + $0x188] sm:$0xff]
        %v1773 = vld [vmem:[%s1722 + $0x190] sm:$0xff]
        %v1774 = vld [vmem:[%s1722 + $0x198] sm:$0xff]
        %v1775 = vld [vmem:[%s1722 + $0x1a0] sm:$0xff]
        %v1776 = vld [vmem:[%s1722 + $0x1a8] sm:$0xff]
        %v1777 = vld [vmem:[%s1722 + $0x1b0] sm:$0xff]
        %v1778 = vld [vmem:[%s1722 + $0x1b8] sm:$0xff]
        %v1779 = vld [vmem:[%s1722 + $0x1c0] sm:$0xff]
        %v1780 = vld [vmem:[%s1722 + $0x1c8] sm:$0xff]
        %v1781 = vld [vmem:[%s1722 + $0x1d0] sm:$0xff]
        %v1782 = vld [vmem:[%s1722 + $0x1d8] sm:$0xff]
        %v1783 = vld [vmem:[%s1722 + $0x1e0] sm:$0xff]
        %v1784 = vld [vmem:[%s1722 + $0x1e8] sm:$0xff]
        %v1785 = vld [vmem:[%s1722 + $0x1f0] sm:$0xff]
        %v1786 = vld [vmem:[%s1722 + $0x1f8] sm:$0xff]
        %v1787 = vmul.f32 %v1723, %v1390
        %v1788 = vmul.f32 %v1724, %v1390
        %v1789 = vmul.f32 %v1725, %v1390
        %v1790 = vmul.f32 %v1726, %v1390
        %v1791 = vmul.f32 %v1727, %v1390
        %v1792 = vmul.f32 %v1728, %v1390
        %v1793 = vmul.f32 %v1729, %v1390
        %v1794 = vmul.f32 %v1730, %v1390
        %v1795 = vmul.f32 %v1731, %v1390
        %v1796 = vmul.f32 %v1732, %v1390
        %v1797 = vmul.f32 %v1733, %v1390
        %v1798 = vmul.f32 %v1734, %v1390
        %v1799 = vmul.f32 %v1735, %v1390
        %v1800 = vmul.f32 %v1736, %v1390
        %v1801 = vmul.f32 %v1737, %v1390
        %v1802 = vmul.f32 %v1738, %v1390
        %v1803 = vmul.f32 %v1739, %v1390
        %v1804 = vmul.f32 %v1740, %v1390
        %v1805 = vmul.f32 %v1741, %v1390
        %v1806 = vmul.f32 %v1742, %v1390
        %v1807 = vmul.f32 %v1743, %v1390
        %v1808 = vmul.f32 %v1744, %v1390
        %v1809 = vmul.f32 %v1745, %v1390
        %v1810 = vmul.f32 %v1746, %v1390
        %v1811 = vmul.f32 %v1747, %v1390
        %v1812 = vmul.f32 %v1748, %v1390
        %v1813 = vmul.f32 %v1749, %v1390
        %v1814 = vmul.f32 %v1750, %v1390
        %v1815 = vmul.f32 %v1751, %v1390
        %v1816 = vmul.f32 %v1752, %v1390
        %v1817 = vmul.f32 %v1753, %v1390
        %v1818 = vmul.f32 %v1754, %v1390
        %v1819 = vmul.f32 %v1755, %v1390
        %v1820 = vmul.f32 %v1756, %v1390
        %v1821 = vmul.f32 %v1757, %v1390
        %v1822 = vmul.f32 %v1758, %v1390
        %v1823 = vmul.f32 %v1759, %v1390
        %v1824 = vmul.f32 %v1760, %v1390
        %v1825 = vmul.f32 %v1761, %v1390
        %v1826 = vmul.f32 %v1762, %v1390
        %v1827 = vmul.f32 %v1763, %v1390
        %v1828 = vmul.f32 %v1764, %v1390
        %v1829 = vmul.f32 %v1765, %v1390
        %v1830 = vmul.f32 %v1766, %v1390
        %v1831 = vmul.f32 %v1767, %v1390
        %v1832 = vmul.f32 %v1768, %v1390
        %v1833 = vmul.f32 %v1769, %v1390
        %v1834 = vmul.f32 %v1770, %v1390
        %v1835 = vmul.f32 %v1771, %v1390
        %v1836 = vmul.f32 %v1772, %v1390
        %v1837 = vmul.f32 %v1773, %v1390
        %v1838 = vmul.f32 %v1774, %v1390
        %v1839 = vmul.f32 %v1775, %v1390
        %v1840 = vmul.f32 %v1776, %v1390
        %v1841 = vmul.f32 %v1777, %v1390
        %v1842 = vmul.f32 %v1778, %v1390
        %v1843 = vmul.f32 %v1779, %v1390
        %v1844 = vmul.f32 %v1780, %v1390
        %v1845 = vmul.f32 %v1781, %v1390
        %v1846 = vmul.f32 %v1782, %v1390
        %v1847 = vmul.f32 %v1783, %v1390
        %v1848 = vmul.f32 %v1784, %v1390
        %v1849 = vmul.f32 %v1785, %v1390
        %v1850 = vmul.f32 %v1786, %v1390
        %v1851 = vadd.f32 %v1787, %v1460
        %v1852 = vadd.f32 %v1788, %v1460
        %v1853 = vadd.f32 %v1789, %v1460
        %v1854 = vadd.f32 %v1790, %v1460
        %v1855 = vadd.f32 %v1791, %v1460
        %v1856 = vadd.f32 %v1792, %v1460
        %v1857 = vadd.f32 %v1793, %v1460
        %v1858 = vadd.f32 %v1794, %v1460
        %v1859 = vadd.f32 %v1795, %v1460
        %v1860 = vadd.f32 %v1796, %v1460
        %v1861 = vadd.f32 %v1797, %v1460
        %v1862 = vadd.f32 %v1798, %v1460
        %v1863 = vadd.f32 %v1799, %v1460
        %v1864 = vadd.f32 %v1800, %v1460
        %v1865 = vadd.f32 %v1801, %v1460
        %v1866 = vadd.f32 %v1802, %v1460
        %v1867 = vadd.f32 %v1803, %v1460
        %v1868 = vadd.f32 %v1804, %v1460
        %v1869 = vadd.f32 %v1805, %v1460
        %v1870 = vadd.f32 %v1806, %v1460
        %v1871 = vadd.f32 %v1807, %v1460
        %v1872 = vadd.f32 %v1808, %v1460
        %v1873 = vadd.f32 %v1809, %v1460
        %v1874 = vadd.f32 %v1810, %v1460
        %v1875 = vadd.f32 %v1811, %v1460
        %v1876 = vadd.f32 %v1812, %v1460
        %v1877 = vadd.f32 %v1813, %v1460
        %v1878 = vadd.f32 %v1814, %v1460
        %v1879 = vadd.f32 %v1815, %v1460
        %v1880 = vadd.f32 %v1816, %v1460
        %v1881 = vadd.f32 %v1817, %v1460
        %v1882 = vadd.f32 %v1818, %v1460
        %v1883 = vadd.f32 %v1819, %v1460
        %v1884 = vadd.f32 %v1820, %v1460
        %v1885 = vadd.f32 %v1821, %v1460
        %v1886 = vadd.f32 %v1822, %v1460
        %v1887 = vadd.f32 %v1823, %v1460
        %v1888 = vadd.f32 %v1824, %v1460
        %v1889 = vadd.f32 %v1825, %v1460
        %v1890 = vadd.f32 %v1826, %v1460
        %v1891 = vadd.f32 %v1827, %v1460
        %v1892 = vadd.f32 %v1828, %v1460
        %v1893 = vadd.f32 %v1829, %v1460
        %v1894 = vadd.f32 %v1830, %v1460
        %v1895 = vadd.f32 %v1831, %v1460
        %v1896 = vadd.f32 %v1832, %v1460
        %v1897 = vadd.f32 %v1833, %v1460
        %v1898 = vadd.f32 %v1834, %v1460
        %v1899 = vadd.f32 %v1835, %v1460
        %v1900 = vadd.f32 %v1836, %v1460
        %v1901 = vadd.f32 %v1837, %v1460
        %v1902 = vadd.f32 %v1838, %v1460
        %v1903 = vadd.f32 %v1839, %v1460
        %v1904 = vadd.f32 %v1840, %v1460
        %v1905 = vadd.f32 %v1841, %v1460
        %v1906 = vadd.f32 %v1842, %v1460
        %v1907 = vadd.f32 %v1843, %v1460
        %v1908 = vadd.f32 %v1844, %v1460
        %v1909 = vadd.f32 %v1845, %v1460
        %v1910 = vadd.f32 %v1846, %v1460
        %v1911 = vadd.f32 %v1847, %v1460
        %v1912 = vadd.f32 %v1848, %v1460
        %v1913 = vadd.f32 %v1849, %v1460
        %v1914 = vadd.f32 %v1850, %v1460
        %v1915 = vmax.f32 %v1851, 0.0
        %v1916 = vmax.f32 %v1852, 0.0
        %v1917 = vmax.f32 %v1853, 0.0
        %v1918 = vmax.f32 %v1854, 0.0
        %v1919 = vmax.f32 %v1855, 0.0
        %v1920 = vmax.f32 %v1856, 0.0
        %v1921 = vmax.f32 %v1857, 0.0
        %v1922 = vmax.f32 %v1858, 0.0
        %v1923 = vmax.f32 %v1859, 0.0
        %v1924 = vmax.f32 %v1860, 0.0
        %v1925 = vmax.f32 %v1861, 0.0
        %v1926 = vmax.f32 %v1862, 0.0
        %v1927 = vmax.f32 %v1863, 0.0
        %v1928 = vmax.f32 %v1864, 0.0
        %v1929 = vmax.f32 %v1865, 0.0
        %v1930 = vmax.f32 %v1866, 0.0
        %v1931 = vmax.f32 %v1867, 0.0
        %v1932 = vmax.f32 %v1868, 0.0
        %v1933 = vmax.f32 %v1869, 0.0
        %v1934 = vmax.f32 %v1870, 0.0
        %v1935 = vmax.f32 %v1871, 0.0
        %v1936 = vmax.f32 %v1872, 0.0
        %v1937 = vmax.f32 %v1873, 0.0
        %v1938 = vmax.f32 %v1874, 0.0
        %v1939 = vmax.f32 %v1875, 0.0
        %v1940 = vmax.f32 %v1876, 0.0
        %v1941 = vmax.f32 %v1877, 0.0
        %v1942 = vmax.f32 %v1878, 0.0
        %v1943 = vmax.f32 %v1879, 0.0
        %v1944 = vmax.f32 %v1880, 0.0
        %v1945 = vmax.f32 %v1881, 0.0
        %v1946 = vmax.f32 %v1882, 0.0
        %v1947 = vmax.f32 %v1883, 0.0
        %v1948 = vmax.f32 %v1884, 0.0
        %v1949 = vmax.f32 %v1885, 0.0
        %v1950 = vmax.f32 %v1886, 0.0
        %v1951 = vmax.f32 %v1887, 0.0
        %v1952 = vmax.f32 %v1888, 0.0
        %v1953 = vmax.f32 %v1889, 0.0
        %v1954 = vmax.f32 %v1890, 0.0
        %v1955 = vmax.f32 %v1891, 0.0
        %v1956 = vmax.f32 %v1892, 0.0
        %v1957 = vmax.f32 %v1893, 0.0
        %v1958 = vmax.f32 %v1894, 0.0
        %v1959 = vmax.f32 %v1895, 0.0
        %v1960 = vmax.f32 %v1896, 0.0
        %v1961 = vmax.f32 %v1897, 0.0
        %v1962 = vmax.f32 %v1898, 0.0
        %v1963 = vmax.f32 %v1899, 0.0
        %v1964 = vmax.f32 %v1900, 0.0
        %v1965 = vmax.f32 %v1901, 0.0
        %v1966 = vmax.f32 %v1902, 0.0
        %v1967 = vmax.f32 %v1903, 0.0
        %v1968 = vmax.f32 %v1904, 0.0
        %v1969 = vmax.f32 %v1905, 0.0
        %v1970 = vmax.f32 %v1906, 0.0
        %v1971 = vmax.f32 %v1907, 0.0
        %v1972 = vmax.f32 %v1908, 0.0
        %v1973 = vmax.f32 %v1909, 0.0
        %v1974 = vmax.f32 %v1910, 0.0
        %v1975 = vmax.f32 %v1911, 0.0
        %v1976 = vmax.f32 %v1912, 0.0
        %v1977 = vmax.f32 %v1913, 0.0
        %v1978 = vmax.f32 %v1914, 0.0
        %1979 = vxpose.xlu0.b32.start [1/16] %v1915, 128
        %1980 = vxpose.xlu0.b32.cont [2/16] %v1916, 128
        %1981 = vxpose.xlu0.b32.cont [3/16] %v1917, 128
        %1982 = vxpose.xlu0.b32.cont [4/16] %v1918, 128
        %1983 = vxpose.xlu0.b32.cont [5/16] %v1919, 128
        %1984 = vxpose.xlu0.b32.cont [6/16] %v1920, 128
        %1985 = vxpose.xlu0.b32.cont [7/16] %v1921, 128
        %1986 = vxpose.xlu0.b32.cont [8/16] %v1922, 128
        %1987 = vxpose.xlu0.b32.cont [9/16] %v1923, 128
        %1988 = vxpose.xlu0.b32.cont [10/16] %v1924, 128
        %1989 = vxpose.xlu0.b32.cont [11/16] %v1925, 128
        %1990 = vxpose.xlu0.b32.cont [12/16] %v1926, 128
        %1991 = vxpose.xlu0.b32.cont [13/16] %v1927, 128
        %1992 = vxpose.xlu0.b32.cont [14/16] %v1928, 128
        %1993 = vxpose.xlu0.b32.cont [15/16] %v1929, 128
        %1994 = vxpose.xlu0.b32.end [16/16] %v1930, 128
        %v1995 = vpop.trf.xlu0
        %v1996 = vpop.trf.xlu0
        %v1997 = vpop.trf.xlu0
        %v1998 = vpop.trf.xlu0
        %v1999 = vpop.trf.xlu0
        %v2000 = vpop.trf.xlu0
        %v2001 = vpop.trf.xlu0
        %v2002 = vpop.trf.xlu0
        %v2003 = vpop.trf.xlu0
        %v2004 = vpop.trf.xlu0
        %v2005 = vpop.trf.xlu0
        %v2006 = vpop.trf.xlu0
        %v2007 = vpop.trf.xlu0
        %v2008 = vpop.trf.xlu0
        %v2009 = vpop.trf.xlu0
        %v2010 = vpop.trf.xlu0
        %2011 = vxpose.xlu0.b32.start [1/16] %v1931, 128
        %2012 = vxpose.xlu0.b32.cont [2/16] %v1932, 128
        %2013 = vxpose.xlu0.b32.cont [3/16] %v1933, 128
        %2014 = vxpose.xlu0.b32.cont [4/16] %v1934, 128
        %2015 = vxpose.xlu0.b32.cont [5/16] %v1935, 128
        %2016 = vxpose.xlu0.b32.cont [6/16] %v1936, 128
        %2017 = vxpose.xlu0.b32.cont [7/16] %v1937, 128
        %2018 = vxpose.xlu0.b32.cont [8/16] %v1938, 128
        %2019 = vxpose.xlu0.b32.cont [9/16] %v1939, 128
        %2020 = vxpose.xlu0.b32.cont [10/16] %v1940, 128
        %2021 = vxpose.xlu0.b32.cont [11/16] %v1941, 128
        %2022 = vxpose.xlu0.b32.cont [12/16] %v1942, 128
        %2023 = vxpose.xlu0.b32.cont [13/16] %v1943, 128
        %2024 = vxpose.xlu0.b32.cont [14/16] %v1944, 128
        %2025 = vxpose.xlu0.b32.cont [15/16] %v1945, 128
        %2026 = vxpose.xlu0.b32.end [16/16] %v1946, 128
        %v2027 = vpop.trf.xlu0
        %v2028 = vpop.trf.xlu0
        %v2029 = vpop.trf.xlu0
        %v2030 = vpop.trf.xlu0
        %v2031 = vpop.trf.xlu0
        %v2032 = vpop.trf.xlu0
        %v2033 = vpop.trf.xlu0
        %v2034 = vpop.trf.xlu0
        %v2035 = vpop.trf.xlu0
        %v2036 = vpop.trf.xlu0
        %v2037 = vpop.trf.xlu0
        %v2038 = vpop.trf.xlu0
        %v2039 = vpop.trf.xlu0
        %v2040 = vpop.trf.xlu0
        %v2041 = vpop.trf.xlu0
        %v2042 = vpop.trf.xlu0
        %2043 = vxpose.xlu0.b32.start [1/16] %v1947, 128
        %2044 = vxpose.xlu0.b32.cont [2/16] %v1948, 128
        %2045 = vxpose.xlu0.b32.cont [3/16] %v1949, 128
        %2046 = vxpose.xlu0.b32.cont [4/16] %v1950, 128
        %2047 = vxpose.xlu0.b32.cont [5/16] %v1951, 128
        %2048 = vxpose.xlu0.b32.cont [6/16] %v1952, 128
        %2049 = vxpose.xlu0.b32.cont [7/16] %v1953, 128
        %2050 = vxpose.xlu0.b32.cont [8/16] %v1954, 128
        %2051 = vxpose.xlu0.b32.cont [9/16] %v1955, 128
        %2052 = vxpose.xlu0.b32.cont [10/16] %v1956, 128
        %2053 = vxpose.xlu0.b32.cont [11/16] %v1957, 128
        %2054 = vxpose.xlu0.b32.cont [12/16] %v1958, 128
        %2055 = vxpose.xlu0.b32.cont [13/16] %v1959, 128
        %2056 = vxpose.xlu0.b32.cont [14/16] %v1960, 128
        %2057 = vxpose.xlu0.b32.cont [15/16] %v1961, 128
        %2058 = vxpose.xlu0.b32.end [16/16] %v1962, 128
        %v2059 = vpop.trf.xlu0
        %v2060 = vpop.trf.xlu0
        %v2061 = vpop.trf.xlu0
        %v2062 = vpop.trf.xlu0
        %v2063 = vpop.trf.xlu0
        %v2064 = vpop.trf.xlu0
        %v2065 = vpop.trf.xlu0
        %v2066 = vpop.trf.xlu0
        %v2067 = vpop.trf.xlu0
        %v2068 = vpop.trf.xlu0
        %v2069 = vpop.trf.xlu0
        %v2070 = vpop.trf.xlu0
        %v2071 = vpop.trf.xlu0
        %v2072 = vpop.trf.xlu0
        %v2073 = vpop.trf.xlu0
        %v2074 = vpop.trf.xlu0
        %2075 = vxpose.xlu0.b32.start [1/16] %v1963, 128
        %2076 = vxpose.xlu0.b32.cont [2/16] %v1964, 128
        %2077 = vxpose.xlu0.b32.cont [3/16] %v1965, 128
        %2078 = vxpose.xlu0.b32.cont [4/16] %v1966, 128
        %2079 = vxpose.xlu0.b32.cont [5/16] %v1967, 128
        %2080 = vxpose.xlu0.b32.cont [6/16] %v1968, 128
        %2081 = vxpose.xlu0.b32.cont [7/16] %v1969, 128
        %2082 = vxpose.xlu0.b32.cont [8/16] %v1970, 128
        %2083 = vxpose.xlu0.b32.cont [9/16] %v1971, 128
        %2084 = vxpose.xlu0.b32.cont [10/16] %v1972, 128
        %2085 = vxpose.xlu0.b32.cont [11/16] %v1973, 128
        %2086 = vxpose.xlu0.b32.cont [12/16] %v1974, 128
        %2087 = vxpose.xlu0.b32.cont [13/16] %v1975, 128
        %2088 = vxpose.xlu0.b32.cont [14/16] %v1976, 128
        %2089 = vxpose.xlu0.b32.cont [15/16] %v1977, 128
        %2090 = vxpose.xlu0.b32.end [16/16] %v1978, 128
        %v2091 = vpop.trf.xlu0
        %v2092 = vpop.trf.xlu0
        %v2093 = vpop.trf.xlu0
        %v2094 = vpop.trf.xlu0
        %v2095 = vpop.trf.xlu0
        %v2096 = vpop.trf.xlu0
        %v2097 = vpop.trf.xlu0
        %v2098 = vpop.trf.xlu0
        %v2099 = vpop.trf.xlu0
        %v2100 = vpop.trf.xlu0
        %v2101 = vpop.trf.xlu0
        %v2102 = vpop.trf.xlu0
        %v2103 = vpop.trf.xlu0
        %v2104 = vpop.trf.xlu0
        %v2105 = vpop.trf.xlu0
        %v2106 = vpop.trf.xlu0
        %2107 = vst [vmem:[%s5 + $0x20] sm:$0xff] %v1995
        %2108 = vst [vmem:[%s5 + $0x28] sm:$0xff] %v2027
        %2109 = vst [vmem:[%s5 + $0x30] sm:$0xff] %v2059
        %2110 = vst [vmem:[%s5 + $0x38] sm:$0xff] %v2091
      $region48: #{residual_block_forward.3} parent=39 // pred_fallthru
        _
      // Predicated region
      $region49: #{residual_block_forward.3} parent=39 // pred_check
        %p2111 = pneg %p139
      $region50: #{residual_block_forward.3} parent=39 // pred_check_branch
        %2113 = sbr.rel (%p2111) target = $region52
      $region51: #{residual_block_forward.3} parent=39 // pred_region
        _
      $region52: #{residual_block_forward.3} parent=39 // pred_fallthru
        _
      // Predicated region
      $region53: #{residual_block_forward.3} parent=39 // pred_check
        %p2114 = pneg %p139
      $region54: #{residual_block_forward.3} parent=39 // pred_check_branch
        %2116 = sbr.rel (%p2114) target = $region56
      $region55: #{residual_block_forward.3} parent=39 // pred_region
        _
      $region56: #{residual_block_forward.3} parent=39 // pred_fallthru
        _
    $region40: #{residual_block_forward.3} parent=5 // pred_fallthru
      _
    %p2117 = scmp.le.s32.totalorder 2, %s11
    // Predicated region
    $region57: #{residual_block_forward.3} parent=5 // pred_check
      %p2118 = pneg %p2117
    $region58: #{residual_block_forward.3} parent=5 // pred_check_branch
      %2120 = sbr.rel (%p2118) target = $region60
    $region59: #{residual_block_forward.3} parent=5 // pred_region
      %s2121 = ssub.s32 %s11, 2
    $region60: #{residual_block_forward.3} parent=5 // pred_fallthru
      _
  $region6: #{residual_block_forward.3} parent=0 // loop_footer
    %s15 = sadd.s32 1, %s11
  $region7: #{residual_block_forward.3} parent=0 // loop_footer_branch
    %10 = sbr.rel target = $region3
  $region8: #{residual_block_forward.3} parent=0 // loop_exit
    _

</llo_original>
